<compile_context>
chip_gen: v7x
topology: tpu7x:2x2x1
jax: 0.10.0
libtpu: 0.0.40
codegen_flags: <defaults>
</compile_context>

<pallas_src>
import functools
import math

import jax
import jax.numpy as jnp
from jax import lax
from jax.experimental import pallas as pl
from jax.experimental.pallas import tpu as pltpu

F32 = jnp.float32
BF16 = jnp.bfloat16
EOS = 1e-10          # epsilon of the reference `normalize` helper
MATMUL_IN_BF16 = True  # bf16 MXU operands for the N x N contractions, f32 accumulate


# ----------------------------------------------------------------------------
# pallas_call helper: single invocation, whole operands resident in VMEM,
# explicit scoped-VMEM limit sized from the in/out footprint.
# ----------------------------------------------------------------------------
def _pcall(kernel, out_shapes, *args):
    vmem = pl.BlockSpec(memory_space=pltpu.MemorySpace.VMEM)
    out_shapes = tuple(out_shapes)
    nbytes = sum(int(a.size) * a.dtype.itemsize for a in args)
    nbytes += sum(math.prod(o.shape) * jnp.dtype(o.dtype).itemsize for o in out_shapes)
    # floor above the v5e 16 MiB default, cap at v7x's 64 MiB physical VMEM
    limit = int(min(64 * 1024 * 1024, max(32 * 1024 * 1024, 8 * nbytes)))
    return pl.pallas_call(
        kernel,
        out_shape=out_shapes,
        in_specs=[vmem] * len(args),
        out_specs=tuple(vmem for _ in out_shapes),
        compiler_params=pltpu.CompilerParams(vmem_limit_bytes=limit),
    )(*args)


# ----------------------------------------------------------------------------
# In-kernel helpers (operate on loaded arrays; traced inside kernel bodies).
# ----------------------------------------------------------------------------
def _mx(a):
    """bf16 cast for MXU operands of the big N x N contractions."""
    return a.astype(BF16) if (MATMUL_IN_BF16 and a.dtype == F32) else a


def _dot(a, b):
    """Small dense linears: stay f32 (no bandwidth win, avoids drift)."""
    return jnp.dot(a, b, preferred_element_type=F32)


def _propagate(g_mx, h):
    """G @ (G^T @ h): transposed-LHS contraction on the MXU, no transpose
    materialized, bf16 operands / f32 accumulation."""
    t = lax.dot_general(g_mx, _mx(h), (((0,), (0,)), ((), ())),
                        preferred_element_type=F32)
    return jnp.dot(g_mx, _mx(t), preferred_element_type=F32)


def _row_normalize(g):
    # reference: D^-1 G with inv = 1/(rowsum + EOS); reciprocal on the EUP
    d = jnp.sum(g, axis=1, keepdims=True)
    return g * pl.reciprocal(d + EOS, approx=True)


def _sym_normalize(g):
    # reference: inv = 1/(sqrt(rowsum)+EOS); inv[:,None] * g * inv[None,:].
    # Column sums are used for the lane-oriented factor (no transpose); every
    # graph normalized with 'sym' here is symmetric, so they equal the row sums.
    dr = jnp.sum(g, axis=1, keepdims=True)
    dc = jnp.sum(g, axis=0, keepdims=True)
    inv_r = pl.reciprocal(jnp.sqrt(dr) + EOS, approx=True)
    inv_c = pl.reciprocal(jnp.sqrt(dc) + EOS, approx=True)
    return inv_r * g * inv_c


def _hgnn_layer(x, g_mx, w1, b1, w2, b2, post_act):
    """HGNNConv_dense: linear1 -> G (G^T h) -> relu -> linear2 [-> post act]."""
    h = _dot(x, w1) + b1
    h = _propagate(g_mx, h)
    h = jnp.maximum(h, 0.0)
    h = _dot(h, w2) + b2
    if post_act == "relu":
        h = jnp.maximum(h, 0.0)
    elif post_act == "tanh":
        h = jnp.tanh(h)
    return h


def _vpos(e, v, w1a, w1b, b1, w2, b2):
    """sigmoid(cat(e, v) @ W1 + b1) @ W2 + b2 with W1 split (no concat);
    tanh-form sigmoid is numerically stable and lands on the EUP."""
    h = _dot(e, w1a) + _dot(v, w1b) + b1
    h = 0.5 * (jnp.tanh(0.5 * h) + 1.0)
    return _dot(h, w2) + b2


def _learned_adj(e, cur_e, *, add_embedding, topk, eps):
    """(+cur) -> row L2-normalize -> E E^T -> row top-k -> eps mask ->
    symmetrize -> sym-normalize.  Single row-wise top-k pass; the column
    thresholds reuse the row thresholds (sim is symmetric)."""
    if add_embedding:
        e = e + cur_e
    # F.normalize(dim=1, p=2): x / max(||x||, 1e-12)
    ss = jnp.sum(e * e, axis=1, keepdims=True)
    e = e * lax.rsqrt(jnp.maximum(ss, 1e-24))
    sim = lax.dot_general(_mx(e), _mx(e), (((1,), (1,)), ((), ())),
                          preferred_element_type=F32)        # E E^T (trans_b, MXU)
    n = sim.shape[0]
    if topk:
        # Row-wise k-th-largest via iterative max extraction; live state bounded
        # to (xr, kth).  TODO(synk): ties at the k-th value keep all tied entries
        # (torch.topk keeps exactly k); if topk >= N the threshold degenerates
        # to -inf and keeps everything (never hit at this config).
        def body(_, carry):
            xr, _ = carry
            kth = jnp.max(xr, axis=1, keepdims=True)
            xr = jnp.where(xr >= kth, -jnp.inf, xr)
            return xr, kth
        _, kth_r = lax.fori_loop(0, topk, body,
                                 (sim, jnp.zeros((n, 1), F32)), unroll=True)
        # Lane-oriented copy of kth_r (== column thresholds, by symmetry of sim)
        # without a transpose and without a second top-k pass: diagonal select +
        # sublane reduce.
        rows = lax.broadcasted_iota(jnp.int32, (n, n), 0)
        cols = lax.broadcasted_iota(jnp.int32, (n, n), 1)
        kth_c = jnp.sum(jnp.where(rows == cols, kth_r, 0.0),
                        axis=0, keepdims=True)                # (1, N)
        # eps mask folded into the keep mask; s = 0.5*(lr + lr^T) formed directly.
        keep = (sim > eps).astype(F32) * ((sim >= kth_r).astype(F32)
                                          + (sim >= kth_c).astype(F32))
        s = (0.5 * sim) * keep
    else:
        s = sim * (sim > eps).astype(F32)                     # already symmetric
    return _sym_normalize(s)


def _fuse_pred(la, adj, ratio, thresh):
    p = ratio * la + (1.0 - ratio) * adj
    return jnp.where(p < thresh, 0.0, p)


# ----------------------------------------------------------------------------
# Kernel A: internal GNN stack + score conv, adjacency read & cast once.
# Outputs: embeddings (N, osize) and the score as a lane-dense (N, 128) block.
# ----------------------------------------------------------------------------
def _internal_score_kernel(*refs, n_layers, act):
    x_ref, g_ref = refs[0], refs[1]
    lw = refs[2:2 + 4 * n_layers]
    sw = refs[2 + 4 * n_layers:2 + 4 * n_layers + 4]
    emb_out, score_out = refs[-2], refs[-1]

    g_mx = _mx(g_ref[...])           # cast the N x N graph once for all layers
    h = x_ref[...]
    for li in range(n_layers):
        w1, b1, w2, b2 = (r[...] for r in lw[4 * li:4 * li + 4])
        h = _hgnn_layer(h, g_mx, w1, b1, w2, b2,
                        act if li != n_layers - 1 else None)
    emb_out[...] = h
    y = _hgnn_layer(h, g_mx, *(r[...] for r in sw), "relu")   # (N, 1)
    score_out[...] = jnp.broadcast_to(y, score_out.shape)     # unmasked vst


def internal_and_score(x, adj, internal_params, score_params, act):
    n = x.shape[0]
    osz = internal_params[-1]["w2"].shape[1]
    args = [x, adj]
    for p in internal_params:
        args += [p["w1"], p["b1"].reshape(1, -1), p["w2"], p["b2"].reshape(1, -1)]
    args += [score_params["w1"], score_params["b1"].reshape(1, -1),
             score_params["w2"], score_params["b2"].reshape(1, -1)]
    kern = functools.partial(_internal_score_kernel,
                             n_layers=len(internal_params), act=act)
    outs = _pcall(kern,
                  (jax.ShapeDtypeStruct((n, osz), F32),
                   jax.ShapeDtypeStruct((n, 128), F32)),
                  *args)
    return outs[0], outs[1][:, 0]


# ----------------------------------------------------------------------------
# Kernel B: standalone score conv (down iterations i > 0, row-normalized adj_).
# ----------------------------------------------------------------------------
def _score_kernel(x_ref, g_ref, w1_ref, b1_ref, w2_ref, b2_ref, o_ref):
    g_mx = _mx(_row_normalize(g_ref[...]))
    y = _hgnn_layer(x_ref[...], g_mx, w1_ref[...], b1_ref[...],
                    w2_ref[...], b2_ref[...], "relu")
    o_ref[...] = jnp.broadcast_to(y, o_ref.shape)


def score_conv(x, g, p):
    n = x.shape[0]
    outs = _pcall(_score_kernel, (jax.ShapeDtypeStruct((n, 128), F32),),
                  x, g, p["w1"], p["b1"].reshape(1, -1),
                  p["w2"], p["b2"].reshape(1, -1))
    return outs[0][:, 0]


# ----------------------------------------------------------------------------
# Kernel C: pre-loop head — [vpos map] -> learned adjacency [-> prediction].
# ----------------------------------------------------------------------------
def _adj_head_kernel(*refs, add_vpos, add_embedding, topk, eps,
                     emit_pred, ratio, thresh):
    i = 0
    e = refs[i][...]; i += 1
    if add_vpos:
        v = refs[i][...]
        w1a, w1b, b1, w2, b2 = (refs[i + 1 + k][...] for k in range(5))
        i += 6
        e = _vpos(e, v, w1a, w1b, b1, w2, b2)
    cur = refs[i][...]; i += 1
    la = _learned_adj(e, cur, add_embedding=add_embedding, topk=topk, eps=eps)
    if emit_pred:
        adj = refs[i][...]; i += 1
        refs[i][...] = la
        refs[i + 1][...] = _fuse_pred(la, adj, ratio, thresh)
    else:
        refs[i][...] = la


def adj_head(emb, vmap_args, cur, *, add_embedding, topk, eps,
             pred_adj=None, fusion_ratio=0.0, threshold=0.002):
    n = emb.shape[0]
    args = [emb] + list(vmap_args) + [cur]
    emit_pred = pred_adj is not None
    if emit_pred:
        args.append(pred_adj)
    kern = functools.partial(_adj_head_kernel, add_vpos=bool(vmap_args),
                             add_embedding=bool(add_embedding), topk=int(topk),
                             eps=float(eps), emit_pred=emit_pred,
                             ratio=float(fusion_ratio), thresh=float(threshold))
    shapes = [jax.ShapeDtypeStruct((n, n), F32)]
    if emit_pred:
        shapes.append(jax.ShapeDtypeStruct((n, n), F32))
    outs = _pcall(kern, tuple(shapes), *args)
    return (outs[0], outs[1]) if emit_pred else outs[0]


# ----------------------------------------------------------------------------
# Kernel D: one up-iteration — [vpos map] -> sym-normalize(adj) ONCE ->
# up-GNN stack -> learned adjacency [-> prediction fuse + threshold].
# ----------------------------------------------------------------------------
def _up_iter_kernel(*refs, add_vpos, add_embedding, topk, eps, n_up,
                    emit_pred, ratio, thresh):
    i = 0
    e = refs[i][...]; i += 1
    if add_vpos:
        v = refs[i][...]
        w1a, w1b, b1, w2, b2 = (refs[i + 1 + k][...] for k in range(5))
        i += 6
        e = _vpos(e, v, w1a, w1b, b1, w2, b2)
    adj = refs[i][...]; i += 1
    cur = refs[i][...]; i += 1
    up_refs = refs[i:i + 4 * n_up]; i += 4 * n_up
    # normalize + cast the updated N x N graph ONCE, shared by all up layers
    g_mx = _mx(_sym_normalize(adj))
    h = e
    for li in range(n_up):
        w1, b1, w2, b2 = (r[...] for r in up_refs[4 * li:4 * li + 4])
        h = _hgnn_layer(h, g_mx, w1, b1, w2, b2,
                        "relu" if li != n_up - 1 else None)
    la = _learned_adj(h, cur, add_embedding=add_embedding, topk=topk, eps=eps)
    refs[i][...] = la
    if emit_pred:
        refs[i + 1][...] = _fuse_pred(la, adj, ratio, thresh)


def up_iteration(down_emb, vmap_args, adj, cur, up_params, *, add_embedding,
                 topk, eps, emit_pred, fusion_ratio, threshold=0.002):
    n = adj.shape[0]
    args = [down_emb] + list(vmap_args) + [adj, cur]
    for p in up_params:
        args += [p["w1"], p["b1"].reshape(1, -1), p["w2"], p["b2"].reshape(1, -1)]
    kern = functools.partial(_up_iter_kernel, add_vpos=bool(vmap_args),
                             add_embedding=bool(add_embedding), topk=int(topk),
                             eps=float(eps), n_up=len(up_params),
                             emit_pred=bool(emit_pred), ratio=float(fusion_ratio),
                             thresh=float(threshold))
    shapes = [jax.ShapeDtypeStruct((n, n), F32)]
    if emit_pred:
        shapes.append(jax.ShapeDtypeStruct((n, n), F32))
    outs = _pcall(kern, tuple(shapes), *args)
    return (outs[0], outs[1]) if emit_pred else outs[0]


# ----------------------------------------------------------------------------
# JAX glue (pure index shuffling)
# ----------------------------------------------------------------------------
def only_modify_subgraph(cur_g, pre_g, idx, fusion_ratio):
    cur_small = cur_g[idx][:, idx]
    pre_small = pre_g[idx][:, idx]
    new_small = cur_small * fusion_ratio + pre_small * (1.0 - fusion_ratio)
    # torch index_put([idx.repeat, idx.repeat_interleave], new_small.flatten())
    # writes new_small TRANSPOSED into the (idx x idx) block -- reproduced exactly.
    return pre_g.at[idx[:, None], idx[None, :]].set(jnp.transpose(new_small))


# ----------------------------------------------------------------------------
# Stage_GNN_learner forward (eval mode: all dropouts are identity)
# ----------------------------------------------------------------------------
def stage_gnn_learner_forward(features, adj, params, cfg):
    ks = cfg["ks"]
    l_n = len(ks)
    act = cfg["act"]
    topk = (cfg["k"] + 1) if cfg["k"] else 0
    n_node = features.shape[0]

    # fused internal GNN stack + (i==0) score conv: adj is read/cast once
    embeddings, y0 = internal_and_score(features, adj, params["internal"],
                                        params["score"], act)
    cur_embeddings = embeddings
    adj_ = adj
    embeddings_ = embeddings
    new_features = features
    node_v_pos_embeddings = None
    indices_list = []
    down_outs = []
    pre_idx = jnp.arange(n_node, dtype=jnp.int32)

    if l_n > 0:
        for i in range(l_n):
            down_outs.append(embeddings_)
            if i == 0:
                y = y0
            else:
                # TODO(synk): torch drops all-zero columns of adj_ (data-dependent
                # shape); numerically inert for the row-normalized conv, full
                # column width kept here.
                y = score_conv(embeddings_[pre_idx, :], adj_, params["score"])
            kk = max(2, int(ks[i] * adj_.shape[0]))
            score, idx = jax.lax.top_k(y, kk)
            order = jnp.argsort(idx)
            new_score = score[order]
            new_idx = idx[order]
            pre_idx = pre_idx[new_idx]
            indices_list.append(pre_idx)
            adj_ = adj[pre_idx, :]
            new_features = features[pre_idx, :]
            mask_score = jnp.zeros((n_node,), F32).at[pre_idx].set(new_score.astype(F32))
            # mask + detach(1 - mask) == 1 in the forward pass; kept for fidelity.
            mult = mask_score[:, None] + jax.lax.stop_gradient(1.0 - mask_score)[:, None]
            embeddings_ = embeddings_ * mult

        if cfg["add_vertical_position"]:
            vertical_position = jnp.zeros((n_node,), jnp.int32)
            for i in range(l_n):
                vertical_position = vertical_position.at[indices_list[i]].set(i + 1)
            node_v_pos_embeddings = params["v_pos_emb"][vertical_position]

    add_vpos = (l_n > 0) and cfg["add_vertical_position"]
    vmap_args = []
    if add_vpos:
        osz = embeddings_.shape[1]
        w1 = params["vmap1_w"]
        vmap_args = [node_v_pos_embeddings, w1[:osz, :], w1[osz:, :],
                     params["vmap1_b"].reshape(1, -1),
                     params["vmap2_w"], params["vmap2_b"].reshape(1, -1)]

    # fused: [vpos map] -> (+cur) -> L2 norm -> sim -> top-k -> eps ->
    # symmetrize -> sym-norm  (+ prediction fuse when there is no up loop)
    res = adj_head(embeddings_, vmap_args, cur_embeddings,
                   add_embedding=cfg["add_embedding"], topk=topk,
                   eps=cfg["epsilon"],
                   pred_adj=(adj if l_n == 0 else None),
                   fusion_ratio=cfg["fusion_ratio"])
    if l_n == 0:
        learned_adj, prediction_adj = res
    else:
        learned_adj = res
        prediction_adj = None
        for t, j in enumerate(reversed(range(l_n))):
            is_last = (t == l_n - 1)
            # learned_adj is already symmetrized + sym-normalized by the fused kernel
            adj = only_modify_subgraph(learned_adj, adj, indices_list[j],
                                       cfg["stage_fusion_ratio"])
            outs = up_iteration(down_outs[j], vmap_args, adj, cur_embeddings,
                                params["up_gnn"],
                                add_embedding=cfg["add_embedding"], topk=topk,
                                eps=cfg["epsilon"], emit_pred=is_last,
                                fusion_ratio=cfg["fusion_ratio"])
            if is_last:
                learned_adj, prediction_adj = outs
            else:
                learned_adj = outs

    return learned_adj, prediction_adj, adj_, new_features


# ----------------------------------------------------------------------------
# Deterministic parameter construction
# ----------------------------------------------------------------------------
def _init_linear(key, fan_in, fan_out):
    kw, kb = jax.random.split(key)
    w = jax.random.normal(kw, (fan_in, fan_out), F32) * (1.0 / jnp.sqrt(float(fan_in)))
    b = jax.random.normal(kb, (fan_out,), F32) * 0.01
    return w, b


def _init_hgnn(key, isz, hsz, osz):
    k1, k2 = jax.random.split(key)
    w1, b1 = _init_linear(k1, isz, hsz)
    w2, b2 = _init_linear(k2, hsz, osz)
    return dict(w1=w1, b1=b1, w2=w2, b2=b2)


def init_params(key, cfg):
    keys = jax.random.split(key, 16)
    nl, isz, osz = cfg["nlayers"], cfg["isize"], cfg["osize"]
    internal = [_init_hgnn(keys[0], isz, 32, osz)]
    for t in range(nl - 2):
        internal.append(_init_hgnn(keys[1 + t], osz, 32, osz))
    if nl > 1:
        internal.append(_init_hgnn(keys[5], osz, 32, osz))
    p = {"internal": internal,
         "score": _init_hgnn(keys[6], osz, 32, 1)}
    up = [_init_hgnn(keys[7], osz, 256, osz)]
    if cfg["up_gnn_nlayers"] == 2:
        up.append(_init_hgnn(keys[8], osz, 256, osz))
    p["up_gnn"] = up
    p["v_pos_emb"] = jax.random.normal(keys[9], (len(cfg["ks"]) + 1, cfg["v_pos_dim"]), F32) * 0.1
    p["vmap1_w"], p["vmap1_b"] = _init_linear(keys[10], osz + cfg["v_pos_dim"], osz)
    p["vmap2_w"], p["vmap2_b"] = _init_linear(keys[11], osz, osz)
    return p


CONFIG = dict(
    nlayers=2, isize=8, osize=16, k=4, knn_metric="cosine", sparse=False,
    act="relu", internal_type="gnn", ks=[0.5], share_up_gnn=True,
    fusion_ratio=0.7, stage_fusion_ratio=0.5, epsilon=0.05,
    add_vertical_position=True, v_pos_dim=4, dropout_v_pos=0.0,
    up_gnn_nlayers=2, dropout_up_gnn=0.0, add_embedding=True,
)


if __name__ == "__main__":
    key = jax.random.PRNGKey(0)
    kf, ka, kp = jax.random.split(key, 3)

    n_node = 16
    features = jax.random.normal(kf, (n_node, CONFIG["isize"]), F32)
    a = jax.random.uniform(ka, (n_node, n_node), F32)
    adj = ((a + a.T) * 0.5 > 0.6).astype(F32)
    adj = jnp.maximum(adj, jnp.eye(n_node, dtype=F32))

    params = init_params(kp, CONFIG)

    fwd = jax.jit(lambda f, g, p: stage_gnn_learner_forward(f, g, p, CONFIG))
    learned_adj, prediction_adj, adj_, new_features = fwd(features, adj, params)
    jax.block_until_ready((learned_adj, prediction_adj, adj_, new_features))

    assert learned_adj.shape == (n_node, n_node)
    assert prediction_adj.shape == (n_node, n_node)
    assert adj_.shape == (8, n_node)
    assert new_features.shape == (8, CONFIG["isize"])
    assert bool(jnp.all(jnp.isfinite(learned_adj))) and bool(jnp.all(jnp.isfinite(prediction_adj)))
    print("KERNEL_OK")
</pallas_src>

<mosaic_0001>
module attributes {stable_mosaic.version = 11 : i64} {
  func.func @_internal_score_kernel(%arg0: memref<16x8xf32, #tpu.memory_space<vmem>>, %arg1: memref<16x16xf32, #tpu.memory_space<vmem>>, %arg2: memref<8x32xf32, #tpu.memory_space<vmem>>, %arg3: memref<1x32xf32, #tpu.memory_space<vmem>>, %arg4: memref<32x16xf32, #tpu.memory_space<vmem>>, %arg5: memref<1x16xf32, #tpu.memory_space<vmem>>, %arg6: memref<16x32xf32, #tpu.memory_space<vmem>>, %arg7: memref<1x32xf32, #tpu.memory_space<vmem>>, %arg8: memref<32x16xf32, #tpu.memory_space<vmem>>, %arg9: memref<1x16xf32, #tpu.memory_space<vmem>>, %arg10: memref<16x32xf32, #tpu.memory_space<vmem>>, %arg11: memref<1x32xf32, #tpu.memory_space<vmem>>, %arg12: memref<32x1xf32, #tpu.memory_space<vmem>>, %arg13: memref<1x1xf32, #tpu.memory_space<vmem>>, %arg14: memref<16x16xf32, #tpu.memory_space<vmem>>, %arg15: memref<16x128xf32, #tpu.memory_space<vmem>>) attributes {dimension_semantics = [], scalar_prefetch = 0 : i64, scratch_operands = 0 : i64, tpu.core_type = #tpu.core_type<tc>} {
    %c0 = arith.constant 0 : index
    %c0_0 = arith.constant 0 : index
    %0 = vector.load %arg1[%c0, %c0_0] : memref<16x16xf32, #tpu.memory_space<vmem>>, vector<16x16xf32>
    %1 = arith.truncf %0 : vector<16x16xf32> to vector<16x16xbf16>
    %c0_1 = arith.constant 0 : index
    %c0_2 = arith.constant 0 : index
    %2 = vector.load %arg0[%c0_1, %c0_2] : memref<16x8xf32, #tpu.memory_space<vmem>>, vector<16x8xf32>
    %c0_3 = arith.constant 0 : index
    %c0_4 = arith.constant 0 : index
    %3 = vector.load %arg2[%c0_3, %c0_4] : memref<8x32xf32, #tpu.memory_space<vmem>>, vector<8x32xf32>
    %c0_5 = arith.constant 0 : index
    %c0_6 = arith.constant 0 : index
    %4 = vector.load %arg3[%c0_5, %c0_6] : memref<1x32xf32, #tpu.memory_space<vmem>>, vector<1x32xf32>
    %c0_7 = arith.constant 0 : index
    %c0_8 = arith.constant 0 : index
    %5 = vector.load %arg4[%c0_7, %c0_8] : memref<32x16xf32, #tpu.memory_space<vmem>>, vector<32x16xf32>
    %c0_9 = arith.constant 0 : index
    %c0_10 = arith.constant 0 : index
    %6 = vector.load %arg5[%c0_9, %c0_10] : memref<1x16xf32, #tpu.memory_space<vmem>>, vector<1x16xf32>
    %cst = arith.constant dense<0.000000e+00> : vector<16x32xf32>
    %7 = tpu.matmul %2, %3, %cst {dimension_numbers = #tpu.dot_dimension_numbers<[1], [0], [0], [1], [0, 0, 1, 1], [], []>} : vector<16x8xf32>, vector<8x32xf32>, vector<16x32xf32> -> vector<16x32xf32>
    %8 = vector.broadcast %4 : vector<1x32xf32> to vector<16x32xf32>
    %9 = arith.addf %7, %8 : vector<16x32xf32>
    %10 = arith.truncf %9 : vector<16x32xf32> to vector<16x32xbf16>
    %cst_11 = arith.constant dense<0.000000e+00> : vector<16x32xf32>
    %11 = tpu.matmul %1, %10, %cst_11 {dimension_numbers = #tpu.dot_dimension_numbers<[0], [0], [1], [1], [0, 1, 1, 1], [], []>} : vector<16x16xbf16>, vector<16x32xbf16>, vector<16x32xf32> -> vector<16x32xf32>
    %12 = arith.truncf %11 : vector<16x32xf32> to vector<16x32xbf16>
    %cst_12 = arith.constant dense<0.000000e+00> : vector<16x32xf32>
    %13 = tpu.matmul %1, %12, %cst_12 {dimension_numbers = #tpu.dot_dimension_numbers<[1], [0], [0], [1], [0, 0, 1, 1], [], []>} : vector<16x16xbf16>, vector<16x32xbf16>, vector<16x32xf32> -> vector<16x32xf32>
    %cst_13 = arith.constant 0.000000e+00 : f32
    %14 = vector.broadcast %cst_13 : f32 to vector<16x32xf32>
    %15 = arith.maximumf %13, %14 : vector<16x32xf32>
    %cst_14 = arith.constant dense<0.000000e+00> : vector<16x16xf32>
    %16 = tpu.matmul %15, %5, %cst_14 {dimension_numbers = #tpu.dot_dimension_numbers<[1], [0], [0], [1], [0, 0, 1, 1], [], []>} : vector<16x32xf32>, vector<32x16xf32>, vector<16x16xf32> -> vector<16x16xf32>
    %17 = vector.broadcast %6 : vector<1x16xf32> to vector<16x16xf32>
    %18 = arith.addf %16, %17 : vector<16x16xf32>
    %cst_15 = arith.constant 0.000000e+00 : f32
    %19 = vector.broadcast %cst_15 : f32 to vector<16x16xf32>
    %20 = arith.maximumf %18, %19 : vector<16x16xf32>
    %c0_16 = arith.constant 0 : index
    %c0_17 = arith.constant 0 : index
    %21 = vector.load %arg6[%c0_16, %c0_17] : memref<16x32xf32, #tpu.memory_space<vmem>>, vector<16x32xf32>
    %c0_18 = arith.constant 0 : index
    %c0_19 = arith.constant 0 : index
    %22 = vector.load %arg7[%c0_18, %c0_19] : memref<1x32xf32, #tpu.memory_space<vmem>>, vector<1x32xf32>
    %c0_20 = arith.constant 0 : index
    %c0_21 = arith.constant 0 : index
    %23 = vector.load %arg8[%c0_20, %c0_21] : memref<32x16xf32, #tpu.memory_space<vmem>>, vector<32x16xf32>
    %c0_22 = arith.constant 0 : index
    %c0_23 = arith.constant 0 : index
    %24 = vector.load %arg9[%c0_22, %c0_23] : memref<1x16xf32, #tpu.memory_space<vmem>>, vector<1x16xf32>
    %cst_24 = arith.constant dense<0.000000e+00> : vector<16x32xf32>
    %25 = tpu.matmul %20, %21, %cst_24 {dimension_numbers = #tpu.dot_dimension_numbers<[1], [0], [0], [1], [0, 0, 1, 1], [], []>} : vector<16x16xf32>, vector<16x32xf32>, vector<16x32xf32> -> vector<16x32xf32>
    %26 = vector.broadcast %22 : vector<1x32xf32> to vector<16x32xf32>
    %27 = arith.addf %25, %26 : vector<16x32xf32>
    %28 = arith.truncf %27 : vector<16x32xf32> to vector<16x32xbf16>
    %cst_25 = arith.constant dense<0.000000e+00> : vector<16x32xf32>
    %29 = tpu.matmul %1, %28, %cst_25 {dimension_numbers = #tpu.dot_dimension_numbers<[0], [0], [1], [1], [0, 1, 1, 1], [], []>} : vector<16x16xbf16>, vector<16x32xbf16>, vector<16x32xf32> -> vector<16x32xf32>
    %30 = arith.truncf %29 : vector<16x32xf32> to vector<16x32xbf16>
    %cst_26 = arith.constant dense<0.000000e+00> : vector<16x32xf32>
    %31 = tpu.matmul %1, %30, %cst_26 {dimension_numbers = #tpu.dot_dimension_numbers<[1], [0], [0], [1], [0, 0, 1, 1], [], []>} : vector<16x16xbf16>, vector<16x32xbf16>, vector<16x32xf32> -> vector<16x32xf32>
    %cst_27 = arith.constant 0.000000e+00 : f32
    %32 = vector.broadcast %cst_27 : f32 to vector<16x32xf32>
    %33 = arith.maximumf %31, %32 : vector<16x32xf32>
    %cst_28 = arith.constant dense<0.000000e+00> : vector<16x16xf32>
    %34 = tpu.matmul %33, %23, %cst_28 {dimension_numbers = #tpu.dot_dimension_numbers<[1], [0], [0], [1], [0, 0, 1, 1], [], []>} : vector<16x32xf32>, vector<32x16xf32>, vector<16x16xf32> -> vector<16x16xf32>
    %35 = vector.broadcast %24 : vector<1x16xf32> to vector<16x16xf32>
    %36 = arith.addf %34, %35 : vector<16x16xf32>
    %c0_29 = arith.constant 0 : index
    %c0_30 = arith.constant 0 : index
    %37 = vector.load %arg14[%c0_29, %c0_30] : memref<16x16xf32, #tpu.memory_space<vmem>>, vector<16x16xf32>
    tpu.vector_store %arg14[%c0_29, %c0_30], %36 {strides = array<i32>} : memref<16x16xf32, #tpu.memory_space<vmem>>, vector<16x16xf32>,
    %c0_31 = arith.constant 0 : index
    %c0_32 = arith.constant 0 : index
    %38 = vector.load %arg10[%c0_31, %c0_32] : memref<16x32xf32, #tpu.memory_space<vmem>>, vector<16x32xf32>
    %c0_33 = arith.constant 0 : index
    %c0_34 = arith.constant 0 : index
    %39 = vector.load %arg11[%c0_33, %c0_34] : memref<1x32xf32, #tpu.memory_space<vmem>>, vector<1x32xf32>
    %c0_35 = arith.constant 0 : index
    %c0_36 = arith.constant 0 : index
    %40 = vector.load %arg12[%c0_35, %c0_36] : memref<32x1xf32, #tpu.memory_space<vmem>>, vector<32x1xf32>
    %c0_37 = arith.constant 0 : index
    %c0_38 = arith.constant 0 : index
    %41 = vector.load %arg13[%c0_37, %c0_38] : memref<1x1xf32, #tpu.memory_space<vmem>>, vector<1x1xf32>
    %cst_39 = arith.constant dense<0.000000e+00> : vector<16x32xf32>
    %42 = tpu.matmul %36, %38, %cst_39 {dimension_numbers = #tpu.dot_dimension_numbers<[1], [0], [0], [1], [0, 0, 1, 1], [], []>} : vector<16x16xf32>, vector<16x32xf32>, vector<16x32xf32> -> vector<16x32xf32>
    %43 = vector.broadcast %39 : vector<1x32xf32> to vector<16x32xf32>
    %44 = arith.addf %42, %43 : vector<16x32xf32>
    %45 = arith.truncf %44 : vector<16x32xf32> to vector<16x32xbf16>
    %cst_40 = arith.constant dense<0.000000e+00> : vector<16x32xf32>
    %46 = tpu.matmul %1, %45, %cst_40 {dimension_numbers = #tpu.dot_dimension_numbers<[0], [0], [1], [1], [0, 1, 1, 1], [], []>} : vector<16x16xbf16>, vector<16x32xbf16>, vector<16x32xf32> -> vector<16x32xf32>
    %47 = arith.truncf %46 : vector<16x32xf32> to vector<16x32xbf16>
    %cst_41 = arith.constant dense<0.000000e+00> : vector<16x32xf32>
    %48 = tpu.matmul %1, %47, %cst_41 {dimension_numbers = #tpu.dot_dimension_numbers<[1], [0], [0], [1], [0, 0, 1, 1], [], []>} : vector<16x16xbf16>, vector<16x32xbf16>, vector<16x32xf32> -> vector<16x32xf32>
    %cst_42 = arith.constant 0.000000e+00 : f32
    %49 = vector.broadcast %cst_42 : f32 to vector<16x32xf32>
    %50 = arith.maximumf %48, %49 : vector<16x32xf32>
    %cst_43 = arith.constant dense<0.000000e+00> : vector<16x1xf32>
    %51 = tpu.matmul %50, %40, %cst_43 {dimension_numbers = #tpu.dot_dimension_numbers<[1], [0], [0], [1], [0, 0, 1, 1], [], []>} : vector<16x32xf32>, vector<32x1xf32>, vector<16x1xf32> -> vector<16x1xf32>
    %52 = vector.broadcast %41 : vector<1x1xf32> to vector<16x1xf32>
    %53 = arith.addf %51, %52 : vector<16x1xf32>
    %cst_44 = arith.constant 0.000000e+00 : f32
    %54 = vector.broadcast %cst_44 : f32 to vector<16x1xf32>
    %55 = arith.maximumf %53, %54 : vector<16x1xf32>
    %56 = vector.shape_cast %55 : vector<16x1xf32> to vector<16x1xf32>
    %57 = vector.broadcast %56 : vector<16x1xf32> to vector<16x128xf32>
    %c0_45 = arith.constant 0 : index
    %c0_46 = arith.constant 0 : index
    %58 = vector.load %arg15[%c0_45, %c0_46] : memref<16x128xf32, #tpu.memory_space<vmem>>, vector<16x128xf32>
    tpu.vector_store %arg15[%c0_45, %c0_46], %57 {strides = array<i32>} : memref<16x128xf32, #tpu.memory_space<vmem>>, vector<16x128xf32>,
    return
  }
}

module attributes {stable_mosaic.version = 11 : i64} {
  func.func @_adj_head_kernel(%arg0: memref<16x16xf32, #tpu.memory_space<vmem>>, %arg1: memref<16x4xf32, #tpu.memory_space<vmem>>, %arg2: memref<16x16xf32, #tpu.memory_space<vmem>>, %arg3: memref<4x16xf32, #tpu.memory_space<vmem>>, %arg4: memref<1x16xf32, #tpu.memory_space<vmem>>, %arg5: memref<16x16xf32, #tpu.memory_space<vmem>>, %arg6: memref<1x16xf32, #tpu.memory_space<vmem>>, %arg7: memref<16x16xf32, #tpu.memory_space<vmem>>, %arg8: memref<16x16xf32, #tpu.memory_space<vmem>>) attributes {dimension_semantics = [], scalar_prefetch = 0 : i64, scratch_operands = 0 : i64, tpu.core_type = #tpu.core_type<tc>} {
    %c0 = arith.constant 0 : index
    %c0_0 = arith.constant 0 : index
    %0 = vector.load %arg0[%c0, %c0_0] : memref<16x16xf32, #tpu.memory_space<vmem>>, vector<16x16xf32>
    %c0_1 = arith.constant 0 : index
    %c0_2 = arith.constant 0 : index
    %1 = vector.load %arg1[%c0_1, %c0_2] : memref<16x4xf32, #tpu.memory_space<vmem>>, vector<16x4xf32>
    %c0_3 = arith.constant 0 : index
    %c0_4 = arith.constant 0 : index
    %2 = vector.load %arg2[%c0_3, %c0_4] : memref<16x16xf32, #tpu.memory_space<vmem>>, vector<16x16xf32>
    %c0_5 = arith.constant 0 : index
    %c0_6 = arith.constant 0 : index
    %3 = vector.load %arg3[%c0_5, %c0_6] : memref<4x16xf32, #tpu.memory_space<vmem>>, vector<4x16xf32>
    %c0_7 = arith.constant 0 : index
    %c0_8 = arith.constant 0 : index
    %4 = vector.load %arg4[%c0_7, %c0_8] : memref<1x16xf32, #tpu.memory_space<vmem>>, vector<1x16xf32>
    %c0_9 = arith.constant 0 : index
    %c0_10 = arith.constant 0 : index
    %5 = vector.load %arg5[%c0_9, %c0_10] : memref<16x16xf32, #tpu.memory_space<vmem>>, vector<16x16xf32>
    %c0_11 = arith.constant 0 : index
    %c0_12 = arith.constant 0 : index
    %6 = vector.load %arg6[%c0_11, %c0_12] : memref<1x16xf32, #tpu.memory_space<vmem>>, vector<1x16xf32>
    %cst = arith.constant dense<0.000000e+00> : vector<16x16xf32>
    %7 = tpu.matmul %0, %2, %cst {dimension_numbers = #tpu.dot_dimension_numbers<[1], [0], [0], [1], [0, 0, 1, 1], [], []>} : vector<16x16xf32>, vector<16x16xf32>, vector<16x16xf32> -> vector<16x16xf32>
    %cst_13 = arith.constant dense<0.000000e+00> : vector<16x16xf32>
    %8 = tpu.matmul %1, %3, %cst_13 {dimension_numbers = #tpu.dot_dimension_numbers<[1], [0], [0], [1], [0, 0, 1, 1], [], []>} : vector<16x4xf32>, vector<4x16xf32>, vector<16x16xf32> -> vector<16x16xf32>
    %9 = arith.addf %7, %8 : vector<16x16xf32>
    %10 = vector.broadcast %4 : vector<1x16xf32> to vector<16x16xf32>
    %11 = arith.addf %9, %10 : vector<16x16xf32>
    %cst_14 = arith.constant 5.000000e-01 : f32
    %12 = vector.broadcast %cst_14 : f32 to vector<16x16xf32>
    %13 = arith.mulf %12, %11 : vector<16x16xf32>
    %14 = math.tanh %13 : vector<16x16xf32>
    %cst_15 = arith.constant 1.000000e+00 : f32
    %15 = vector.broadcast %cst_15 : f32 to vector<16x16xf32>
    %16 = arith.addf %14, %15 : vector<16x16xf32>
    %cst_16 = arith.constant 5.000000e-01 : f32
    %17 = vector.broadcast %cst_16 : f32 to vector<16x16xf32>
    %18 = arith.mulf %17, %16 : vector<16x16xf32>
    %cst_17 = arith.constant dense<0.000000e+00> : vector<16x16xf32>
    %19 = tpu.matmul %18, %5, %cst_17 {dimension_numbers = #tpu.dot_dimension_numbers<[1], [0], [0], [1], [0, 0, 1, 1], [], []>} : vector<16x16xf32>, vector<16x16xf32>, vector<16x16xf32> -> vector<16x16xf32>
    %20 = vector.broadcast %6 : vector<1x16xf32> to vector<16x16xf32>
    %21 = arith.addf %19, %20 : vector<16x16xf32>
    %c0_18 = arith.constant 0 : index
    %c0_19 = arith.constant 0 : index
    %22 = vector.load %arg7[%c0_18, %c0_19] : memref<16x16xf32, #tpu.memory_space<vmem>>, vector<16x16xf32>
    %23 = arith.addf %21, %22 : vector<16x16xf32>
    %24 = arith.mulf %23, %23 : vector<16x16xf32>
    %cst_20 = arith.constant dense<0.000000e+00> : vector<16xf32>
    %25 = vector.multi_reduction <add>, %24, %cst_20 [1] : vector<16x16xf32> to vector<16xf32>
    %26 = vector.shape_cast %25 : vector<16xf32> to vector<16x1xf32>
    %cst_21 = arith.constant 1.000000e-24 : f32
    %27 = vector.broadcast %cst_21 : f32 to vector<16x1xf32>
    %28 = arith.maximumf %26, %27 : vector<16x1xf32>
    %29 = math.rsqrt %28 : vector<16x1xf32>
    %30 = vector.broadcast %29 : vector<16x1xf32> to vector<16x16xf32>
    %31 = arith.mulf %23, %30 : vector<16x16xf32>
    %32 = arith.truncf %31 : vector<16x16xf32> to vector<16x16xbf16>
    %33 = arith.truncf %31 : vector<16x16xf32> to vector<16x16xbf16>
    %cst_22 = arith.constant dense<0.000000e+00> : vector<16x16xf32>
    %34 = tpu.matmul %32, %33, %cst_22 {dimension_numbers = #tpu.dot_dimension_numbers<[1], [1], [0], [0], [0, 0, 1, 0], [], []>} : vector<16x16xbf16>, vector<16x16xbf16>, vector<16x16xf32> -> vector<16x16xf32>
    %cst_23 = arith.constant 0.000000e+00 : f32
    %35 = vector.broadcast %cst_23 : f32 to vector<16x1xf32>
    %c0_i32 = arith.constant 0 : i32
    %cst_24 = arith.constant dense<0xFF800000> : vector<16xf32>
    %36 = vector.multi_reduction <maximumf>, %34, %cst_24 [1] : vector<16x16xf32> to vector<16xf32>
    %37 = vector.shape_cast %36 : vector<16xf32> to vector<16x1xf32>
    %38 = vector.broadcast %37 : vector<16x1xf32> to vector<16x16xf32>
    %39 = arith.cmpf oge, %34, %38 : vector<16x16xf32>
    %cst_25 = arith.constant 0xFF800000 : f32
    %40 = vector.broadcast %cst_25 : f32 to vector<16x16xf32>
    %41 = arith.select %39, %40, %34 : vector<16x16xi1>, vector<16x16xf32>
    %c1_i32 = arith.constant 1 : i32
    %cst_26 = arith.constant dense<0xFF800000> : vector<16xf32>
    %42 = vector.multi_reduction <maximumf>, %41, %cst_26 [1] : vector<16x16xf32> to vector<16xf32>
    %43 = vector.shape_cast %42 : vector<16xf32> to vector<16x1xf32>
    %44 = vector.broadcast %43 : vector<16x1xf32> to vector<16x16xf32>
    %45 = arith.cmpf oge, %41, %44 : vector<16x16xf32>
    %cst_27 = arith.constant 0xFF800000 : f32
    %46 = vector.broadcast %cst_27 : f32 to vector<16x16xf32>
    %47 = arith.select %45, %46, %41 : vector<16x16xi1>, vector<16x16xf32>
    %c2_i32 = arith.constant 2 : i32
    %cst_28 = arith.constant dense<0xFF800000> : vector<16xf32>
    %48 = vector.multi_reduction <maximumf>, %47, %cst_28 [1] : vector<16x16xf32> to vector<16xf32>
    %49 = vector.shape_cast %48 : vector<16xf32> to vector<16x1xf32>
    %50 = vector.broadcast %49 : vector<16x1xf32> to vector<16x16xf32>
    %51 = arith.cmpf oge, %47, %50 : vector<16x16xf32>
    %cst_29 = arith.constant 0xFF800000 : f32
    %52 = vector.broadcast %cst_29 : f32 to vector<16x16xf32>
    %53 = arith.select %51, %52, %47 : vector<16x16xi1>, vector<16x16xf32>
    %c3_i32 = arith.constant 3 : i32
    %cst_30 = arith.constant dense<0xFF800000> : vector<16xf32>
    %54 = vector.multi_reduction <maximumf>, %53, %cst_30 [1] : vector<16x16xf32> to vector<16xf32>
    %55 = vector.shape_cast %54 : vector<16xf32> to vector<16x1xf32>
    %56 = vector.broadcast %55 : vector<16x1xf32> to vector<16x16xf32>
    %57 = arith.cmpf oge, %53, %56 : vector<16x16xf32>
    %cst_31 = arith.constant 0xFF800000 : f32
    %58 = vector.broadcast %cst_31 : f32 to vector<16x16xf32>
    %59 = arith.select %57, %58, %53 : vector<16x16xi1>, vector<16x16xf32>
    %c4_i32 = arith.constant 4 : i32
    %cst_32 = arith.constant dense<0xFF800000> : vector<16xf32>
    %60 = vector.multi_reduction <maximumf>, %59, %cst_32 [1] : vector<16x16xf32> to vector<16xf32>
    %61 = vector.shape_cast %60 : vector<16xf32> to vector<16x1xf32>
    %62 = vector.broadcast %61 : vector<16x1xf32> to vector<16x16xf32>
    %63 = arith.cmpf oge, %59, %62 : vector<16x16xf32>
    %cst_33 = arith.constant 0xFF800000 : f32
    %64 = vector.broadcast %cst_33 : f32 to vector<16x16xf32>
    %65 = arith.select %63, %64, %59 : vector<16x16xi1>, vector<16x16xf32>
    %66 = tpu.iota {dimensions = array<i32: 0>} : vector<16x16xi32>
    %67 = tpu.iota {dimensions = array<i32: 1>} : vector<16x16xi32>
    %68 = arith.cmpi eq, %66, %67 : vector<16x16xi32>
    %cst_34 = arith.constant 0.000000e+00 : f32
    %69 = vector.shape_cast %61 : vector<16x1xf32> to vector<16x1xf32>
    %70 = vector.broadcast %69 : vector<16x1xf32> to vector<16x16xf32>
    %71 = vector.broadcast %cst_34 : f32 to vector<16x16xf32>
    %72 = arith.select %68, %70, %71 : vector<16x16xi1>, vector<16x16xf32>
    %cst_35 = arith.constant dense<0.000000e+00> : vector<16xf32>
    %73 = vector.multi_reduction <add>, %72, %cst_35 [0] : vector<16x16xf32> to vector<16xf32>
    %74 = vector.shape_cast %73 : vector<16xf32> to vector<1x16xf32>
    %cst_36 = arith.constant 5.000000e-02 : f32
    %75 = vector.broadcast %cst_36 : f32 to vector<16x16xf32>
    %76 = arith.cmpf ogt, %34, %75 : vector<16x16xf32>
    %77 = arith.extui %76 : vector<16x16xi1> to vector<16x16xi32>
    %78 = arith.sitofp %77 : vector<16x16xi32> to vector<16x16xf32>
    %79 = vector.broadcast %61 : vector<16x1xf32> to vector<16x16xf32>
    %80 = arith.cmpf oge, %34, %79 : vector<16x16xf32>
    %81 = arith.extui %80 : vector<16x16xi1> to vector<16x16xi32>
    %82 = arith.sitofp %81 : vector<16x16xi32> to vector<16x16xf32>
    %83 = vector.broadcast %74 : vector<1x16xf32> to vector<16x16xf32>
    %84 = arith.cmpf oge, %34, %83 : vector<16x16xf32>
    %85 = arith.extui %84 : vector<16x16xi1> to vector<16x16xi32>
    %86 = arith.sitofp %85 : vector<16x16xi32> to vector<16x16xf32>
    %87 = arith.addf %82, %86 : vector<16x16xf32>
    %88 = arith.mulf %78, %87 : vector<16x16xf32>
    %cst_37 = arith.constant 5.000000e-01 : f32
    %89 = vector.broadcast %cst_37 : f32 to vector<16x16xf32>
    %90 = arith.mulf %89, %34 : vector<16x16xf32>
    %91 = arith.mulf %90, %88 : vector<16x16xf32>
    %cst_38 = arith.constant dense<0.000000e+00> : vector<16xf32>
    %92 = vector.multi_reduction <add>, %91, %cst_38 [1] : vector<16x16xf32> to vector<16xf32>
    %93 = vector.shape_cast %92 : vector<16xf32> to vector<16x1xf32>
    %cst_39 = arith.constant dense<0.000000e+00> : vector<16xf32>
    %94 = vector.multi_reduction <add>, %91, %cst_39 [0] : vector<16x16xf32> to vector<16xf32>
    %95 = vector.shape_cast %94 : vector<16xf32> to vector<1x16xf32>
    %96 = math.sqrt %93 : vector<16x1xf32>
    %cst_40 = arith.constant 1.000000e-10 : f32
    %97 = vector.broadcast %cst_40 : f32 to vector<16x1xf32>
    %98 = arith.addf %96, %97 : vector<16x1xf32>
    %99 = tpu.reciprocal %98 {approx = true} : vector<16x1xf32> -> vector<16x1xf32>
    %100 = math.sqrt %95 : vector<1x16xf32>
    %cst_41 = arith.constant 1.000000e-10 : f32
    %101 = vector.broadcast %cst_41 : f32 to vector<1x16xf32>
    %102 = arith.addf %100, %101 : vector<1x16xf32>
    %103 = tpu.reciprocal %102 {approx = true} : vector<1x16xf32> -> vector<1x16xf32>
    %104 = vector.broadcast %99 : vector<16x1xf32> to vector<16x16xf32>
    %105 = arith.mulf %104, %91 : vector<16x16xf32>
    %106 = vector.broadcast %103 : vector<1x16xf32> to vector<16x16xf32>
    %107 = arith.mulf %105, %106 : vector<16x16xf32>
    %c0_42 = arith.constant 0 : index
    %c0_43 = arith.constant 0 : index
    %108 = vector.load %arg8[%c0_42, %c0_43] : memref<16x16xf32, #tpu.memory_space<vmem>>, vector<16x16xf32>
    tpu.vector_store %arg8[%c0_42, %c0_43], %107 {strides = array<i32>} : memref<16x16xf32, #tpu.memory_space<vmem>>, vector<16x16xf32>,
    return
  }
}

module attributes {stable_mosaic.version = 11 : i64} {
  func.func @_up_iter_kernel(%arg0: memref<16x16xf32, #tpu.memory_space<vmem>>, %arg1: memref<16x4xf32, #tpu.memory_space<vmem>>, %arg2: memref<16x16xf32, #tpu.memory_space<vmem>>, %arg3: memref<4x16xf32, #tpu.memory_space<vmem>>, %arg4: memref<1x16xf32, #tpu.memory_space<vmem>>, %arg5: memref<16x16xf32, #tpu.memory_space<vmem>>, %arg6: memref<1x16xf32, #tpu.memory_space<vmem>>, %arg7: memref<16x16xf32, #tpu.memory_space<vmem>>, %arg8: memref<16x16xf32, #tpu.memory_space<vmem>>, %arg9: memref<16x256xf32, #tpu.memory_space<vmem>>, %arg10: memref<1x256xf32, #tpu.memory_space<vmem>>, %arg11: memref<256x16xf32, #tpu.memory_space<vmem>>, %arg12: memref<1x16xf32, #tpu.memory_space<vmem>>, %arg13: memref<16x256xf32, #tpu.memory_space<vmem>>, %arg14: memref<1x256xf32, #tpu.memory_space<vmem>>, %arg15: memref<256x16xf32, #tpu.memory_space<vmem>>, %arg16: memref<1x16xf32, #tpu.memory_space<vmem>>, %arg17: memref<16x16xf32, #tpu.memory_space<vmem>>, %arg18: memref<16x16xf32, #tpu.memory_space<vmem>>) attributes {dimension_semantics = [], scalar_prefetch = 0 : i64, scratch_operands = 0 : i64, tpu.core_type = #tpu.core_type<tc>} {
    %c0 = arith.constant 0 : index
    %c0_0 = arith.constant 0 : index
    %0 = vector.load %arg0[%c0, %c0_0] : memref<16x16xf32, #tpu.memory_space<vmem>>, vector<16x16xf32>
    %c0_1 = arith.constant 0 : index
    %c0_2 = arith.constant 0 : index
    %1 = vector.load %arg1[%c0_1, %c0_2] : memref<16x4xf32, #tpu.memory_space<vmem>>, vector<16x4xf32>
    %c0_3 = arith.constant 0 : index
    %c0_4 = arith.constant 0 : index
    %2 = vector.load %arg2[%c0_3, %c0_4] : memref<16x16xf32, #tpu.memory_space<vmem>>, vector<16x16xf32>
    %c0_5 = arith.constant 0 : index
    %c0_6 = arith.constant 0 : index
    %3 = vector.load %arg3[%c0_5, %c0_6] : memref<4x16xf32, #tpu.memory_space<vmem>>, vector<4x16xf32>
    %c0_7 = arith.constant 0 : index
    %c0_8 = arith.constant 0 : index
    %4 = vector.load %arg4[%c0_7, %c0_8] : memref<1x16xf32, #tpu.memory_space<vmem>>, vector<1x16xf32>
    %c0_9 = arith.constant 0 : index
    %c0_10 = arith.constant 0 : index
    %5 = vector.load %arg5[%c0_9, %c0_10] : memref<16x16xf32, #tpu.memory_space<vmem>>, vector<16x16xf32>
    %c0_11 = arith.constant 0 : index
    %c0_12 = arith.constant 0 : index
    %6 = vector.load %arg6[%c0_11, %c0_12] : memref<1x16xf32, #tpu.memory_space<vmem>>, vector<1x16xf32>
    %cst = arith.constant dense<0.000000e+00> : vector<16x16xf32>
    %7 = tpu.matmul %0, %2, %cst {dimension_numbers = #tpu.dot_dimension_numbers<[1], [0], [0], [1], [0, 0, 1, 1], [], []>} : vector<16x16xf32>, vector<16x16xf32>, vector<16x16xf32> -> vector<16x16xf32>
    %cst_13 = arith.constant dense<0.000000e+00> : vector<16x16xf32>
    %8 = tpu.matmul %1, %3, %cst_13 {dimension_numbers = #tpu.dot_dimension_numbers<[1], [0], [0], [1], [0, 0, 1, 1], [], []>} : vector<16x4xf32>, vector<4x16xf32>, vector<16x16xf32> -> vector<16x16xf32>
    %9 = arith.addf %7, %8 : vector<16x16xf32>
    %10 = vector.broadcast %4 : vector<1x16xf32> to vector<16x16xf32>
    %11 = arith.addf %9, %10 : vector<16x16xf32>
    %cst_14 = arith.constant 5.000000e-01 : f32
    %12 = vector.broadcast %cst_14 : f32 to vector<16x16xf32>
    %13 = arith.mulf %12, %11 : vector<16x16xf32>
    %14 = math.tanh %13 : vector<16x16xf32>
    %cst_15 = arith.constant 1.000000e+00 : f32
    %15 = vector.broadcast %cst_15 : f32 to vector<16x16xf32>
    %16 = arith.addf %14, %15 : vector<16x16xf32>
    %cst_16 = arith.constant 5.000000e-01 : f32
    %17 = vector.broadcast %cst_16 : f32 to vector<16x16xf32>
    %18 = arith.mulf %17, %16 : vector<16x16xf32>
    %cst_17 = arith.constant dense<0.000000e+00> : vector<16x16xf32>
    %19 = tpu.matmul %18, %5, %cst_17 {dimension_numbers = #tpu.dot_dimension_numbers<[1], [0], [0], [1], [0, 0, 1, 1], [], []>} : vector<16x16xf32>, vector<16x16xf32>, vector<16x16xf32> -> vector<16x16xf32>
    %20 = vector.broadcast %6 : vector<1x16xf32> to vector<16x16xf32>
    %21 = arith.addf %19, %20 : vector<16x16xf32>
    %c0_18 = arith.constant 0 : index
    %c0_19 = arith.constant 0 : index
    %22 = vector.load %arg7[%c0_18, %c0_19] : memref<16x16xf32, #tpu.memory_space<vmem>>, vector<16x16xf32>
    %c0_20 = arith.constant 0 : index
    %c0_21 = arith.constant 0 : index
    %23 = vector.load %arg8[%c0_20, %c0_21] : memref<16x16xf32, #tpu.memory_space<vmem>>, vector<16x16xf32>
    %cst_22 = arith.constant dense<0.000000e+00> : vector<16xf32>
    %24 = vector.multi_reduction <add>, %22, %cst_22 [1] : vector<16x16xf32> to vector<16xf32>
    %25 = vector.shape_cast %24 : vector<16xf32> to vector<16x1xf32>
    %cst_23 = arith.constant dense<0.000000e+00> : vector<16xf32>
    %26 = vector.multi_reduction <add>, %22, %cst_23 [0] : vector<16x16xf32> to vector<16xf32>
    %27 = vector.shape_cast %26 : vector<16xf32> to vector<1x16xf32>
    %28 = math.sqrt %25 : vector<16x1xf32>
    %cst_24 = arith.constant 1.000000e-10 : f32
    %29 = vector.broadcast %cst_24 : f32 to vector<16x1xf32>
    %30 = arith.addf %28, %29 : vector<16x1xf32>
    %31 = tpu.reciprocal %30 {approx = true} : vector<16x1xf32> -> vector<16x1xf32>
    %32 = math.sqrt %27 : vector<1x16xf32>
    %cst_25 = arith.constant 1.000000e-10 : f32
    %33 = vector.broadcast %cst_25 : f32 to vector<1x16xf32>
    %34 = arith.addf %32, %33 : vector<1x16xf32>
    %35 = tpu.reciprocal %34 {approx = true} : vector<1x16xf32> -> vector<1x16xf32>
    %36 = vector.broadcast %31 : vector<16x1xf32> to vector<16x16xf32>
    %37 = arith.mulf %36, %22 : vector<16x16xf32>
    %38 = vector.broadcast %35 : vector<1x16xf32> to vector<16x16xf32>
    %39 = arith.mulf %37, %38 : vector<16x16xf32>
    %40 = arith.truncf %39 : vector<16x16xf32> to vector<16x16xbf16>
    %c0_26 = arith.constant 0 : index
    %c0_27 = arith.constant 0 : index
    %41 = vector.load %arg9[%c0_26, %c0_27] : memref<16x256xf32, #tpu.memory_space<vmem>>, vector<16x256xf32>
    %c0_28 = arith.constant 0 : index
    %c0_29 = arith.constant 0 : index
    %42 = vector.load %arg10[%c0_28, %c0_29] : memref<1x256xf32, #tpu.memory_space<vmem>>, vector<1x256xf32>
    %c0_30 = arith.constant 0 : index
    %c0_31 = arith.constant 0 : index
    %43 = vector.load %arg11[%c0_30, %c0_31] : memref<256x16xf32, #tpu.memory_space<vmem>>, vector<256x16xf32>
    %c0_32 = arith.constant 0 : index
    %c0_33 = arith.constant 0 : index
    %44 = vector.load %arg12[%c0_32, %c0_33] : memref<1x16xf32, #tpu.memory_space<vmem>>, vector<1x16xf32>
    %cst_34 = arith.constant dense<0.000000e+00> : vector<16x256xf32>
    %45 = tpu.matmul %21, %41, %cst_34 {dimension_numbers = #tpu.dot_dimension_numbers<[1], [0], [0], [1], [0, 0, 1, 1], [], []>} : vector<16x16xf32>, vector<16x256xf32>, vector<16x256xf32> -> vector<16x256xf32>
    %46 = vector.broadcast %42 : vector<1x256xf32> to vector<16x256xf32>
    %47 = arith.addf %45, %46 : vector<16x256xf32>
    %48 = arith.truncf %47 : vector<16x256xf32> to vector<16x256xbf16>
    %cst_35 = arith.constant dense<0.000000e+00> : vector<16x256xf32>
    %49 = tpu.matmul %40, %48, %cst_35 {dimension_numbers = #tpu.dot_dimension_numbers<[0], [0], [1], [1], [0, 1, 1, 1], [], []>} : vector<16x16xbf16>, vector<16x256xbf16>, vector<16x256xf32> -> vector<16x256xf32>
    %50 = arith.truncf %49 : vector<16x256xf32> to vector<16x256xbf16>
    %cst_36 = arith.constant dense<0.000000e+00> : vector<16x256xf32>
    %51 = tpu.matmul %40, %50, %cst_36 {dimension_numbers = #tpu.dot_dimension_numbers<[1], [0], [0], [1], [0, 0, 1, 1], [], []>} : vector<16x16xbf16>, vector<16x256xbf16>, vector<16x256xf32> -> vector<16x256xf32>
    %cst_37 = arith.constant 0.000000e+00 : f32
    %52 = vector.broadcast %cst_37 : f32 to vector<16x256xf32>
    %53 = arith.maximumf %51, %52 : vector<16x256xf32>
    %cst_38 = arith.constant dense<0.000000e+00> : vector<16x16xf32>
    %54 = tpu.matmul %53, %43, %cst_38 {dimension_numbers = #tpu.dot_dimension_numbers<[1], [0], [0], [1], [0, 0, 1, 1], [], []>} : vector<16x256xf32>, vector<256x16xf32>, vector<16x16xf32> -> vector<16x16xf32>
    %55 = vector.broadcast %44 : vector<1x16xf32> to vector<16x16xf32>
    %56 = arith.addf %54, %55 : vector<16x16xf32>
    %cst_39 = arith.constant 0.000000e+00 : f32
    %57 = vector.broadcast %cst_39 : f32 to vector<16x16xf32>
    %58 = arith.maximumf %56, %57 : vector<16x16xf32>
    %c0_40 = arith.constant 0 : index
    %c0_41 = arith.constant 0 : index
    %59 = vector.load %arg13[%c0_40, %c0_41] : memref<16x256xf32, #tpu.memory_space<vmem>>, vector<16x256xf32>
    %c0_42 = arith.constant 0 : index
    %c0_43 = arith.constant 0 : index
    %60 = vector.load %arg14[%c0_42, %c0_43] : memref<1x256xf32, #tpu.memory_space<vmem>>, vector<1x256xf32>
    %c0_44 = arith.constant 0 : index
    %c0_45 = arith.constant 0 : index
    %61 = vector.load %arg15[%c0_44, %c0_45] : memref<256x16xf32, #tpu.memory_space<vmem>>, vector<256x16xf32>
    %c0_46 = arith.constant 0 : index
    %c0_47 = arith.constant 0 : index
    %62 = vector.load %arg16[%c0_46, %c0_47] : memref<1x16xf32, #tpu.memory_space<vmem>>, vector<1x16xf32>
    %cst_48 = arith.constant dense<0.000000e+00> : vector<16x256xf32>
    %63 = tpu.matmul %58, %59, %cst_48 {dimension_numbers = #tpu.dot_dimension_numbers<[1], [0], [0], [1], [0, 0, 1, 1], [], []>} : vector<16x16xf32>, vector<16x256xf32>, vector<16x256xf32> -> vector<16x256xf32>
    %64 = vector.broadcast %60 : vector<1x256xf32> to vector<16x256xf32>
    %65 = arith.addf %63, %64 : vector<16x256xf32>
    %66 = arith.truncf %65 : vector<16x256xf32> to vector<16x256xbf16>
    %cst_49 = arith.constant dense<0.000000e+00> : vector<16x256xf32>
    %67 = tpu.matmul %40, %66, %cst_49 {dimension_numbers = #tpu.dot_dimension_numbers<[0], [0], [1], [1], [0, 1, 1, 1], [], []>} : vector<16x16xbf16>, vector<16x256xbf16>, vector<16x256xf32> -> vector<16x256xf32>
    %68 = arith.truncf %67 : vector<16x256xf32> to vector<16x256xbf16>
    %cst_50 = arith.constant dense<0.000000e+00> : vector<16x256xf32>
    %69 = tpu.matmul %40, %68, %cst_50 {dimension_numbers = #tpu.dot_dimension_numbers<[1], [0], [0], [1], [0, 0, 1, 1], [], []>} : vector<16x16xbf16>, vector<16x256xbf16>, vector<16x256xf32> -> vector<16x256xf32>
    %cst_51 = arith.constant 0.000000e+00 : f32
    %70 = vector.broadcast %cst_51 : f32 to vector<16x256xf32>
    %71 = arith.maximumf %69, %70 : vector<16x256xf32>
    %cst_52 = arith.constant dense<0.000000e+00> : vector<16x16xf32>
    %72 = tpu.matmul %71, %61, %cst_52 {dimension_numbers = #tpu.dot_dimension_numbers<[1], [0], [0], [1], [0, 0, 1, 1], [], []>} : vector<16x256xf32>, vector<256x16xf32>, vector<16x16xf32> -> vector<16x16xf32>
    %73 = vector.broadcast %62 : vector<1x16xf32> to vector<16x16xf32>
    %74 = arith.addf %72, %73 : vector<16x16xf32>
    %75 = arith.addf %74, %23 : vector<16x16xf32>
    %76 = arith.mulf %75, %75 : vector<16x16xf32>
    %cst_53 = arith.constant dense<0.000000e+00> : vector<16xf32>
    %77 = vector.multi_reduction <add>, %76, %cst_53 [1] : vector<16x16xf32> to vector<16xf32>
    %78 = vector.shape_cast %77 : vector<16xf32> to vector<16x1xf32>
    %cst_54 = arith.constant 1.000000e-24 : f32
    %79 = vector.broadcast %cst_54 : f32 to vector<16x1xf32>
    %80 = arith.maximumf %78, %79 : vector<16x1xf32>
    %81 = math.rsqrt %80 : vector<16x1xf32>
    %82 = vector.broadcast %81 : vector<16x1xf32> to vector<16x16xf32>
    %83 = arith.mulf %75, %82 : vector<16x16xf32>
    %84 = arith.truncf %83 : vector<16x16xf32> to vector<16x16xbf16>
    %85 = arith.truncf %83 : vector<16x16xf32> to vector<16x16xbf16>
    %cst_55 = arith.constant dense<0.000000e+00> : vector<16x16xf32>
    %86 = tpu.matmul %84, %85, %cst_55 {dimension_numbers = #tpu.dot_dimension_numbers<[1], [1], [0], [0], [0, 0, 1, 0], [], []>} : vector<16x16xbf16>, vector<16x16xbf16>, vector<16x16xf32> -> vector<16x16xf32>
    %cst_56 = arith.constant 0.000000e+00 : f32
    %87 = vector.broadcast %cst_56 : f32 to vector<16x1xf32>
    %c0_i32 = arith.constant 0 : i32
    %cst_57 = arith.constant dense<0xFF800000> : vector<16xf32>
    %88 = vector.multi_reduction <maximumf>, %86, %cst_57 [1] : vector<16x16xf32> to vector<16xf32>
    %89 = vector.shape_cast %88 : vector<16xf32> to vector<16x1xf32>
    %90 = vector.broadcast %89 : vector<16x1xf32> to vector<16x16xf32>
    %91 = arith.cmpf oge, %86, %90 : vector<16x16xf32>
    %cst_58 = arith.constant 0xFF800000 : f32
    %92 = vector.broadcast %cst_58 : f32 to vector<16x16xf32>
    %93 = arith.select %91, %92, %86 : vector<16x16xi1>, vector<16x16xf32>
    %c1_i32 = arith.constant 1 : i32
    %cst_59 = arith.constant dense<0xFF800000> : vector<16xf32>
    %94 = vector.multi_reduction <maximumf>, %93, %cst_59 [1] : vector<16x16xf32> to vector<16xf32>
    %95 = vector.shape_cast %94 : vector<16xf32> to vector<16x1xf32>
    %96 = vector.broadcast %95 : vector<16x1xf32> to vector<16x16xf32>
    %97 = arith.cmpf oge, %93, %96 : vector<16x16xf32>
    %cst_60 = arith.constant 0xFF800000 : f32
    %98 = vector.broadcast %cst_60 : f32 to vector<16x16xf32>
    %99 = arith.select %97, %98, %93 : vector<16x16xi1>, vector<16x16xf32>
    %c2_i32 = arith.constant 2 : i32
    %cst_61 = arith.constant dense<0xFF800000> : vector<16xf32>
    %100 = vector.multi_reduction <maximumf>, %99, %cst_61 [1] : vector<16x16xf32> to vector<16xf32>
    %101 = vector.shape_cast %100 : vector<16xf32> to vector<16x1xf32>
    %102 = vector.broadcast %101 : vector<16x1xf32> to vector<16x16xf32>
    %103 = arith.cmpf oge, %99, %102 : vector<16x16xf32>
    %cst_62 = arith.constant 0xFF800000 : f32
    %104 = vector.broadcast %cst_62 : f32 to vector<16x16xf32>
    %105 = arith.select %103, %104, %99 : vector<16x16xi1>, vector<16x16xf32>
    %c3_i32 = arith.constant 3 : i32
    %cst_63 = arith.constant dense<0xFF800000> : vector<16xf32>
    %106 = vector.multi_reduction <maximumf>, %105, %cst_63 [1] : vector<16x16xf32> to vector<16xf32>
    %107 = vector.shape_cast %106 : vector<16xf32> to vector<16x1xf32>
    %108 = vector.broadcast %107 : vector<16x1xf32> to vector<16x16xf32>
    %109 = arith.cmpf oge, %105, %108 : vector<16x16xf32>
    %cst_64 = arith.constant 0xFF800000 : f32
    %110 = vector.broadcast %cst_64 : f32 to vector<16x16xf32>
    %111 = arith.select %109, %110, %105 : vector<16x16xi1>, vector<16x16xf32>
    %c4_i32 = arith.constant 4 : i32
    %cst_65 = arith.constant dense<0xFF800000> : vector<16xf32>
    %112 = vector.multi_reduction <maximumf>, %111, %cst_65 [1] : vector<16x16xf32> to vector<16xf32>
    %113 = vector.shape_cast %112 : vector<16xf32> to vector<16x1xf32>
    %114 = vector.broadcast %113 : vector<16x1xf32> to vector<16x16xf32>
    %115 = arith.cmpf oge, %111, %114 : vector<16x16xf32>
    %cst_66 = arith.constant 0xFF800000 : f32
    %116 = vector.broadcast %cst_66 : f32 to vector<16x16xf32>
    %117 = arith.select %115, %116, %111 : vector<16x16xi1>, vector<16x16xf32>
    %118 = tpu.iota {dimensions = array<i32: 0>} : vector<16x16xi32>
    %119 = tpu.iota {dimensions = array<i32: 1>} : vector<16x16xi32>
    %120 = arith.cmpi eq, %118, %119 : vector<16x16xi32>
    %cst_67 = arith.constant 0.000000e+00 : f32
    %121 = vector.shape_cast %113 : vector<16x1xf32> to vector<16x1xf32>
    %122 = vector.broadcast %121 : vector<16x1xf32> to vector<16x16xf32>
    %123 = vector.broadcast %cst_67 : f32 to vector<16x16xf32>
    %124 = arith.select %120, %122, %123 : vector<16x16xi1>, vector<16x16xf32>
    %cst_68 = arith.constant dense<0.000000e+00> : vector<16xf32>
    %125 = vector.multi_reduction <add>, %124, %cst_68 [0] : vector<16x16xf32> to vector<16xf32>
    %126 = vector.shape_cast %125 : vector<16xf32> to vector<1x16xf32>
    %cst_69 = arith.constant 5.000000e-02 : f32
    %127 = vector.broadcast %cst_69 : f32 to vector<16x16xf32>
    %128 = arith.cmpf ogt, %86, %127 : vector<16x16xf32>
    %129 = arith.extui %128 : vector<16x16xi1> to vector<16x16xi32>
    %130 = arith.sitofp %129 : vector<16x16xi32> to vector<16x16xf32>
    %131 = vector.broadcast %113 : vector<16x1xf32> to vector<16x16xf32>
    %132 = arith.cmpf oge, %86, %131 : vector<16x16xf32>
    %133 = arith.extui %132 : vector<16x16xi1> to vector<16x16xi32>
    %134 = arith.sitofp %133 : vector<16x16xi32> to vector<16x16xf32>
    %135 = vector.broadcast %126 : vector<1x16xf32> to vector<16x16xf32>
    %136 = arith.cmpf oge, %86, %135 : vector<16x16xf32>
    %137 = arith.extui %136 : vector<16x16xi1> to vector<16x16xi32>
    %138 = arith.sitofp %137 : vector<16x16xi32> to vector<16x16xf32>
    %139 = arith.addf %134, %138 : vector<16x16xf32>
    %140 = arith.mulf %130, %139 : vector<16x16xf32>
    %cst_70 = arith.constant 5.000000e-01 : f32
    %141 = vector.broadcast %cst_70 : f32 to vector<16x16xf32>
    %142 = arith.mulf %141, %86 : vector<16x16xf32>
    %143 = arith.mulf %142, %140 : vector<16x16xf32>
    %cst_71 = arith.constant dense<0.000000e+00> : vector<16xf32>
    %144 = vector.multi_reduction <add>, %143, %cst_71 [1] : vector<16x16xf32> to vector<16xf32>
    %145 = vector.shape_cast %144 : vector<16xf32> to vector<16x1xf32>
    %cst_72 = arith.constant dense<0.000000e+00> : vector<16xf32>
    %146 = vector.multi_reduction <add>, %143, %cst_72 [0] : vector<16x16xf32> to vector<16xf32>
    %147 = vector.shape_cast %146 : vector<16xf32> to vector<1x16xf32>
    %148 = math.sqrt %145 : vector<16x1xf32>
    %cst_73 = arith.constant 1.000000e-10 : f32
    %149 = vector.broadcast %cst_73 : f32 to vector<16x1xf32>
    %150 = arith.addf %148, %149 : vector<16x1xf32>
    %151 = tpu.reciprocal %150 {approx = true} : vector<16x1xf32> -> vector<16x1xf32>
    %152 = math.sqrt %147 : vector<1x16xf32>
    %cst_74 = arith.constant 1.000000e-10 : f32
    %153 = vector.broadcast %cst_74 : f32 to vector<1x16xf32>
    %154 = arith.addf %152, %153 : vector<1x16xf32>
    %155 = tpu.reciprocal %154 {approx = true} : vector<1x16xf32> -> vector<1x16xf32>
    %156 = vector.broadcast %151 : vector<16x1xf32> to vector<16x16xf32>
    %157 = arith.mulf %156, %143 : vector<16x16xf32>
    %158 = vector.broadcast %155 : vector<1x16xf32> to vector<16x16xf32>
    %159 = arith.mulf %157, %158 : vector<16x16xf32>
    %c0_75 = arith.constant 0 : index
    %c0_76 = arith.constant 0 : index
    %160 = vector.load %arg17[%c0_75, %c0_76] : memref<16x16xf32, #tpu.memory_space<vmem>>, vector<16x16xf32>
    tpu.vector_store %arg17[%c0_75, %c0_76], %159 {strides = array<i32>} : memref<16x16xf32, #tpu.memory_space<vmem>>, vector<16x16xf32>,
    %cst_77 = arith.constant 0.699999988 : f32
    %161 = vector.broadcast %cst_77 : f32 to vector<16x16xf32>
    %162 = arith.mulf %161, %159 : vector<16x16xf32>
    %cst_78 = arith.constant 3.000000e-01 : f32
    %163 = vector.broadcast %cst_78 : f32 to vector<16x16xf32>
    %164 = arith.mulf %163, %22 : vector<16x16xf32>
    %165 = arith.addf %162, %164 : vector<16x16xf32>
    %cst_79 = arith.constant 2.000000e-03 : f32
    %166 = vector.broadcast %cst_79 : f32 to vector<16x16xf32>
    %167 = arith.cmpf olt, %165, %166 : vector<16x16xf32>
    %cst_80 = arith.constant 0.000000e+00 : f32
    %168 = vector.broadcast %cst_80 : f32 to vector<16x16xf32>
    %169 = arith.select %167, %168, %165 : vector<16x16xi1>, vector<16x16xf32>
    %c0_81 = arith.constant 0 : index
    %c0_82 = arith.constant 0 : index
    %170 = vector.load %arg18[%c0_81, %c0_82] : memref<16x16xf32, #tpu.memory_space<vmem>>, vector<16x16xf32>
    tpu.vector_store %arg18[%c0_81, %c0_82], %169 {strides = array<i32>} : memref<16x16xf32, #tpu.memory_space<vmem>>, vector<16x16xf32>,
    return
  }
}

</mosaic_0001>

<llo_original>
// kernel: _lambda_.3
$region0: #{_lambda_.3}
  #allocation0 [shape = 'u32[]', space=smem, size = 0x4, offset = 0x4, fixed_abs, tag = 'smem constant byte address 0x4 - core index']
  #allocation1 [shape = 'u32[144,128]{1,0:T(1,128)}', space=vmem, size = 0x12000, scoped, tag = 'internal scratch']
  #allocation2 [shape = 'f32[1,1]{1,0:T(1,128)S(1)}', space=vmem, size = 0x200, scoped, tag = 'scoped memory for _lambda_.3']
  %s0 = inlined_call_operand.vmem [shape: f32[16,8], index: 0, kind: input, shape index: {}]
  %s1 = inlined_call_operand.vmem [shape: f32[16,16], index: 1, kind: input, shape index: {}]
  %s2 = inlined_call_operand.vmem [shape: f32[8,32], index: 2, kind: input, shape index: {}]
  %s3 = inlined_call_operand.vmem [shape: f32[1,32], index: 3, kind: input, shape index: {}]
  %s4 = inlined_call_operand.vmem [shape: f32[32,16], index: 4, kind: input, shape index: {}]
  %s5 = inlined_call_operand.vmem [shape: f32[1,16], index: 5, kind: input, shape index: {}]
  %s6 = inlined_call_operand.vmem [shape: f32[16,32], index: 6, kind: input, shape index: {}]
  %s7 = inlined_call_operand.vmem [shape: f32[1,32], index: 7, kind: input, shape index: {}]
  %s8 = inlined_call_operand.vmem [shape: f32[32,16], index: 8, kind: input, shape index: {}]
  %s9 = inlined_call_operand.vmem [shape: f32[1,16], index: 9, kind: input, shape index: {}]
  %s10 = inlined_call_operand.vmem [shape: f32[16,32], index: 10, kind: input, shape index: {}]
  %s11 = inlined_call_operand.vmem [shape: f32[1,32], index: 11, kind: input, shape index: {}]
  %s12 = inlined_call_operand.vmem [shape: f32[32,1], index: 12, kind: input, shape index: {}]
  %s13 = inlined_call_operand.<no memory space> [shape: f32[1,1], index: 13, kind: input, shape index: {}]
  %s14 = inlined_call_operand.vmem [shape: f32[16,16], index: 14, kind: output, shape index: {0}]
  %s15 = inlined_call_operand.vmem [shape: f32[16,128], index: 15, kind: output, shape index: {1}]
  %16 = xla_tuple %s14, %s15
  %s17 = sld [smem:[#allocation0]]
  $region74: #{_lambda_.3} parent=0
    _
  %s19 = ssub.s32 1, %s17
  %s20 = scalar_select 0, %s19, %s17
  %v21 = vstv %s13
  %22 = vst [vmem:[#allocation2] sm:$0x1] %v21
  // Predicated region
  $region2: #{_lambda_.3} parent=0 // pred_check
    _
  $region3: #{_lambda_.3} parent=0 // pred_check_branch
    %24 = sbr.rel (0) target = $region5
  $region4: #{_lambda_.3} parent=0 // pred_region
    _
  $region5: #{_lambda_.3} parent=0 // pred_fallthru
    _
  // Predicated region
  $region6: #{_lambda_.3} parent=0 // pred_check
    _
  $region7: #{_lambda_.3} parent=0 // pred_check_branch
    %26 = sbr.rel (0) target = $region9
  $region8: #{_lambda_.3} parent=0 // pred_region
    _
  $region9: #{_lambda_.3} parent=0 // pred_fallthru
    _
  // Predicated region
  $region10: #{_lambda_.3} parent=0 // pred_check
    _
  $region11: #{_lambda_.3} parent=0 // pred_check_branch
    %28 = sbr.rel (0) target = $region13
  $region12: #{_lambda_.3} parent=0 // pred_region
    _
  $region13: #{_lambda_.3} parent=0 // pred_fallthru
    _
  // Predicated region
  $region14: #{_lambda_.3} parent=0 // pred_check
    _
  $region15: #{_lambda_.3} parent=0 // pred_check_branch
    %30 = sbr.rel (0) target = $region17
  $region16: #{_lambda_.3} parent=0 // pred_region
    _
  $region17: #{_lambda_.3} parent=0 // pred_fallthru
    _
  // Predicated region
  $region18: #{_lambda_.3} parent=0 // pred_check
    _
  $region19: #{_lambda_.3} parent=0 // pred_check_branch
    %32 = sbr.rel (0) target = $region21
  $region20: #{_lambda_.3} parent=0 // pred_region
    _
  $region21: #{_lambda_.3} parent=0 // pred_fallthru
    _
  // Predicated region
  $region22: #{_lambda_.3} parent=0 // pred_check
    _
  $region23: #{_lambda_.3} parent=0 // pred_check_branch
    %34 = sbr.rel (0) target = $region25
  $region24: #{_lambda_.3} parent=0 // pred_region
    _
  $region25: #{_lambda_.3} parent=0 // pred_fallthru
    _
  // Predicated region
  $region26: #{_lambda_.3} parent=0 // pred_check
    _
  $region27: #{_lambda_.3} parent=0 // pred_check_branch
    %36 = sbr.rel (0) target = $region29
  $region28: #{_lambda_.3} parent=0 // pred_region
    _
  $region29: #{_lambda_.3} parent=0 // pred_fallthru
    _
  // Predicated region
  $region30: #{_lambda_.3} parent=0 // pred_check
    _
  $region31: #{_lambda_.3} parent=0 // pred_check_branch
    %38 = sbr.rel (0) target = $region33
  $region32: #{_lambda_.3} parent=0 // pred_region
    _
  $region33: #{_lambda_.3} parent=0 // pred_fallthru
    _
  // Predicated region
  $region34: #{_lambda_.3} parent=0 // pred_check
    _
  $region35: #{_lambda_.3} parent=0 // pred_check_branch
    %40 = sbr.rel (0) target = $region37
  $region36: #{_lambda_.3} parent=0 // pred_region
    _
  $region37: #{_lambda_.3} parent=0 // pred_fallthru
    _
  // Predicated region
  $region38: #{_lambda_.3} parent=0 // pred_check
    _
  $region39: #{_lambda_.3} parent=0 // pred_check_branch
    %42 = sbr.rel (0) target = $region41
  $region40: #{_lambda_.3} parent=0 // pred_region
    _
  $region41: #{_lambda_.3} parent=0 // pred_fallthru
    _
  // Predicated region
  $region42: #{_lambda_.3} parent=0 // pred_check
    _
  $region43: #{_lambda_.3} parent=0 // pred_check_branch
    %44 = sbr.rel (0) target = $region45
  $region44: #{_lambda_.3} parent=0 // pred_region
    _
  $region45: #{_lambda_.3} parent=0 // pred_fallthru
    _
  // Predicated region
  $region46: #{_lambda_.3} parent=0 // pred_check
    _
  $region47: #{_lambda_.3} parent=0 // pred_check_branch
    %46 = sbr.rel (0) target = $region49
  $region48: #{_lambda_.3} parent=0 // pred_region
    _
  $region49: #{_lambda_.3} parent=0 // pred_fallthru
    _
  // Predicated region
  $region50: #{_lambda_.3} parent=0 // pred_check
    _
  $region51: #{_lambda_.3} parent=0 // pred_check_branch
    %48 = sbr.rel (0) target = $region53
  $region52: #{_lambda_.3} parent=0 // pred_region
    _
  $region53: #{_lambda_.3} parent=0 // pred_fallthru
    _
  // Predicated region
  $region54: #{_lambda_.3} parent=0 // pred_check
    _
  $region55: #{_lambda_.3} parent=0 // pred_check_branch
    %50 = sbr.rel (0) target = $region57
  $region56: #{_lambda_.3} parent=0 // pred_region
    _
  $region57: #{_lambda_.3} parent=0 // pred_fallthru
    _
  %v52 = vld [vmem:[%s1] sm:$0xff]
  %v53 = vld [vmem:[%s1 + $0x8] sm:$0xff]
  %v54 = vpack.c.bf16 %v53, %v52
  %v55 = vld [vmem:[%s0] sm:$0xff]
  %v56 = vld [vmem:[%s0 + $0x8] sm:$0xff]
  %v57 = vld [vmem:[%s2] sm:$0xff]
  %v58 = vld [vmem:[%s3] sm:$0x1]
  %v59 = vld [vmem:[%s4] sm:$0xff]
  %v60 = vld [vmem:[%s4 + $0x8] sm:$0xff]
  %v61 = vld [vmem:[%s4 + $0x10] sm:$0xff]
  %v62 = vld [vmem:[%s4 + $0x18] sm:$0xff]
  %v63 = vld [vmem:[%s5] sm:$0x1]
  %v65 = vlaneseq
  %v66 = vshrl.u32 %v65, 7
  %v67 = vsub.s32 0, %v66
  %v68 = vrot.slane %v58, %v67
  %vm70 = vcmask 64512
  %v72 = vsel %vm70, %v55, 0
  %v75 = vsel %vm70, %v56, 0
  %77 = vmatprep.subr.mxu0 0.0
  %78 = vmatpush1.msra.mxu0 %v57
  %79 = vmatprep.subr.mxu0 0.0
  %80 = vmatpush1.msra.mxu0 0.0
  %81 = vmatprep.subr.mxu0 0.0
  %82 = vmatpush1.msra.mxu0 0.0
  %83 = vmatprep.subr.mxu0 0.0
  %84 = vmatpush1.msra.mxu0 0.0
  %85 = vmatprep.subr.mxu0 0.0
  %86 = vmatpush1.msra.mxu0 0.0
  %87 = vmatprep.subr.mxu0 0.0
  %88 = vmatpush1.msra.mxu0 0.0
  %89 = vmatprep.subr.mxu0 0.0
  %90 = vmatpush1.msra.mxu0 0.0
  %91 = vmatprep.subr.mxu0 0.0
  %92 = vmatpush1.msra.mxu0 0.0
  %93 = vmatprep.subr.mxu0 0.0
  %94 = vmatpush1.msra.mxu0 0.0
  %95 = vmatprep.subr.mxu0 0.0
  %96 = vmatpush1.msra.mxu0 0.0
  %97 = vmatprep.subr.mxu0 0.0
  %98 = vmatpush1.msra.mxu0 0.0
  %99 = vmatprep.subr.mxu0 0.0
  %100 = vmatpush1.msra.mxu0 0.0
  %101 = vmatprep.subr.mxu0 0.0
  %102 = vmatpush1.msra.mxu0 0.0
  %103 = vmatprep.subr.mxu0 0.0
  %104 = vmatpush1.msra.mxu0 0.0
  %105 = vmatprep.subr.mxu0 0.0
  %106 = vmatpush1.msra.mxu0 0.0
  %107 = vmatprep.subr.mxu0 0.0
  %108 = vmatpush1.msra.mxu0 0.0
  %109 = vmatprep.subr.mxu0 0.0
  %110 = vmatpush1.msra.mxu0 0.0
  %111 = vmatprep.subr.mxu0 0.0
  %112 = vmatpush1.msra.mxu0 0.0
  %113 = vmatprep.subr.mxu0 0.0
  %114 = vmatpush1.msra.mxu0 0.0
  %115 = vmatprep.subr.mxu0 0.0
  %116 = vmatpush1.msra.mxu0 0.0
  %117 = vmatprep.subr.mxu0 0.0
  %118 = vmatpush1.msra.mxu0 0.0
  %119 = vmatprep.subr.mxu0 0.0
  %120 = vmatpush1.msra.mxu0 0.0
  %121 = vmatprep.subr.mxu0 0.0
  %122 = vmatpush1.msra.mxu0 0.0
  %123 = vmatprep.subr.mxu0 0.0
  %124 = vmatpush1.msra.mxu0 0.0
  %125 = vmatprep.subr.mxu0 0.0
  %126 = vmatpush1.msra.mxu0 0.0
  %127 = vmatprep.subr.mxu0 0.0
  %128 = vmatpush1.msra.mxu0 0.0
  %129 = vmatprep.subr.mxu0 0.0
  %130 = vmatpush1.msra.mxu0 0.0
  %131 = vmatprep.subr.mxu0 0.0
  %132 = vmatpush1.msra.mxu0 0.0
  %133 = vmatprep.subr.mxu0 0.0
  %134 = vmatpush1.msra.mxu0 0.0
  %135 = vmatprep.subr.mxu0 0.0
  %136 = vmatpush1.msra.mxu0 0.0
  %137 = vmatprep.subr.mxu0 0.0
  %138 = vmatpush1.msra.mxu0 0.0
  %139 = vmatprep.subr.mxu0 0.0
  %140 = vmatpush1.msra.mxu0 0.0
  %141 = vmatprep.mubr.f32.mxu0 0.0
  %142 = vmatmul.mubr.f32.gmra.mrb[0].mxu0 %v72
  %v143 = vpop.f32.mrb[0].mxu0
  %v144 = vadd.f32 %v68, %v143
  %v145 = vpop.f32.mrb[0].mxu0
  %146 = vmatprep.mubr.f32.mxu0 0.0
  %147 = vmatmul.mubr.f32.gmra.mrb[0].mxu0 %v75
  %v148 = vpop.f32.mrb[0].mxu0
  %v149 = vadd.f32 %v68, %v148
  %v150 = vpop.f32.mrb[0].mxu0
  %151 = vdwg.mxu0
  %v152 = vpack.c.bf16 %v149, %v144
  %153 = vxpose.xlu0.c.b16.start [1/8] %v54, 128
  %154 = vxpose.xlu0.c.b16.cont [2/8] 0, 128
  %155 = vxpose.xlu0.c.b16.cont [3/8] 0, 128
  %156 = vxpose.xlu0.c.b16.cont [4/8] 0, 128
  %157 = vxpose.xlu0.c.b16.cont [5/8] 0, 128
  %158 = vxpose.xlu0.c.b16.cont [6/8] 0, 128
  %159 = vxpose.xlu0.c.b16.cont [7/8] 0, 128
  %160 = vxpose.xlu0.c.b16.end [8/8] 0, 128
  %v161 = vpop.trf.xlu0
  %v162 = vpop.trf.xlu0
  %v163 = vpop.trf.xlu0
  %v164 = vpop.trf.xlu0
  %v165 = vpop.trf.xlu0
  %v166 = vpop.trf.xlu0
  %v167 = vpop.trf.xlu0
  %v168 = vpop.trf.xlu0
  %vm169 = vcmask 130048
  %v171 = vsel %vm169, %v161, 0
  %173 = vmatprep.subr.bf16.mxu0 0
  %174 = vmatpush1.bf16.msra.mxu0 %v152
  %175 = vmatprep.subr.bf16.mxu0 0
  %176 = vmatpush1.bf16.msra.mxu0 0
  %177 = vmatprep.subr.bf16.mxu0 0
  %178 = vmatpush1.bf16.msra.mxu0 0
  %179 = vmatprep.subr.bf16.mxu0 0
  %180 = vmatpush1.bf16.msra.mxu0 0
  %181 = vmatprep.subr.bf16.mxu0 0
  %182 = vmatpush1.bf16.msra.mxu0 0
  %183 = vmatprep.subr.bf16.mxu0 0
  %184 = vmatpush1.bf16.msra.mxu0 0
  %185 = vmatprep.subr.bf16.mxu0 0
  %186 = vmatpush1.bf16.msra.mxu0 0
  %187 = vmatprep.subr.bf16.mxu0 0
  %188 = vmatpush1.bf16.msra.mxu0 0
  %189 = vmatprep.subr.bf16.mxu0 0
  %190 = vmatpush1.bf16.msra.mxu0 0
  %191 = vmatprep.subr.bf16.mxu0 0
  %192 = vmatpush1.bf16.msra.mxu0 0
  %193 = vmatprep.subr.bf16.mxu0 0
  %194 = vmatpush1.bf16.msra.mxu0 0
  %195 = vmatprep.subr.bf16.mxu0 0
  %196 = vmatpush1.bf16.msra.mxu0 0
  %197 = vmatprep.subr.bf16.mxu0 0
  %198 = vmatpush1.bf16.msra.mxu0 0
  %199 = vmatprep.subr.bf16.mxu0 0
  %200 = vmatpush1.bf16.msra.mxu0 0
  %201 = vmatprep.subr.bf16.mxu0 0
  %202 = vmatpush1.bf16.msra.mxu0 0
  %203 = vmatprep.subr.bf16.mxu0 0
  %204 = vmatpush1.bf16.msra.mxu0 0
  %205 = vmatprep.mubr.bf16.mxu0 0
  %206 = vmatmul.mubr.bf16.gmra.mrb[0].mxu0 %v171
  %v207 = vpop.f32.mrb[0].mxu0
  %v208 = vadd.f32 0.0, %v207
  %v209 = vpop.f32.mrb[0].mxu0
  %v210 = vpop.f32.mrb[0].mxu0
  %v211 = vadd.f32 0.0, %v210
  %v212 = vpop.f32.mrb[0].mxu0
  %213 = vdwg.mxu0
  %v214 = vpack.c.bf16 %v211, %v208
  %v216 = vsel %vm169, %v54, 0
  %218 = vmatprep.subr.bf16.mxu0 0
  %219 = vmatpush1.bf16.msra.mxu0 %v214
  %220 = vmatprep.subr.bf16.mxu0 0
  %221 = vmatpush1.bf16.msra.mxu0 0
  %222 = vmatprep.subr.bf16.mxu0 0
  %223 = vmatpush1.bf16.msra.mxu0 0
  %224 = vmatprep.subr.bf16.mxu0 0
  %225 = vmatpush1.bf16.msra.mxu0 0
  %226 = vmatprep.subr.bf16.mxu0 0
  %227 = vmatpush1.bf16.msra.mxu0 0
  %228 = vmatprep.subr.bf16.mxu0 0
  %229 = vmatpush1.bf16.msra.mxu0 0
  %230 = vmatprep.subr.bf16.mxu0 0
  %231 = vmatpush1.bf16.msra.mxu0 0
  %232 = vmatprep.subr.bf16.mxu0 0
  %233 = vmatpush1.bf16.msra.mxu0 0
  %234 = vmatprep.subr.bf16.mxu0 0
  %235 = vmatpush1.bf16.msra.mxu0 0
  %236 = vmatprep.subr.bf16.mxu0 0
  %237 = vmatpush1.bf16.msra.mxu0 0
  %238 = vmatprep.subr.bf16.mxu0 0
  %239 = vmatpush1.bf16.msra.mxu0 0
  %240 = vmatprep.subr.bf16.mxu0 0
  %241 = vmatpush1.bf16.msra.mxu0 0
  %242 = vmatprep.subr.bf16.mxu0 0
  %243 = vmatpush1.bf16.msra.mxu0 0
  %244 = vmatprep.subr.bf16.mxu0 0
  %245 = vmatpush1.bf16.msra.mxu0 0
  %246 = vmatprep.subr.bf16.mxu0 0
  %247 = vmatpush1.bf16.msra.mxu0 0
  %248 = vmatprep.subr.bf16.mxu0 0
  %249 = vmatpush1.bf16.msra.mxu0 0
  %250 = vmatprep.mubr.bf16.mxu0 0
  %251 = vmatmul.mubr.bf16.gmra.mrb[0].mxu0 %v216
  %v252 = vpop.f32.mrb[0].mxu0
  %v253 = vadd.f32 0.0, %v252
  %v254 = vpop.f32.mrb[0].mxu0
  %v255 = vpop.f32.mrb[0].mxu0
  %v256 = vadd.f32 0.0, %v255
  %v257 = vpop.f32.mrb[0].mxu0
  %258 = vdwg.mxu0
  %v259 = vmax.f32 %v253, 0.0
  %v260 = vmax.f32 %v256, 0.0
  %v262 = vlaneseq
  %v263 = vshrl.u32 %v262, 7
  %v264 = vsub.s32 0, %v263
  %v265 = vrot.slane %v63, %v264
  %vm267 = vcmask 261120
  %v269 = vsel %vm267, %v259, 0
  %v272 = vsel %vm267, %v260, 0
  %274 = vmatprep.subr.mxu0 0.0
  %275 = vmatpush1.msra.mxu0 %v59
  %276 = vmatprep.subr.mxu0 0.0
  %277 = vmatpush1.msra.mxu0 %v60
  %278 = vmatprep.subr.mxu0 0.0
  %279 = vmatpush1.msra.mxu0 %v61
  %280 = vmatprep.subr.mxu0 0.0
  %281 = vmatpush1.msra.mxu0 %v62
  %282 = vmatprep.subr.mxu0 0.0
  %283 = vmatpush1.msra.mxu0 0.0
  %284 = vmatprep.subr.mxu0 0.0
  %285 = vmatpush1.msra.mxu0 0.0
  %286 = vmatprep.subr.mxu0 0.0
  %287 = vmatpush1.msra.mxu0 0.0
  %288 = vmatprep.subr.mxu0 0.0
  %289 = vmatpush1.msra.mxu0 0.0
  %290 = vmatprep.subr.mxu0 0.0
  %291 = vmatpush1.msra.mxu0 0.0
  %292 = vmatprep.subr.mxu0 0.0
  %293 = vmatpush1.msra.mxu0 0.0
  %294 = vmatprep.subr.mxu0 0.0
  %295 = vmatpush1.msra.mxu0 0.0
  %296 = vmatprep.subr.mxu0 0.0
  %297 = vmatpush1.msra.mxu0 0.0
  %298 = vmatprep.subr.mxu0 0.0
  %299 = vmatpush1.msra.mxu0 0.0
  %300 = vmatprep.subr.mxu0 0.0
  %301 = vmatpush1.msra.mxu0 0.0
  %302 = vmatprep.subr.mxu0 0.0
  %303 = vmatpush1.msra.mxu0 0.0
  %304 = vmatprep.subr.mxu0 0.0
  %305 = vmatpush1.msra.mxu0 0.0
  %306 = vmatprep.subr.mxu0 0.0
  %307 = vmatpush1.msra.mxu0 0.0
  %308 = vmatprep.subr.mxu0 0.0
  %309 = vmatpush1.msra.mxu0 0.0
  %310 = vmatprep.subr.mxu0 0.0
  %311 = vmatpush1.msra.mxu0 0.0
  %312 = vmatprep.subr.mxu0 0.0
  %313 = vmatpush1.msra.mxu0 0.0
  %314 = vmatprep.subr.mxu0 0.0
  %315 = vmatpush1.msra.mxu0 0.0
  %316 = vmatprep.subr.mxu0 0.0
  %317 = vmatpush1.msra.mxu0 0.0
  %318 = vmatprep.subr.mxu0 0.0
  %319 = vmatpush1.msra.mxu0 0.0
  %320 = vmatprep.subr.mxu0 0.0
  %321 = vmatpush1.msra.mxu0 0.0
  %322 = vmatprep.subr.mxu0 0.0
  %323 = vmatpush1.msra.mxu0 0.0
  %324 = vmatprep.subr.mxu0 0.0
  %325 = vmatpush1.msra.mxu0 0.0
  %326 = vmatprep.subr.mxu0 0.0
  %327 = vmatpush1.msra.mxu0 0.0
  %328 = vmatprep.subr.mxu0 0.0
  %329 = vmatpush1.msra.mxu0 0.0
  %330 = vmatprep.subr.mxu0 0.0
  %331 = vmatpush1.msra.mxu0 0.0
  %332 = vmatprep.subr.mxu0 0.0
  %333 = vmatpush1.msra.mxu0 0.0
  %334 = vmatprep.subr.mxu0 0.0
  %335 = vmatpush1.msra.mxu0 0.0
  %336 = vmatprep.subr.mxu0 0.0
  %337 = vmatpush1.msra.mxu0 0.0
  %338 = vmatprep.mubr.f32.mxu0 0.0
  %339 = vmatmul.mubr.f32.gmra.mrb[0].mxu0 %v269
  %v340 = vpop.f32.mrb[0].mxu0
  %v341 = vadd.f32 %v265, %v340
  %v342 = vpop.f32.mrb[0].mxu0
  %343 = vmatprep.mubr.f32.mxu0 0.0
  %344 = vmatmul.mubr.f32.gmra.mrb[0].mxu0 %v272
  %v345 = vpop.f32.mrb[0].mxu0
  %v346 = vadd.f32 %v265, %v345
  %v347 = vpop.f32.mrb[0].mxu0
  %348 = vdwg.mxu0
  %v349 = vmax.f32 %v341, 0.0
  %v350 = vmax.f32 %v346, 0.0
  %v351 = vld [vmem:[%s6] sm:$0xff]
  %v352 = vld [vmem:[%s6 + $0x8] sm:$0xff]
  %v353 = vld [vmem:[%s7] sm:$0x1]
  %v354 = vld [vmem:[%s8] sm:$0xff]
  %v355 = vld [vmem:[%s8 + $0x8] sm:$0xff]
  %v356 = vld [vmem:[%s8 + $0x10] sm:$0xff]
  %v357 = vld [vmem:[%s8 + $0x18] sm:$0xff]
  %v358 = vld [vmem:[%s9] sm:$0x1]
  %v360 = vlaneseq
  %v361 = vshrl.u32 %v360, 7
  %v362 = vsub.s32 0, %v361
  %v363 = vrot.slane %v353, %v362
  %v366 = vsel %vm169, %v349, 0
  %v369 = vsel %vm169, %v350, 0
  %371 = vmatprep.subr.mxu0 0.0
  %372 = vmatpush1.msra.mxu0 %v351
  %373 = vmatprep.subr.mxu0 0.0
  %374 = vmatpush1.msra.mxu0 %v352
  %375 = vmatprep.subr.mxu0 0.0
  %376 = vmatpush1.msra.mxu0 0.0
  %377 = vmatprep.subr.mxu0 0.0
  %378 = vmatpush1.msra.mxu0 0.0
  %379 = vmatprep.subr.mxu0 0.0
  %380 = vmatpush1.msra.mxu0 0.0
  %381 = vmatprep.subr.mxu0 0.0
  %382 = vmatpush1.msra.mxu0 0.0
  %383 = vmatprep.subr.mxu0 0.0
  %384 = vmatpush1.msra.mxu0 0.0
  %385 = vmatprep.subr.mxu0 0.0
  %386 = vmatpush1.msra.mxu0 0.0
  %387 = vmatprep.subr.mxu0 0.0
  %388 = vmatpush1.msra.mxu0 0.0
  %389 = vmatprep.subr.mxu0 0.0
  %390 = vmatpush1.msra.mxu0 0.0
  %391 = vmatprep.subr.mxu0 0.0
  %392 = vmatpush1.msra.mxu0 0.0
  %393 = vmatprep.subr.mxu0 0.0
  %394 = vmatpush1.msra.mxu0 0.0
  %395 = vmatprep.subr.mxu0 0.0
  %396 = vmatpush1.msra.mxu0 0.0
  %397 = vmatprep.subr.mxu0 0.0
  %398 = vmatpush1.msra.mxu0 0.0
  %399 = vmatprep.subr.mxu0 0.0
  %400 = vmatpush1.msra.mxu0 0.0
  %401 = vmatprep.subr.mxu0 0.0
  %402 = vmatpush1.msra.mxu0 0.0
  %403 = vmatprep.subr.mxu0 0.0
  %404 = vmatpush1.msra.mxu0 0.0
  %405 = vmatprep.subr.mxu0 0.0
  %406 = vmatpush1.msra.mxu0 0.0
  %407 = vmatprep.subr.mxu0 0.0
  %408 = vmatpush1.msra.mxu0 0.0
  %409 = vmatprep.subr.mxu0 0.0
  %410 = vmatpush1.msra.mxu0 0.0
  %411 = vmatprep.subr.mxu0 0.0
  %412 = vmatpush1.msra.mxu0 0.0
  %413 = vmatprep.subr.mxu0 0.0
  %414 = vmatpush1.msra.mxu0 0.0
  %415 = vmatprep.subr.mxu0 0.0
  %416 = vmatpush1.msra.mxu0 0.0
  %417 = vmatprep.subr.mxu0 0.0
  %418 = vmatpush1.msra.mxu0 0.0
  %419 = vmatprep.subr.mxu0 0.0
  %420 = vmatpush1.msra.mxu0 0.0
  %421 = vmatprep.subr.mxu0 0.0
  %422 = vmatpush1.msra.mxu0 0.0
  %423 = vmatprep.subr.mxu0 0.0
  %424 = vmatpush1.msra.mxu0 0.0
  %425 = vmatprep.subr.mxu0 0.0
  %426 = vmatpush1.msra.mxu0 0.0
  %427 = vmatprep.subr.mxu0 0.0
  %428 = vmatpush1.msra.mxu0 0.0
  %429 = vmatprep.subr.mxu0 0.0
  %430 = vmatpush1.msra.mxu0 0.0
  %431 = vmatprep.subr.mxu0 0.0
  %432 = vmatpush1.msra.mxu0 0.0
  %433 = vmatprep.subr.mxu0 0.0
  %434 = vmatpush1.msra.mxu0 0.0
  %435 = vmatprep.mubr.f32.mxu0 0.0
  %436 = vmatmul.mubr.f32.gmra.mrb[0].mxu0 %v366
  %v437 = vpop.f32.mrb[0].mxu0
  %v438 = vadd.f32 %v363, %v437
  %v439 = vpop.f32.mrb[0].mxu0
  %440 = vmatprep.mubr.f32.mxu0 0.0
  %441 = vmatmul.mubr.f32.gmra.mrb[0].mxu0 %v369
  %v442 = vpop.f32.mrb[0].mxu0
  %v443 = vadd.f32 %v363, %v442
  %v444 = vpop.f32.mrb[0].mxu0
  %445 = vdwg.mxu0
  %v446 = vpack.c.bf16 %v443, %v438
  %447 = vmatprep.subr.bf16.mxu0 0
  %448 = vmatpush1.bf16.msra.mxu0 %v446
  %449 = vmatprep.subr.bf16.mxu0 0
  %450 = vmatpush1.bf16.msra.mxu0 0
  %451 = vmatprep.subr.bf16.mxu0 0
  %452 = vmatpush1.bf16.msra.mxu0 0
  %453 = vmatprep.subr.bf16.mxu0 0
  %454 = vmatpush1.bf16.msra.mxu0 0
  %455 = vmatprep.subr.bf16.mxu0 0
  %456 = vmatpush1.bf16.msra.mxu0 0
  %457 = vmatprep.subr.bf16.mxu0 0
  %458 = vmatpush1.bf16.msra.mxu0 0
  %459 = vmatprep.subr.bf16.mxu0 0
  %460 = vmatpush1.bf16.msra.mxu0 0
  %461 = vmatprep.subr.bf16.mxu0 0
  %462 = vmatpush1.bf16.msra.mxu0 0
  %463 = vmatprep.subr.bf16.mxu0 0
  %464 = vmatpush1.bf16.msra.mxu0 0
  %465 = vmatprep.subr.bf16.mxu0 0
  %466 = vmatpush1.bf16.msra.mxu0 0
  %467 = vmatprep.subr.bf16.mxu0 0
  %468 = vmatpush1.bf16.msra.mxu0 0
  %469 = vmatprep.subr.bf16.mxu0 0
  %470 = vmatpush1.bf16.msra.mxu0 0
  %471 = vmatprep.subr.bf16.mxu0 0
  %472 = vmatpush1.bf16.msra.mxu0 0
  %473 = vmatprep.subr.bf16.mxu0 0
  %474 = vmatpush1.bf16.msra.mxu0 0
  %475 = vmatprep.subr.bf16.mxu0 0
  %476 = vmatpush1.bf16.msra.mxu0 0
  %477 = vmatprep.subr.bf16.mxu0 0
  %478 = vmatpush1.bf16.msra.mxu0 0
  %479 = vmatprep.mubr.bf16.mxu0 0
  %480 = vmatmul.mubr.bf16.gmra.mrb[0].mxu0 %v171
  %v481 = vpop.f32.mrb[0].mxu0
  %v482 = vadd.f32 0.0, %v481
  %v483 = vpop.f32.mrb[0].mxu0
  %v484 = vpop.f32.mrb[0].mxu0
  %v485 = vadd.f32 0.0, %v484
  %v486 = vpop.f32.mrb[0].mxu0
  %487 = vdwg.mxu0
  %v488 = vpack.c.bf16 %v485, %v482
  %489 = vmatprep.subr.bf16.mxu0 0
  %490 = vmatpush1.bf16.msra.mxu0 %v488
  %491 = vmatprep.subr.bf16.mxu0 0
  %492 = vmatpush1.bf16.msra.mxu0 0
  %493 = vmatprep.subr.bf16.mxu0 0
  %494 = vmatpush1.bf16.msra.mxu0 0
  %495 = vmatprep.subr.bf16.mxu0 0
  %496 = vmatpush1.bf16.msra.mxu0 0
  %497 = vmatprep.subr.bf16.mxu0 0
  %498 = vmatpush1.bf16.msra.mxu0 0
  %499 = vmatprep.subr.bf16.mxu0 0
  %500 = vmatpush1.bf16.msra.mxu0 0
  %501 = vmatprep.subr.bf16.mxu0 0
  %502 = vmatpush1.bf16.msra.mxu0 0
  %503 = vmatprep.subr.bf16.mxu0 0
  %504 = vmatpush1.bf16.msra.mxu0 0
  %505 = vmatprep.subr.bf16.mxu0 0
  %506 = vmatpush1.bf16.msra.mxu0 0
  %507 = vmatprep.subr.bf16.mxu0 0
  %508 = vmatpush1.bf16.msra.mxu0 0
  %509 = vmatprep.subr.bf16.mxu0 0
  %510 = vmatpush1.bf16.msra.mxu0 0
  %511 = vmatprep.subr.bf16.mxu0 0
  %512 = vmatpush1.bf16.msra.mxu0 0
  %513 = vmatprep.subr.bf16.mxu0 0
  %514 = vmatpush1.bf16.msra.mxu0 0
  %515 = vmatprep.subr.bf16.mxu0 0
  %516 = vmatpush1.bf16.msra.mxu0 0
  %517 = vmatprep.subr.bf16.mxu0 0
  %518 = vmatpush1.bf16.msra.mxu0 0
  %519 = vmatprep.subr.bf16.mxu0 0
  %520 = vmatpush1.bf16.msra.mxu0 0
  %521 = vmatprep.mubr.bf16.mxu0 0
  %522 = vmatmul.mubr.bf16.gmra.mrb[0].mxu0 %v216
  %v523 = vpop.f32.mrb[0].mxu0
  %v524 = vadd.f32 0.0, %v523
  %v525 = vpop.f32.mrb[0].mxu0
  %v526 = vpop.f32.mrb[0].mxu0
  %v527 = vadd.f32 0.0, %v526
  %v528 = vpop.f32.mrb[0].mxu0
  %529 = vdwg.mxu0
  %v530 = vmax.f32 %v524, 0.0
  %v531 = vmax.f32 %v527, 0.0
  %v533 = vlaneseq
  %v534 = vshrl.u32 %v533, 7
  %v535 = vsub.s32 0, %v534
  %v536 = vrot.slane %v358, %v535
  %v539 = vsel %vm267, %v530, 0
  %v542 = vsel %vm267, %v531, 0
  %544 = vmatprep.subr.mxu0 0.0
  %545 = vmatpush1.msra.mxu0 %v354
  %546 = vmatprep.subr.mxu0 0.0
  %547 = vmatpush1.msra.mxu0 %v355
  %548 = vmatprep.subr.mxu0 0.0
  %549 = vmatpush1.msra.mxu0 %v356
  %550 = vmatprep.subr.mxu0 0.0
  %551 = vmatpush1.msra.mxu0 %v357
  %552 = vmatprep.subr.mxu0 0.0
  %553 = vmatpush1.msra.mxu0 0.0
  %554 = vmatprep.subr.mxu0 0.0
  %555 = vmatpush1.msra.mxu0 0.0
  %556 = vmatprep.subr.mxu0 0.0
  %557 = vmatpush1.msra.mxu0 0.0
  %558 = vmatprep.subr.mxu0 0.0
  %559 = vmatpush1.msra.mxu0 0.0
  %560 = vmatprep.subr.mxu0 0.0
  %561 = vmatpush1.msra.mxu0 0.0
  %562 = vmatprep.subr.mxu0 0.0
  %563 = vmatpush1.msra.mxu0 0.0
  %564 = vmatprep.subr.mxu0 0.0
  %565 = vmatpush1.msra.mxu0 0.0
  %566 = vmatprep.subr.mxu0 0.0
  %567 = vmatpush1.msra.mxu0 0.0
  %568 = vmatprep.subr.mxu0 0.0
  %569 = vmatpush1.msra.mxu0 0.0
  %570 = vmatprep.subr.mxu0 0.0
  %571 = vmatpush1.msra.mxu0 0.0
  %572 = vmatprep.subr.mxu0 0.0
  %573 = vmatpush1.msra.mxu0 0.0
  %574 = vmatprep.subr.mxu0 0.0
  %575 = vmatpush1.msra.mxu0 0.0
  %576 = vmatprep.subr.mxu0 0.0
  %577 = vmatpush1.msra.mxu0 0.0
  %578 = vmatprep.subr.mxu0 0.0
  %579 = vmatpush1.msra.mxu0 0.0
  %580 = vmatprep.subr.mxu0 0.0
  %581 = vmatpush1.msra.mxu0 0.0
  %582 = vmatprep.subr.mxu0 0.0
  %583 = vmatpush1.msra.mxu0 0.0
  %584 = vmatprep.subr.mxu0 0.0
  %585 = vmatpush1.msra.mxu0 0.0
  %586 = vmatprep.subr.mxu0 0.0
  %587 = vmatpush1.msra.mxu0 0.0
  %588 = vmatprep.subr.mxu0 0.0
  %589 = vmatpush1.msra.mxu0 0.0
  %590 = vmatprep.subr.mxu0 0.0
  %591 = vmatpush1.msra.mxu0 0.0
  %592 = vmatprep.subr.mxu0 0.0
  %593 = vmatpush1.msra.mxu0 0.0
  %594 = vmatprep.subr.mxu0 0.0
  %595 = vmatpush1.msra.mxu0 0.0
  %596 = vmatprep.subr.mxu0 0.0
  %597 = vmatpush1.msra.mxu0 0.0
  %598 = vmatprep.subr.mxu0 0.0
  %599 = vmatpush1.msra.mxu0 0.0
  %600 = vmatprep.subr.mxu0 0.0
  %601 = vmatpush1.msra.mxu0 0.0
  %602 = vmatprep.subr.mxu0 0.0
  %603 = vmatpush1.msra.mxu0 0.0
  %604 = vmatprep.subr.mxu0 0.0
  %605 = vmatpush1.msra.mxu0 0.0
  %606 = vmatprep.subr.mxu0 0.0
  %607 = vmatpush1.msra.mxu0 0.0
  %608 = vmatprep.mubr.f32.mxu0 0.0
  %609 = vmatmul.mubr.f32.gmra.mrb[0].mxu0 %v539
  %v610 = vpop.f32.mrb[0].mxu0
  %v611 = vadd.f32 %v536, %v610
  %v612 = vpop.f32.mrb[0].mxu0
  %613 = vmatprep.mubr.f32.mxu0 0.0
  %614 = vmatmul.mubr.f32.gmra.mrb[0].mxu0 %v542
  %v615 = vpop.f32.mrb[0].mxu0
  %v616 = vadd.f32 %v536, %v615
  %v617 = vpop.f32.mrb[0].mxu0
  %618 = vdwg.mxu0
  %619 = vst.msk [vmem:[%s14] sm:$0xff] %vm169, %v611
  %620 = vst.msk [vmem:[%s14 + $0x8] sm:$0xff] %vm169, %v616
  %v621 = vld [vmem:[%s10] sm:$0xff]
  %v622 = vld [vmem:[%s10 + $0x8] sm:$0xff]
  %v623 = vld [vmem:[%s11] sm:$0x1]
  %v624 = vld [vmem:[%s12] sm:$0xff]
  %v625 = vld [vmem:[%s12 + $0x8] sm:$0xff]
  %v626 = vld [vmem:[%s12 + $0x10] sm:$0xff]
  %v627 = vld [vmem:[%s12 + $0x18] sm:$0xff]
  %v628 = vld [vmem:[#allocation2] sm:$0x1]
  %v630 = vlaneseq
  %v631 = vshrl.u32 %v630, 7
  %v632 = vsub.s32 0, %v631
  %v633 = vrot.slane %v623, %v632
  %v636 = vsel %vm169, %v611, 0
  %v639 = vsel %vm169, %v616, 0
  %641 = vmatprep.subr.mxu0 0.0
  %642 = vmatpush1.msra.mxu0 %v621
  %643 = vmatprep.subr.mxu0 0.0
  %644 = vmatpush1.msra.mxu0 %v622
  %645 = vmatprep.subr.mxu0 0.0
  %646 = vmatpush1.msra.mxu0 0.0
  %647 = vmatprep.subr.mxu0 0.0
  %648 = vmatpush1.msra.mxu0 0.0
  %649 = vmatprep.subr.mxu0 0.0
  %650 = vmatpush1.msra.mxu0 0.0
  %651 = vmatprep.subr.mxu0 0.0
  %652 = vmatpush1.msra.mxu0 0.0
  %653 = vmatprep.subr.mxu0 0.0
  %654 = vmatpush1.msra.mxu0 0.0
  %655 = vmatprep.subr.mxu0 0.0
  %656 = vmatpush1.msra.mxu0 0.0
  %657 = vmatprep.subr.mxu0 0.0
  %658 = vmatpush1.msra.mxu0 0.0
  %659 = vmatprep.subr.mxu0 0.0
  %660 = vmatpush1.msra.mxu0 0.0
  %661 = vmatprep.subr.mxu0 0.0
  %662 = vmatpush1.msra.mxu0 0.0
  %663 = vmatprep.subr.mxu0 0.0
  %664 = vmatpush1.msra.mxu0 0.0
  %665 = vmatprep.subr.mxu0 0.0
  %666 = vmatpush1.msra.mxu0 0.0
  %667 = vmatprep.subr.mxu0 0.0
  %668 = vmatpush1.msra.mxu0 0.0
  %669 = vmatprep.subr.mxu0 0.0
  %670 = vmatpush1.msra.mxu0 0.0
  %671 = vmatprep.subr.mxu0 0.0
  %672 = vmatpush1.msra.mxu0 0.0
  %673 = vmatprep.subr.mxu0 0.0
  %674 = vmatpush1.msra.mxu0 0.0
  %675 = vmatprep.subr.mxu0 0.0
  %676 = vmatpush1.msra.mxu0 0.0
  %677 = vmatprep.subr.mxu0 0.0
  %678 = vmatpush1.msra.mxu0 0.0
  %679 = vmatprep.subr.mxu0 0.0
  %680 = vmatpush1.msra.mxu0 0.0
  %681 = vmatprep.subr.mxu0 0.0
  %682 = vmatpush1.msra.mxu0 0.0
  %683 = vmatprep.subr.mxu0 0.0
  %684 = vmatpush1.msra.mxu0 0.0
  %685 = vmatprep.subr.mxu0 0.0
  %686 = vmatpush1.msra.mxu0 0.0
  %687 = vmatprep.subr.mxu0 0.0
  %688 = vmatpush1.msra.mxu0 0.0
  %689 = vmatprep.subr.mxu0 0.0
  %690 = vmatpush1.msra.mxu0 0.0
  %691 = vmatprep.subr.mxu0 0.0
  %692 = vmatpush1.msra.mxu0 0.0
  %693 = vmatprep.subr.mxu0 0.0
  %694 = vmatpush1.msra.mxu0 0.0
  %695 = vmatprep.subr.mxu0 0.0
  %696 = vmatpush1.msra.mxu0 0.0
  %697 = vmatprep.subr.mxu0 0.0
  %698 = vmatpush1.msra.mxu0 0.0
  %699 = vmatprep.subr.mxu0 0.0
  %700 = vmatpush1.msra.mxu0 0.0
  %701 = vmatprep.subr.mxu0 0.0
  %702 = vmatpush1.msra.mxu0 0.0
  %703 = vmatprep.subr.mxu0 0.0
  %704 = vmatpush1.msra.mxu0 0.0
  %705 = vmatprep.mubr.f32.mxu0 0.0
  %706 = vmatmul.mubr.f32.gmra.mrb[0].mxu0 %v636
  %v707 = vpop.f32.mrb[0].mxu0
  %v708 = vadd.f32 %v633, %v707
  %v709 = vpop.f32.mrb[0].mxu0
  %710 = vmatprep.mubr.f32.mxu0 0.0
  %711 = vmatmul.mubr.f32.gmra.mrb[0].mxu0 %v639
  %v712 = vpop.f32.mrb[0].mxu0
  %v713 = vadd.f32 %v633, %v712
  %v714 = vpop.f32.mrb[0].mxu0
  %715 = vdwg.mxu0
  %v716 = vpack.c.bf16 %v713, %v708
  %717 = vmatprep.subr.bf16.mxu0 0
  %718 = vmatpush1.bf16.msra.mxu0 %v716
  %719 = vmatprep.subr.bf16.mxu0 0
  %720 = vmatpush1.bf16.msra.mxu0 0
  %721 = vmatprep.subr.bf16.mxu0 0
  %722 = vmatpush1.bf16.msra.mxu0 0
  %723 = vmatprep.subr.bf16.mxu0 0
  %724 = vmatpush1.bf16.msra.mxu0 0
  %725 = vmatprep.subr.bf16.mxu0 0
  %726 = vmatpush1.bf16.msra.mxu0 0
  %727 = vmatprep.subr.bf16.mxu0 0
  %728 = vmatpush1.bf16.msra.mxu0 0
  %729 = vmatprep.subr.bf16.mxu0 0
  %730 = vmatpush1.bf16.msra.mxu0 0
  %731 = vmatprep.subr.bf16.mxu0 0
  %732 = vmatpush1.bf16.msra.mxu0 0
  %733 = vmatprep.subr.bf16.mxu0 0
  %734 = vmatpush1.bf16.msra.mxu0 0
  %735 = vmatprep.subr.bf16.mxu0 0
  %736 = vmatpush1.bf16.msra.mxu0 0
  %737 = vmatprep.subr.bf16.mxu0 0
  %738 = vmatpush1.bf16.msra.mxu0 0
  %739 = vmatprep.subr.bf16.mxu0 0
  %740 = vmatpush1.bf16.msra.mxu0 0
  %741 = vmatprep.subr.bf16.mxu0 0
  %742 = vmatpush1.bf16.msra.mxu0 0
  %743 = vmatprep.subr.bf16.mxu0 0
  %744 = vmatpush1.bf16.msra.mxu0 0
  %745 = vmatprep.subr.bf16.mxu0 0
  %746 = vmatpush1.bf16.msra.mxu0 0
  %747 = vmatprep.subr.bf16.mxu0 0
  %748 = vmatpush1.bf16.msra.mxu0 0
  %749 = vmatprep.mubr.bf16.mxu0 0
  %750 = vmatmul.mubr.bf16.gmra.mrb[0].mxu0 %v171
  %v751 = vpop.f32.mrb[0].mxu0
  %v752 = vadd.f32 0.0, %v751
  %v753 = vpop.f32.mrb[0].mxu0
  %v754 = vpop.f32.mrb[0].mxu0
  %v755 = vadd.f32 0.0, %v754
  %v756 = vpop.f32.mrb[0].mxu0
  %757 = vdwg.mxu0
  %v758 = vpack.c.bf16 %v755, %v752
  %759 = vmatprep.subr.bf16.mxu0 0
  %760 = vmatpush1.bf16.msra.mxu0 %v758
  %761 = vmatprep.subr.bf16.mxu0 0
  %762 = vmatpush1.bf16.msra.mxu0 0
  %763 = vmatprep.subr.bf16.mxu0 0
  %764 = vmatpush1.bf16.msra.mxu0 0
  %765 = vmatprep.subr.bf16.mxu0 0
  %766 = vmatpush1.bf16.msra.mxu0 0
  %767 = vmatprep.subr.bf16.mxu0 0
  %768 = vmatpush1.bf16.msra.mxu0 0
  %769 = vmatprep.subr.bf16.mxu0 0
  %770 = vmatpush1.bf16.msra.mxu0 0
  %771 = vmatprep.subr.bf16.mxu0 0
  %772 = vmatpush1.bf16.msra.mxu0 0
  %773 = vmatprep.subr.bf16.mxu0 0
  %774 = vmatpush1.bf16.msra.mxu0 0
  %775 = vmatprep.subr.bf16.mxu0 0
  %776 = vmatpush1.bf16.msra.mxu0 0
  %777 = vmatprep.subr.bf16.mxu0 0
  %778 = vmatpush1.bf16.msra.mxu0 0
  %779 = vmatprep.subr.bf16.mxu0 0
  %780 = vmatpush1.bf16.msra.mxu0 0
  %781 = vmatprep.subr.bf16.mxu0 0
  %782 = vmatpush1.bf16.msra.mxu0 0
  %783 = vmatprep.subr.bf16.mxu0 0
  %784 = vmatpush1.bf16.msra.mxu0 0
  %785 = vmatprep.subr.bf16.mxu0 0
  %786 = vmatpush1.bf16.msra.mxu0 0
  %787 = vmatprep.subr.bf16.mxu0 0
  %788 = vmatpush1.bf16.msra.mxu0 0
  %789 = vmatprep.subr.bf16.mxu0 0
  %790 = vmatpush1.bf16.msra.mxu0 0
  %791 = vmatprep.mubr.bf16.mxu0 0
  %792 = vmatmul.mubr.bf16.gmra.mrb[0].mxu0 %v216
  %v793 = vpop.f32.mrb[0].mxu0
  %v794 = vadd.f32 0.0, %v793
  %v795 = vpop.f32.mrb[0].mxu0
  %v796 = vpop.f32.mrb[0].mxu0
  %v797 = vadd.f32 0.0, %v796
  %v798 = vpop.f32.mrb[0].mxu0
  %799 = vdwg.mxu0
  %v800 = vmax.f32 %v794, 0.0
  %v801 = vmax.f32 %v797, 0.0
  %v803 = vlaneseq
  %v804 = vshrl.u32 %v803, 7
  %v805 = vsub.s32 0, %v804
  %v806 = vrot.slane %v628, %v805
  %v809 = vsel %vm267, %v800, 0
  %v812 = vsel %vm267, %v801, 0
  %814 = vmatprep.subr.mxu0 0.0
  %815 = vmatpush1.msra.mxu0 %v624
  %816 = vmatprep.subr.mxu0 0.0
  %817 = vmatpush1.msra.mxu0 %v625
  %818 = vmatprep.subr.mxu0 0.0
  %819 = vmatpush1.msra.mxu0 %v626
  %820 = vmatprep.subr.mxu0 0.0
  %821 = vmatpush1.msra.mxu0 %v627
  %822 = vmatprep.subr.mxu0 0.0
  %823 = vmatpush1.msra.mxu0 0.0
  %824 = vmatprep.subr.mxu0 0.0
  %825 = vmatpush1.msra.mxu0 0.0
  %826 = vmatprep.subr.mxu0 0.0
  %827 = vmatpush1.msra.mxu0 0.0
  %828 = vmatprep.subr.mxu0 0.0
  %829 = vmatpush1.msra.mxu0 0.0
  %830 = vmatprep.subr.mxu0 0.0
  %831 = vmatpush1.msra.mxu0 0.0
  %832 = vmatprep.subr.mxu0 0.0
  %833 = vmatpush1.msra.mxu0 0.0
  %834 = vmatprep.subr.mxu0 0.0
  %835 = vmatpush1.msra.mxu0 0.0
  %836 = vmatprep.subr.mxu0 0.0
  %837 = vmatpush1.msra.mxu0 0.0
  %838 = vmatprep.subr.mxu0 0.0
  %839 = vmatpush1.msra.mxu0 0.0
  %840 = vmatprep.subr.mxu0 0.0
  %841 = vmatpush1.msra.mxu0 0.0
  %842 = vmatprep.subr.mxu0 0.0
  %843 = vmatpush1.msra.mxu0 0.0
  %844 = vmatprep.subr.mxu0 0.0
  %845 = vmatpush1.msra.mxu0 0.0
  %846 = vmatprep.subr.mxu0 0.0
  %847 = vmatpush1.msra.mxu0 0.0
  %848 = vmatprep.subr.mxu0 0.0
  %849 = vmatpush1.msra.mxu0 0.0
  %850 = vmatprep.subr.mxu0 0.0
  %851 = vmatpush1.msra.mxu0 0.0
  %852 = vmatprep.subr.mxu0 0.0
  %853 = vmatpush1.msra.mxu0 0.0
  %854 = vmatprep.subr.mxu0 0.0
  %855 = vmatpush1.msra.mxu0 0.0
  %856 = vmatprep.subr.mxu0 0.0
  %857 = vmatpush1.msra.mxu0 0.0
  %858 = vmatprep.subr.mxu0 0.0
  %859 = vmatpush1.msra.mxu0 0.0
  %860 = vmatprep.subr.mxu0 0.0
  %861 = vmatpush1.msra.mxu0 0.0
  %862 = vmatprep.subr.mxu0 0.0
  %863 = vmatpush1.msra.mxu0 0.0
  %864 = vmatprep.subr.mxu0 0.0
  %865 = vmatpush1.msra.mxu0 0.0
  %866 = vmatprep.subr.mxu0 0.0
  %867 = vmatpush1.msra.mxu0 0.0
  %868 = vmatprep.subr.mxu0 0.0
  %869 = vmatpush1.msra.mxu0 0.0
  %870 = vmatprep.subr.mxu0 0.0
  %871 = vmatpush1.msra.mxu0 0.0
  %872 = vmatprep.subr.mxu0 0.0
  %873 = vmatpush1.msra.mxu0 0.0
  %874 = vmatprep.subr.mxu0 0.0
  %875 = vmatpush1.msra.mxu0 0.0
  %876 = vmatprep.subr.mxu0 0.0
  %877 = vmatpush1.msra.mxu0 0.0
  %878 = vmatprep.mubr.f32.mxu0 0.0
  %879 = vmatmul.mubr.f32.gmra.mrb[0].mxu0 %v809
  %v880 = vpop.f32.mrb[0].mxu0
  %v881 = vadd.f32 %v806, %v880
  %v882 = vpop.f32.mrb[0].mxu0
  %883 = vmatprep.mubr.f32.mxu0 0.0
  %884 = vmatmul.mubr.f32.gmra.mrb[0].mxu0 %v812
  %v885 = vpop.f32.mrb[0].mxu0
  %v886 = vadd.f32 %v806, %v885
  %v887 = vpop.f32.mrb[0].mxu0
  %888 = vdwg.mxu0
  %v889 = vmax.f32 %v881, 0.0
  %v890 = vmax.f32 %v886, 0.0
  %892 = vset.pattern.permute.xlu0 0
  %893 = vperm.xlu0 %892, %v889
  %v894 = vpop.permute.xlu0 %893
  %897 = vset.pattern.permute.xlu0 0
  %898 = vperm.xlu0 %897, %v890
  %v899 = vpop.permute.xlu0 %898
  %901 = vst [vmem:[%s15] sm:$0xff] %v894
  %902 = vst [vmem:[%s15 + $0x8] sm:$0xff] %v899
  // Predicated region
  $region58: #{_lambda_.3} parent=0 // pred_check
    _
  $region59: #{_lambda_.3} parent=0 // pred_check_branch
    %904 = sbr.rel (0) target = $region61
  $region60: #{_lambda_.3} parent=0 // pred_region
    _
  $region61: #{_lambda_.3} parent=0 // pred_fallthru
    _
  // Predicated region
  $region62: #{_lambda_.3} parent=0 // pred_check
    _
  $region63: #{_lambda_.3} parent=0 // pred_check_branch
    %906 = sbr.rel (0) target = $region65
  $region64: #{_lambda_.3} parent=0 // pred_region
    _
  $region65: #{_lambda_.3} parent=0 // pred_fallthru
    _
  // Predicated region
  $region66: #{_lambda_.3} parent=0 // pred_check
    _
  $region67: #{_lambda_.3} parent=0 // pred_check_branch
    %908 = sbr.rel (0) target = $region69
  $region68: #{_lambda_.3} parent=0 // pred_region
    _
  $region69: #{_lambda_.3} parent=0 // pred_fallthru
    _
  // Predicated region
  $region70: #{_lambda_.3} parent=0 // pred_check
    _
  $region71: #{_lambda_.3} parent=0 // pred_check_branch
    %910 = sbr.rel (0) target = $region73
  $region72: #{_lambda_.3} parent=0 // pred_region
    _
  $region73: #{_lambda_.3} parent=0 // pred_fallthru
    _

// kernel: _lambda_.4
$region0: #{_lambda_.4}
  #allocation0 [shape = 'u32[]', space=smem, size = 0x4, offset = 0x4, fixed_abs, tag = 'smem constant byte address 0x4 - core index']
  #allocation1 [shape = 'u32[144,128]{1,0:T(1,128)}', space=vmem, size = 0x12000, scoped, tag = 'internal scratch']
  %s0 = inlined_call_operand.vmem [shape: f32[16,16], index: 0, kind: input, shape index: {}]
  %s1 = inlined_call_operand.vmem [shape: f32[16,4], index: 1, kind: input, shape index: {}]
  %s2 = inlined_call_operand.vmem [shape: f32[16,16], index: 2, kind: input, shape index: {}]
  %s3 = inlined_call_operand.vmem [shape: f32[4,16], index: 3, kind: input, shape index: {}]
  %s4 = inlined_call_operand.vmem [shape: f32[1,16], index: 4, kind: input, shape index: {}]
  %s5 = inlined_call_operand.vmem [shape: f32[16,16], index: 5, kind: input, shape index: {}]
  %s6 = inlined_call_operand.vmem [shape: f32[1,16], index: 6, kind: input, shape index: {}]
  %s7 = inlined_call_operand.vmem [shape: f32[16,16], index: 7, kind: input, shape index: {}]
  %s8 = inlined_call_operand.vmem [shape: f32[16,16], index: 8, kind: output, shape index: {}]
  %s9 = sld [smem:[#allocation0]]
  $region42: #{_lambda_.4} parent=0
    _
  %s11 = ssub.s32 1, %s9
  %s12 = scalar_select 0, %s11, %s9
  // Predicated region
  $region2: #{_lambda_.4} parent=0 // pred_check
    _
  $region3: #{_lambda_.4} parent=0 // pred_check_branch
    %14 = sbr.rel (0) target = $region5
  $region4: #{_lambda_.4} parent=0 // pred_region
    _
  $region5: #{_lambda_.4} parent=0 // pred_fallthru
    _
  // Predicated region
  $region6: #{_lambda_.4} parent=0 // pred_check
    _
  $region7: #{_lambda_.4} parent=0 // pred_check_branch
    %16 = sbr.rel (0) target = $region9
  $region8: #{_lambda_.4} parent=0 // pred_region
    _
  $region9: #{_lambda_.4} parent=0 // pred_fallthru
    _
  // Predicated region
  $region10: #{_lambda_.4} parent=0 // pred_check
    _
  $region11: #{_lambda_.4} parent=0 // pred_check_branch
    %18 = sbr.rel (0) target = $region13
  $region12: #{_lambda_.4} parent=0 // pred_region
    _
  $region13: #{_lambda_.4} parent=0 // pred_fallthru
    _
  // Predicated region
  $region14: #{_lambda_.4} parent=0 // pred_check
    _
  $region15: #{_lambda_.4} parent=0 // pred_check_branch
    %20 = sbr.rel (0) target = $region17
  $region16: #{_lambda_.4} parent=0 // pred_region
    _
  $region17: #{_lambda_.4} parent=0 // pred_fallthru
    _
  // Predicated region
  $region18: #{_lambda_.4} parent=0 // pred_check
    _
  $region19: #{_lambda_.4} parent=0 // pred_check_branch
    %22 = sbr.rel (0) target = $region21
  $region20: #{_lambda_.4} parent=0 // pred_region
    _
  $region21: #{_lambda_.4} parent=0 // pred_fallthru
    _
  // Predicated region
  $region22: #{_lambda_.4} parent=0 // pred_check
    _
  $region23: #{_lambda_.4} parent=0 // pred_check_branch
    %24 = sbr.rel (0) target = $region25
  $region24: #{_lambda_.4} parent=0 // pred_region
    _
  $region25: #{_lambda_.4} parent=0 // pred_fallthru
    _
  // Predicated region
  $region26: #{_lambda_.4} parent=0 // pred_check
    _
  $region27: #{_lambda_.4} parent=0 // pred_check_branch
    %26 = sbr.rel (0) target = $region29
  $region28: #{_lambda_.4} parent=0 // pred_region
    _
  $region29: #{_lambda_.4} parent=0 // pred_fallthru
    _
  // Predicated region
  $region30: #{_lambda_.4} parent=0 // pred_check
    _
  $region31: #{_lambda_.4} parent=0 // pred_check_branch
    %28 = sbr.rel (0) target = $region33
  $region32: #{_lambda_.4} parent=0 // pred_region
    _
  $region33: #{_lambda_.4} parent=0 // pred_fallthru
    _
  %v30 = vld [vmem:[%s0] sm:$0xff]
  %v31 = vld [vmem:[%s0 + $0x8] sm:$0xff]
  %v32 = vld [vmem:[%s1] sm:$0xff]
  %v33 = vld [vmem:[%s1 + $0x8] sm:$0xff]
  %v34 = vld [vmem:[%s2] sm:$0xff]
  %v35 = vld [vmem:[%s2 + $0x8] sm:$0xff]
  %v36 = vld [vmem:[%s3] sm:$0xf]
  %v37 = vld [vmem:[%s4] sm:$0x1]
  %v38 = vld [vmem:[%s5] sm:$0xff]
  %v39 = vld [vmem:[%s5 + $0x8] sm:$0xff]
  %v40 = vld [vmem:[%s6] sm:$0x1]
  %vm41 = vcmask 31744
  %v43 = vsel %vm41, %v32, 0
  %v46 = vsel %vm41, %v33, 0
  %vm48 = vcmask 1043456
  %v50 = vsel %vm48, %v36, 0
  %52 = vmatprep.subr.mxu0 0.0
  %53 = vmatpush1.msra.mxu0 %v50
  %54 = vmatprep.subr.mxu0 0.0
  %55 = vmatpush1.msra.mxu0 0.0
  %56 = vmatprep.subr.mxu0 0.0
  %57 = vmatpush1.msra.mxu0 0.0
  %58 = vmatprep.subr.mxu0 0.0
  %59 = vmatpush1.msra.mxu0 0.0
  %60 = vmatprep.subr.mxu0 0.0
  %61 = vmatpush1.msra.mxu0 0.0
  %62 = vmatprep.subr.mxu0 0.0
  %63 = vmatpush1.msra.mxu0 0.0
  %64 = vmatprep.subr.mxu0 0.0
  %65 = vmatpush1.msra.mxu0 0.0
  %66 = vmatprep.subr.mxu0 0.0
  %67 = vmatpush1.msra.mxu0 0.0
  %68 = vmatprep.subr.mxu0 0.0
  %69 = vmatpush1.msra.mxu0 0.0
  %70 = vmatprep.subr.mxu0 0.0
  %71 = vmatpush1.msra.mxu0 0.0
  %72 = vmatprep.subr.mxu0 0.0
  %73 = vmatpush1.msra.mxu0 0.0
  %74 = vmatprep.subr.mxu0 0.0
  %75 = vmatpush1.msra.mxu0 0.0
  %76 = vmatprep.subr.mxu0 0.0
  %77 = vmatpush1.msra.mxu0 0.0
  %78 = vmatprep.subr.mxu0 0.0
  %79 = vmatpush1.msra.mxu0 0.0
  %80 = vmatprep.subr.mxu0 0.0
  %81 = vmatpush1.msra.mxu0 0.0
  %82 = vmatprep.subr.mxu0 0.0
  %83 = vmatpush1.msra.mxu0 0.0
  %84 = vmatprep.subr.mxu0 0.0
  %85 = vmatpush1.msra.mxu0 0.0
  %86 = vmatprep.subr.mxu0 0.0
  %87 = vmatpush1.msra.mxu0 0.0
  %88 = vmatprep.subr.mxu0 0.0
  %89 = vmatpush1.msra.mxu0 0.0
  %90 = vmatprep.subr.mxu0 0.0
  %91 = vmatpush1.msra.mxu0 0.0
  %92 = vmatprep.subr.mxu0 0.0
  %93 = vmatpush1.msra.mxu0 0.0
  %94 = vmatprep.subr.mxu0 0.0
  %95 = vmatpush1.msra.mxu0 0.0
  %96 = vmatprep.subr.mxu0 0.0
  %97 = vmatpush1.msra.mxu0 0.0
  %98 = vmatprep.subr.mxu0 0.0
  %99 = vmatpush1.msra.mxu0 0.0
  %100 = vmatprep.subr.mxu0 0.0
  %101 = vmatpush1.msra.mxu0 0.0
  %102 = vmatprep.subr.mxu0 0.0
  %103 = vmatpush1.msra.mxu0 0.0
  %104 = vmatprep.subr.mxu0 0.0
  %105 = vmatpush1.msra.mxu0 0.0
  %106 = vmatprep.subr.mxu0 0.0
  %107 = vmatpush1.msra.mxu0 0.0
  %108 = vmatprep.subr.mxu0 0.0
  %109 = vmatpush1.msra.mxu0 0.0
  %110 = vmatprep.subr.mxu0 0.0
  %111 = vmatpush1.msra.mxu0 0.0
  %112 = vmatprep.subr.mxu0 0.0
  %113 = vmatpush1.msra.mxu0 0.0
  %114 = vmatprep.subr.mxu0 0.0
  %115 = vmatpush1.msra.mxu0 0.0
  %116 = vmatprep.mubr.f32.mxu0 0.0
  %117 = vmatmul.mubr.f32.gmra.mrb[0].mxu0 %v43
  %v118 = vpop.f32.mrb[0].mxu0
  %v119 = vadd.f32 0.0, %v118
  %v120 = vpop.f32.mrb[0].mxu0
  %121 = vmatprep.mubr.f32.mxu0 0.0
  %122 = vmatmul.mubr.f32.gmra.mrb[0].mxu0 %v46
  %v123 = vpop.f32.mrb[0].mxu0
  %v124 = vadd.f32 0.0, %v123
  %v125 = vpop.f32.mrb[0].mxu0
  %126 = vdwg.mxu0
  %vm127 = vcmask 130048
  %v129 = vsel %vm127, %v30, 0
  %v132 = vsel %vm127, %v31, 0
  %134 = vmatprep.subr.mxu0 0.0
  %135 = vmatpush1.msra.mxu0 %v34
  %136 = vmatprep.subr.mxu0 0.0
  %137 = vmatpush1.msra.mxu0 %v35
  %138 = vmatprep.subr.mxu0 0.0
  %139 = vmatpush1.msra.mxu0 0.0
  %140 = vmatprep.subr.mxu0 0.0
  %141 = vmatpush1.msra.mxu0 0.0
  %142 = vmatprep.subr.mxu0 0.0
  %143 = vmatpush1.msra.mxu0 0.0
  %144 = vmatprep.subr.mxu0 0.0
  %145 = vmatpush1.msra.mxu0 0.0
  %146 = vmatprep.subr.mxu0 0.0
  %147 = vmatpush1.msra.mxu0 0.0
  %148 = vmatprep.subr.mxu0 0.0
  %149 = vmatpush1.msra.mxu0 0.0
  %150 = vmatprep.subr.mxu0 0.0
  %151 = vmatpush1.msra.mxu0 0.0
  %152 = vmatprep.subr.mxu0 0.0
  %153 = vmatpush1.msra.mxu0 0.0
  %154 = vmatprep.subr.mxu0 0.0
  %155 = vmatpush1.msra.mxu0 0.0
  %156 = vmatprep.subr.mxu0 0.0
  %157 = vmatpush1.msra.mxu0 0.0
  %158 = vmatprep.subr.mxu0 0.0
  %159 = vmatpush1.msra.mxu0 0.0
  %160 = vmatprep.subr.mxu0 0.0
  %161 = vmatpush1.msra.mxu0 0.0
  %162 = vmatprep.subr.mxu0 0.0
  %163 = vmatpush1.msra.mxu0 0.0
  %164 = vmatprep.subr.mxu0 0.0
  %165 = vmatpush1.msra.mxu0 0.0
  %166 = vmatprep.subr.mxu0 0.0
  %167 = vmatpush1.msra.mxu0 0.0
  %168 = vmatprep.subr.mxu0 0.0
  %169 = vmatpush1.msra.mxu0 0.0
  %170 = vmatprep.subr.mxu0 0.0
  %171 = vmatpush1.msra.mxu0 0.0
  %172 = vmatprep.subr.mxu0 0.0
  %173 = vmatpush1.msra.mxu0 0.0
  %174 = vmatprep.subr.mxu0 0.0
  %175 = vmatpush1.msra.mxu0 0.0
  %176 = vmatprep.subr.mxu0 0.0
  %177 = vmatpush1.msra.mxu0 0.0
  %178 = vmatprep.subr.mxu0 0.0
  %179 = vmatpush1.msra.mxu0 0.0
  %180 = vmatprep.subr.mxu0 0.0
  %181 = vmatpush1.msra.mxu0 0.0
  %182 = vmatprep.subr.mxu0 0.0
  %183 = vmatpush1.msra.mxu0 0.0
  %184 = vmatprep.subr.mxu0 0.0
  %185 = vmatpush1.msra.mxu0 0.0
  %186 = vmatprep.subr.mxu0 0.0
  %187 = vmatpush1.msra.mxu0 0.0
  %188 = vmatprep.subr.mxu0 0.0
  %189 = vmatpush1.msra.mxu0 0.0
  %190 = vmatprep.subr.mxu0 0.0
  %191 = vmatpush1.msra.mxu0 0.0
  %192 = vmatprep.subr.mxu0 0.0
  %193 = vmatpush1.msra.mxu0 0.0
  %194 = vmatprep.subr.mxu0 0.0
  %195 = vmatpush1.msra.mxu0 0.0
  %196 = vmatprep.subr.mxu0 0.0
  %197 = vmatpush1.msra.mxu0 0.0
  %198 = vmatprep.mubr.f32.mxu0 0.0
  %199 = vmatmul.mubr.f32.gmra.mrb[0].mxu0 %v129
  %v200 = vpop.f32.mrb[0].mxu0
  %v201 = vadd.f32 %v119, %v200
  %v202 = vpop.f32.mrb[0].mxu0
  %203 = vmatprep.mubr.f32.mxu0 0.0
  %204 = vmatmul.mubr.f32.gmra.mrb[0].mxu0 %v132
  %v205 = vpop.f32.mrb[0].mxu0
  %v206 = vadd.f32 %v124, %v205
  %v207 = vpop.f32.mrb[0].mxu0
  %208 = vdwg.mxu0
  %v210 = vlaneseq
  %v211 = vshrl.u32 %v210, 7
  %v212 = vsub.s32 0, %v211
  %v213 = vrot.slane %v37, %v212
  %v215 = vadd.f32 %v201, %v213
  %v216 = vadd.f32 %v206, %v213
  %v217 = vmul.f32 %v215, 0.5
  %v218 = vmul.f32 %v216, 0.5
  %v219 = vtanh.pop %v217
  %v220 = vtanh.pop %v218
  %v221 = vadd.f32 %v219, 1.0
  %v222 = vadd.f32 %v220, 1.0
  %v223 = vmul.f32 %v221, 0.5
  %v224 = vmul.f32 %v222, 0.5
  %v226 = vlaneseq
  %v227 = vshrl.u32 %v226, 7
  %v228 = vsub.s32 0, %v227
  %v229 = vrot.slane %v40, %v228
  %v232 = vsel %vm127, %v223, 0
  %v235 = vsel %vm127, %v224, 0
  %237 = vmatprep.subr.mxu0 0.0
  %238 = vmatpush1.msra.mxu0 %v38
  %239 = vmatprep.subr.mxu0 0.0
  %240 = vmatpush1.msra.mxu0 %v39
  %241 = vmatprep.subr.mxu0 0.0
  %242 = vmatpush1.msra.mxu0 0.0
  %243 = vmatprep.subr.mxu0 0.0
  %244 = vmatpush1.msra.mxu0 0.0
  %245 = vmatprep.subr.mxu0 0.0
  %246 = vmatpush1.msra.mxu0 0.0
  %247 = vmatprep.subr.mxu0 0.0
  %248 = vmatpush1.msra.mxu0 0.0
  %249 = vmatprep.subr.mxu0 0.0
  %250 = vmatpush1.msra.mxu0 0.0
  %251 = vmatprep.subr.mxu0 0.0
  %252 = vmatpush1.msra.mxu0 0.0
  %253 = vmatprep.subr.mxu0 0.0
  %254 = vmatpush1.msra.mxu0 0.0
  %255 = vmatprep.subr.mxu0 0.0
  %256 = vmatpush1.msra.mxu0 0.0
  %257 = vmatprep.subr.mxu0 0.0
  %258 = vmatpush1.msra.mxu0 0.0
  %259 = vmatprep.subr.mxu0 0.0
  %260 = vmatpush1.msra.mxu0 0.0
  %261 = vmatprep.subr.mxu0 0.0
  %262 = vmatpush1.msra.mxu0 0.0
  %263 = vmatprep.subr.mxu0 0.0
  %264 = vmatpush1.msra.mxu0 0.0
  %265 = vmatprep.subr.mxu0 0.0
  %266 = vmatpush1.msra.mxu0 0.0
  %267 = vmatprep.subr.mxu0 0.0
  %268 = vmatpush1.msra.mxu0 0.0
  %269 = vmatprep.subr.mxu0 0.0
  %270 = vmatpush1.msra.mxu0 0.0
  %271 = vmatprep.subr.mxu0 0.0
  %272 = vmatpush1.msra.mxu0 0.0
  %273 = vmatprep.subr.mxu0 0.0
  %274 = vmatpush1.msra.mxu0 0.0
  %275 = vmatprep.subr.mxu0 0.0
  %276 = vmatpush1.msra.mxu0 0.0
  %277 = vmatprep.subr.mxu0 0.0
  %278 = vmatpush1.msra.mxu0 0.0
  %279 = vmatprep.subr.mxu0 0.0
  %280 = vmatpush1.msra.mxu0 0.0
  %281 = vmatprep.subr.mxu0 0.0
  %282 = vmatpush1.msra.mxu0 0.0
  %283 = vmatprep.subr.mxu0 0.0
  %284 = vmatpush1.msra.mxu0 0.0
  %285 = vmatprep.subr.mxu0 0.0
  %286 = vmatpush1.msra.mxu0 0.0
  %287 = vmatprep.subr.mxu0 0.0
  %288 = vmatpush1.msra.mxu0 0.0
  %289 = vmatprep.subr.mxu0 0.0
  %290 = vmatpush1.msra.mxu0 0.0
  %291 = vmatprep.subr.mxu0 0.0
  %292 = vmatpush1.msra.mxu0 0.0
  %293 = vmatprep.subr.mxu0 0.0
  %294 = vmatpush1.msra.mxu0 0.0
  %295 = vmatprep.subr.mxu0 0.0
  %296 = vmatpush1.msra.mxu0 0.0
  %297 = vmatprep.subr.mxu0 0.0
  %298 = vmatpush1.msra.mxu0 0.0
  %299 = vmatprep.subr.mxu0 0.0
  %300 = vmatpush1.msra.mxu0 0.0
  %301 = vmatprep.mubr.f32.mxu0 0.0
  %302 = vmatmul.mubr.f32.gmra.mrb[0].mxu0 %v232
  %v303 = vpop.f32.mrb[0].mxu0
  %v304 = vadd.f32 %v229, %v303
  %v305 = vpop.f32.mrb[0].mxu0
  %306 = vmatprep.mubr.f32.mxu0 0.0
  %307 = vmatmul.mubr.f32.gmra.mrb[0].mxu0 %v235
  %v308 = vpop.f32.mrb[0].mxu0
  %v309 = vadd.f32 %v229, %v308
  %v310 = vpop.f32.mrb[0].mxu0
  %311 = vdwg.mxu0
  %v312 = vld [vmem:[%s7] sm:$0xff]
  %v313 = vld [vmem:[%s7 + $0x8] sm:$0xff]
  %v314 = vadd.f32 %v304, %v312
  %v315 = vadd.f32 %v309, %v313
  %v316 = vmul.f32 %v314, %v314
  %v317 = vmul.f32 %v315, %v315
  %v318 = vsel %vm127, %v316, 0.0
  %319 = vadd.xlane.f32.xlu0 %v318
  %v320 = vpop.xlane.xlu0 %319
  %v321 = vsel %vm127, %v317, 0.0
  %322 = vadd.xlane.f32.xlu0 %v321
  %v323 = vpop.xlane.xlu0 %322
  %v324 = vmax.f32 %v320, 1e-24
  %v325 = vmax.f32 %v323, 1e-24
  %v326 = vrsqrt.pop %v324
  %v327 = vrsqrt.pop %v325
  %v328 = vmul.f32 %v314, %v326
  %v329 = vmul.f32 %v315, %v327
  %v330 = vpack.c.bf16 %v329, %v328
  %v332 = vsel %vm127, %v330, 0
  %334 = vmatprep.subr.bf16.mxu0 0
  %335 = vmatpush1.bf16.xpose.msra.mxu0 %v332
  %336 = vmatprep.subr.bf16.mxu0 0
  %337 = vmatpush1.bf16.xpose.msra.mxu0 0
  %338 = vmatprep.subr.bf16.mxu0 0
  %339 = vmatpush1.bf16.xpose.msra.mxu0 0
  %340 = vmatprep.subr.bf16.mxu0 0
  %341 = vmatpush1.bf16.xpose.msra.mxu0 0
  %342 = vmatprep.subr.bf16.mxu0 0
  %343 = vmatpush1.bf16.xpose.msra.mxu0 0
  %344 = vmatprep.subr.bf16.mxu0 0
  %345 = vmatpush1.bf16.xpose.msra.mxu0 0
  %346 = vmatprep.subr.bf16.mxu0 0
  %347 = vmatpush1.bf16.xpose.msra.mxu0 0
  %348 = vmatprep.subr.bf16.mxu0 0
  %349 = vmatpush1.bf16.xpose.msra.mxu0 0
  %350 = vmatprep.subr.bf16.mxu0 0
  %351 = vmatpush1.bf16.xpose.msra.mxu0 0
  %352 = vmatprep.subr.bf16.mxu0 0
  %353 = vmatpush1.bf16.xpose.msra.mxu0 0
  %354 = vmatprep.subr.bf16.mxu0 0
  %355 = vmatpush1.bf16.xpose.msra.mxu0 0
  %356 = vmatprep.subr.bf16.mxu0 0
  %357 = vmatpush1.bf16.xpose.msra.mxu0 0
  %358 = vmatprep.subr.bf16.mxu0 0
  %359 = vmatpush1.bf16.xpose.msra.mxu0 0
  %360 = vmatprep.subr.bf16.mxu0 0
  %361 = vmatpush1.bf16.xpose.msra.mxu0 0
  %362 = vmatprep.subr.bf16.mxu0 0
  %363 = vmatpush1.bf16.xpose.msra.mxu0 0
  %364 = vmatprep.subr.bf16.mxu0 0
  %365 = vmatpush1.bf16.xpose.msra.mxu0 0
  %366 = vmatprep.mubr.bf16.mxu0 0
  %367 = vmatmul.mubr.bf16.gmra.mrb[0].mxu0 %v332
  %v368 = vpop.f32.mrb[0].mxu0
  %v369 = vadd.f32 0.0, %v368
  %v370 = vpop.f32.mrb[0].mxu0
  %v371 = vpop.f32.mrb[0].mxu0
  %v372 = vadd.f32 0.0, %v371
  %v373 = vpop.f32.mrb[0].mxu0
  %374 = vdwg.mxu0
  %v375 = vsel %vm127, %v369, -inf
  %376 = vmax.xlane.f32.xlu0 %v375
  %v377 = vpop.xlane.xlu0 %376
  %v378 = vsel %vm127, %v372, -inf
  %379 = vmax.xlane.f32.xlu0 %v378
  %v380 = vpop.xlane.xlu0 %379
  %vm381 = vcmp.ge.f32.partialorder %v369, %v377
  %vm382 = vcmp.ge.f32.partialorder %v372, %v380
  %v383 = vsel %vm381, -inf, %v369
  %v384 = vsel %vm382, -inf, %v372
  %v385 = vsel %vm127, %v383, -inf
  %386 = vmax.xlane.f32.xlu0 %v385
  %v387 = vpop.xlane.xlu0 %386
  %v388 = vsel %vm127, %v384, -inf
  %389 = vmax.xlane.f32.xlu0 %v388
  %v390 = vpop.xlane.xlu0 %389
  %vm391 = vcmp.ge.f32.partialorder %v383, %v387
  %vm392 = vcmp.ge.f32.partialorder %v384, %v390
  %v393 = vsel %vm391, -inf, %v383
  %v394 = vsel %vm392, -inf, %v384
  %v395 = vsel %vm127, %v393, -inf
  %396 = vmax.xlane.f32.xlu0 %v395
  %v397 = vpop.xlane.xlu0 %396
  %v398 = vsel %vm127, %v394, -inf
  %399 = vmax.xlane.f32.xlu0 %v398
  %v400 = vpop.xlane.xlu0 %399
  %vm401 = vcmp.ge.f32.partialorder %v393, %v397
  %vm402 = vcmp.ge.f32.partialorder %v394, %v400
  %v403 = vsel %vm401, -inf, %v393
  %v404 = vsel %vm402, -inf, %v394
  %v405 = vsel %vm127, %v403, -inf
  %406 = vmax.xlane.f32.xlu0 %v405
  %v407 = vpop.xlane.xlu0 %406
  %v408 = vsel %vm127, %v404, -inf
  %409 = vmax.xlane.f32.xlu0 %v408
  %v410 = vpop.xlane.xlu0 %409
  %vm411 = vcmp.ge.f32.partialorder %v403, %v407
  %vm412 = vcmp.ge.f32.partialorder %v404, %v410
  %v413 = vsel %vm411, -inf, %v403
  %v414 = vsel %vm412, -inf, %v404
  %v415 = vsel %vm127, %v413, -inf
  %416 = vmax.xlane.f32.xlu0 %v415
  %v417 = vpop.xlane.xlu0 %416
  %v418 = vsel %vm127, %v414, -inf
  %419 = vmax.xlane.f32.xlu0 %v418
  %v420 = vpop.xlane.xlu0 %419
  %v421 = vlaneseq
  %v422 = vshrl.u32 %v421, 7
  %v423 = vadd.s32 %v422, 8
  %v424 = vlaneseq
  %v425 = vand.u32 %v424, 127
  %vm426 = vcmp.eq.s32.totalorder %v422, %v425
  %vm427 = vcmp.eq.s32.totalorder %v423, %v425
  %v428 = vsel %vm426, %v417, 0.0
  %v429 = vsel %vm427, %v420, 0.0
  %v430 = vsel %vm127, %v428, 0.0
  %v431 = vsel %vm127, %v429, 0.0
  %v432 = vadd.f32 %v430, %v431
  %v433 = vrot.slane %v432, 4
  %v434 = vadd.f32 %v432, %v433
  %v435 = vrot.slane %v434, 2
  %v436 = vadd.f32 %v434, %v435
  %v437 = vrot.slane %v436, 1
  %v438 = vadd.f32 %v436, %v437
  %vm439 = vcmp.gt.f32.partialorder %v369, 0.05
  %vm440 = vcmp.gt.f32.partialorder %v372, 0.05
  %v441 = vsel %vm439, 1, 0
  %v442 = vsel %vm440, 1, 0
  %v443 = vcvt.s32.f32 %v441
  %v444 = vcvt.s32.f32 %v442
  %vm445 = vcmp.ge.f32.partialorder %v369, %v417
  %vm446 = vcmp.ge.f32.partialorder %v372, %v420
  %v447 = vsel %vm445, 1, 0
  %v448 = vsel %vm446, 1, 0
  %v449 = vcvt.s32.f32 %v447
  %v450 = vcvt.s32.f32 %v448
  %vm451 = vcmp.ge.f32.partialorder %v369, %v438
  %vm452 = vcmp.ge.f32.partialorder %v372, %v438
  %v453 = vsel %vm451, 1, 0
  %v454 = vsel %vm452, 1, 0
  %v455 = vcvt.s32.f32 %v453
  %v456 = vcvt.s32.f32 %v454
  %v457 = vadd.f32 %v449, %v455
  %v458 = vadd.f32 %v450, %v456
  %v459 = vmul.f32 %v443, %v457
  %v460 = vmul.f32 %v444, %v458
  %v461 = vmul.f32 %v369, 0.5
  %v462 = vmul.f32 %v372, 0.5
  %v463 = vmul.f32 %v461, %v459
  %v464 = vmul.f32 %v462, %v460
  %v465 = vsel %vm127, %v463, 0.0
  %466 = vadd.xlane.f32.xlu0 %v465
  %v467 = vpop.xlane.xlu0 %466
  %v468 = vsel %vm127, %v464, 0.0
  %469 = vadd.xlane.f32.xlu0 %v468
  %v470 = vpop.xlane.xlu0 %469
  %v471 = vadd.f32 %v465, %v468
  %v472 = vrot.slane %v471, 4
  %v473 = vadd.f32 %v471, %v472
  %v474 = vrot.slane %v473, 2
  %v475 = vadd.f32 %v473, %v474
  %v476 = vrot.slane %v475, 1
  %v477 = vadd.f32 %v475, %v476
  %v478 = vrsqrt.pop %v467
  %v479 = vmul.f32 %v467, %v478
  %vm480 = vcmp.eq.f32.partialorder %v467, inf
  %v481 = vsel %vm480, %v467, %v479
  %vm482 = vcmp.eq.f32.partialorder %v467, 0.0
  %v483 = vand.u32 %v467, 2147483648
  %v484 = vsel %vm482, %v483, %v481
  %v485 = vrsqrt.pop %v470
  %v486 = vmul.f32 %v470, %v485
  %vm487 = vcmp.eq.f32.partialorder %v470, inf
  %v488 = vsel %vm487, %v470, %v486
  %vm489 = vcmp.eq.f32.partialorder %v470, 0.0
  %v490 = vand.u32 %v470, 2147483648
  %v491 = vsel %vm489, %v490, %v488
  %v492 = vadd.f32 %v484, 1e-10
  %v493 = vadd.f32 %v491, 1e-10
  %v494 = vrcp.pop %v492
  %v495 = vrcp.pop %v493
  %v496 = vrsqrt.pop %v477
  %v497 = vmul.f32 %v477, %v496
  %vm498 = vcmp.eq.f32.partialorder %v477, inf
  %v499 = vsel %vm498, %v477, %v497
  %vm500 = vcmp.eq.f32.partialorder %v477, 0.0
  %v501 = vand.u32 %v477, 2147483648
  %v502 = vsel %vm500, %v501, %v499
  %v503 = vadd.f32 %v502, 1e-10
  %v504 = vrcp.pop %v503
  %v505 = vmul.f32 %v494, %v463
  %v506 = vmul.f32 %v495, %v464
  %v507 = vmul.f32 %v505, %v504
  %v508 = vmul.f32 %v506, %v504
  %509 = vst.msk [vmem:[%s8] sm:$0xff] %vm127, %v507
  %510 = vst.msk [vmem:[%s8 + $0x8] sm:$0xff] %vm127, %v508
  // Predicated region
  $region34: #{_lambda_.4} parent=0 // pred_check
    _
  $region35: #{_lambda_.4} parent=0 // pred_check_branch
    %512 = sbr.rel (0) target = $region37
  $region36: #{_lambda_.4} parent=0 // pred_region
    _
  $region37: #{_lambda_.4} parent=0 // pred_fallthru
    _
  // Predicated region
  $region38: #{_lambda_.4} parent=0 // pred_check
    _
  $region39: #{_lambda_.4} parent=0 // pred_check_branch
    %514 = sbr.rel (0) target = $region41
  $region40: #{_lambda_.4} parent=0 // pred_region
    _
  $region41: #{_lambda_.4} parent=0 // pred_fallthru
    _

// kernel: _lambda_.5
$region0: #{_lambda_.5}
  #allocation0 [shape = 'u32[]', space=smem, size = 0x4, offset = 0x4, fixed_abs, tag = 'smem constant byte address 0x4 - core index']
  #allocation1 [shape = 'u32[144,128]{1,0:T(1,128)}', space=vmem, size = 0x12000, scoped, tag = 'internal scratch']
  %s0 = inlined_call_operand.vmem [shape: f32[16,16], index: 0, kind: input, shape index: {}, may-alias: {0,8}]
  %s1 = inlined_call_operand.vmem [shape: f32[16,4], index: 1, kind: input, shape index: {}]
  %s2 = inlined_call_operand.vmem [shape: f32[16,16], index: 2, kind: input, shape index: {}]
  %s3 = inlined_call_operand.vmem [shape: f32[4,16], index: 3, kind: input, shape index: {}]
  %s4 = inlined_call_operand.vmem [shape: f32[1,16], index: 4, kind: input, shape index: {}]
  %s5 = inlined_call_operand.vmem [shape: f32[16,16], index: 5, kind: input, shape index: {}]
  %s6 = inlined_call_operand.vmem [shape: f32[1,16], index: 6, kind: input, shape index: {}]
  %s7 = inlined_call_operand.vmem [shape: f32[16,16], index: 7, kind: input, shape index: {}]
  %s8 = inlined_call_operand.vmem [shape: f32[16,16], index: 8, kind: input, shape index: {}, may-alias: {0,8}]
  %s9 = inlined_call_operand.vmem [shape: f32[16,256], index: 9, kind: input, shape index: {}]
  %s10 = inlined_call_operand.vmem [shape: f32[1,256], index: 10, kind: input, shape index: {}]
  %s11 = inlined_call_operand.vmem [shape: f32[256,16], index: 11, kind: input, shape index: {}]
  %s12 = inlined_call_operand.vmem [shape: f32[1,16], index: 12, kind: input, shape index: {}]
  %s13 = inlined_call_operand.vmem [shape: f32[16,256], index: 13, kind: input, shape index: {}]
  %s14 = inlined_call_operand.vmem [shape: f32[1,256], index: 14, kind: input, shape index: {}]
  %s15 = inlined_call_operand.vmem [shape: f32[256,16], index: 15, kind: input, shape index: {}]
  %s16 = inlined_call_operand.vmem [shape: f32[1,16], index: 16, kind: input, shape index: {}]
  %s17 = inlined_call_operand.hbm [shape: f32[16,16], index: 17, kind: output, shape index: {0}]
  %s18 = inlined_call_operand.hbm [shape: f32[16,16], index: 18, kind: output, shape index: {1}]
  %19 = xla_tuple %s17, %s18
  %s20 = sld [smem:[#allocation0]]
  $region86: #{_lambda_.5} parent=0
    _
  %s22 = ssub.s32 1, %s20
  %s23 = scalar_select 0, %s22, %s20
  $region1: #{_lambda_.5} parent=0
    #allocation2 [shape = 'u8[8192]{0}', space=vmem, size = 0x2000, scoped, tag = 'output window, operand 0, single buffered']
    #allocation3 [shape = 's32[1]{0}', space=sflag, size = 0x4, scoped, tag = 'scoped memory for _lambda_.5']
    #allocation4 [shape = 'u8[8192]{0}', space=vmem, size = 0x2000, scoped, tag = 'output window, operand 1, single buffered']
    #allocation5 [shape = 's32[1]{0}', space=sflag, size = 0x4, scoped, tag = 'scoped memory for _lambda_.5']
    %24 = vsyncpa [#allocation3], 0
    %25 = vsyncpa [#allocation5], 0
    // Predicated region
    $region2: #{_lambda_.5} parent=1 // pred_check
      _
    $region3: #{_lambda_.5} parent=1 // pred_check_branch
      %27 = sbr.rel (0) target = $region5
    $region4: #{_lambda_.5} parent=1 // pred_region
      _
    $region5: #{_lambda_.5} parent=1 // pred_fallthru
      _
    // Predicated region
    $region6: #{_lambda_.5} parent=1 // pred_check
      _
    $region7: #{_lambda_.5} parent=1 // pred_check_branch
      %29 = sbr.rel (0) target = $region9
    $region8: #{_lambda_.5} parent=1 // pred_region
      _
    $region9: #{_lambda_.5} parent=1 // pred_fallthru
      _
    // Predicated region
    $region10: #{_lambda_.5} parent=1 // pred_check
      _
    $region11: #{_lambda_.5} parent=1 // pred_check_branch
      %31 = sbr.rel (0) target = $region13
    $region12: #{_lambda_.5} parent=1 // pred_region
      _
    $region13: #{_lambda_.5} parent=1 // pred_fallthru
      _
    // Predicated region
    $region14: #{_lambda_.5} parent=1 // pred_check
      _
    $region15: #{_lambda_.5} parent=1 // pred_check_branch
      %33 = sbr.rel (0) target = $region17
    $region16: #{_lambda_.5} parent=1 // pred_region
      _
    $region17: #{_lambda_.5} parent=1 // pred_fallthru
      _
    // Predicated region
    $region18: #{_lambda_.5} parent=1 // pred_check
      _
    $region19: #{_lambda_.5} parent=1 // pred_check_branch
      %35 = sbr.rel (0) target = $region21
    $region20: #{_lambda_.5} parent=1 // pred_region
      _
    $region21: #{_lambda_.5} parent=1 // pred_fallthru
      _
    // Predicated region
    $region22: #{_lambda_.5} parent=1 // pred_check
      _
    $region23: #{_lambda_.5} parent=1 // pred_check_branch
      %37 = sbr.rel (0) target = $region25
    $region24: #{_lambda_.5} parent=1 // pred_region
      _
    $region25: #{_lambda_.5} parent=1 // pred_fallthru
      _
    // Predicated region
    $region26: #{_lambda_.5} parent=1 // pred_check
      _
    $region27: #{_lambda_.5} parent=1 // pred_check_branch
      %39 = sbr.rel (0) target = $region29
    $region28: #{_lambda_.5} parent=1 // pred_region
      _
    $region29: #{_lambda_.5} parent=1 // pred_fallthru
      _
    // Predicated region
    $region30: #{_lambda_.5} parent=1 // pred_check
      _
    $region31: #{_lambda_.5} parent=1 // pred_check_branch
      %41 = sbr.rel (0) target = $region33
    $region32: #{_lambda_.5} parent=1 // pred_region
      _
    $region33: #{_lambda_.5} parent=1 // pred_fallthru
      _
    // Predicated region
    $region34: #{_lambda_.5} parent=1 // pred_check
      _
    $region35: #{_lambda_.5} parent=1 // pred_check_branch
      %43 = sbr.rel (0) target = $region37
    $region36: #{_lambda_.5} parent=1 // pred_region
      _
    $region37: #{_lambda_.5} parent=1 // pred_fallthru
      _
    // Predicated region
    $region38: #{_lambda_.5} parent=1 // pred_check
      _
    $region39: #{_lambda_.5} parent=1 // pred_check_branch
      %45 = sbr.rel (0) target = $region41
    $region40: #{_lambda_.5} parent=1 // pred_region
      _
    $region41: #{_lambda_.5} parent=1 // pred_fallthru
      _
    // Predicated region
    $region42: #{_lambda_.5} parent=1 // pred_check
      _
    $region43: #{_lambda_.5} parent=1 // pred_check_branch
      %47 = sbr.rel (0) target = $region45
    $region44: #{_lambda_.5} parent=1 // pred_region
      _
    $region45: #{_lambda_.5} parent=1 // pred_fallthru
      _
    // Predicated region
    $region46: #{_lambda_.5} parent=1 // pred_check
      _
    $region47: #{_lambda_.5} parent=1 // pred_check_branch
      %49 = sbr.rel (0) target = $region49
    $region48: #{_lambda_.5} parent=1 // pred_region
      _
    $region49: #{_lambda_.5} parent=1 // pred_fallthru
      _
    // Predicated region
    $region50: #{_lambda_.5} parent=1 // pred_check
      _
    $region51: #{_lambda_.5} parent=1 // pred_check_branch
      %51 = sbr.rel (0) target = $region53
    $region52: #{_lambda_.5} parent=1 // pred_region
      _
    $region53: #{_lambda_.5} parent=1 // pred_fallthru
      _
    // Predicated region
    $region54: #{_lambda_.5} parent=1 // pred_check
      _
    $region55: #{_lambda_.5} parent=1 // pred_check_branch
      %53 = sbr.rel (0) target = $region57
    $region56: #{_lambda_.5} parent=1 // pred_region
      _
    $region57: #{_lambda_.5} parent=1 // pred_fallthru
      _
    // Predicated region
    $region58: #{_lambda_.5} parent=1 // pred_check
      _
    $region59: #{_lambda_.5} parent=1 // pred_check_branch
      %55 = sbr.rel (0) target = $region61
    $region60: #{_lambda_.5} parent=1 // pred_region
      _
    $region61: #{_lambda_.5} parent=1 // pred_fallthru
      _
    // Predicated region
    $region62: #{_lambda_.5} parent=1 // pred_check
      _
    $region63: #{_lambda_.5} parent=1 // pred_check_branch
      %57 = sbr.rel (0) target = $region65
    $region64: #{_lambda_.5} parent=1 // pred_region
      _
    $region65: #{_lambda_.5} parent=1 // pred_fallthru
      _
    // Predicated region
    $region66: #{_lambda_.5} parent=1 // pred_check
      _
    $region67: #{_lambda_.5} parent=1 // pred_check_branch
      %59 = sbr.rel (0) target = $region69
    $region68: #{_lambda_.5} parent=1 // pred_region
      _
    $region69: #{_lambda_.5} parent=1 // pred_fallthru
      _
    %v61 = vld [vmem:[%s0] sm:$0xff]
    %v62 = vld [vmem:[%s0 + $0x8] sm:$0xff]
    %v63 = vld [vmem:[%s1] sm:$0xff]
    %v64 = vld [vmem:[%s1 + $0x8] sm:$0xff]
    %v65 = vld [vmem:[%s2] sm:$0xff]
    %v66 = vld [vmem:[%s2 + $0x8] sm:$0xff]
    %v67 = vld [vmem:[%s3] sm:$0xf]
    %v68 = vld [vmem:[%s4] sm:$0x1]
    %v69 = vld [vmem:[%s5] sm:$0xff]
    %v70 = vld [vmem:[%s5 + $0x8] sm:$0xff]
    %v71 = vld [vmem:[%s6] sm:$0x1]
    %vm72 = vcmask 31744
    %v74 = vsel %vm72, %v63, 0
    %v77 = vsel %vm72, %v64, 0
    %vm79 = vcmask 1043456
    %v81 = vsel %vm79, %v67, 0
    %83 = vmatprep.subr.mxu0 0.0
    %84 = vmatpush1.msra.mxu0 %v81
    %85 = vmatprep.subr.mxu0 0.0
    %86 = vmatpush1.msra.mxu0 0.0
    %87 = vmatprep.subr.mxu0 0.0
    %88 = vmatpush1.msra.mxu0 0.0
    %89 = vmatprep.subr.mxu0 0.0
    %90 = vmatpush1.msra.mxu0 0.0
    %91 = vmatprep.subr.mxu0 0.0
    %92 = vmatpush1.msra.mxu0 0.0
    %93 = vmatprep.subr.mxu0 0.0
    %94 = vmatpush1.msra.mxu0 0.0
    %95 = vmatprep.subr.mxu0 0.0
    %96 = vmatpush1.msra.mxu0 0.0
    %97 = vmatprep.subr.mxu0 0.0
    %98 = vmatpush1.msra.mxu0 0.0
    %99 = vmatprep.subr.mxu0 0.0
    %100 = vmatpush1.msra.mxu0 0.0
    %101 = vmatprep.subr.mxu0 0.0
    %102 = vmatpush1.msra.mxu0 0.0
    %103 = vmatprep.subr.mxu0 0.0
    %104 = vmatpush1.msra.mxu0 0.0
    %105 = vmatprep.subr.mxu0 0.0
    %106 = vmatpush1.msra.mxu0 0.0
    %107 = vmatprep.subr.mxu0 0.0
    %108 = vmatpush1.msra.mxu0 0.0
    %109 = vmatprep.subr.mxu0 0.0
    %110 = vmatpush1.msra.mxu0 0.0
    %111 = vmatprep.subr.mxu0 0.0
    %112 = vmatpush1.msra.mxu0 0.0
    %113 = vmatprep.subr.mxu0 0.0
    %114 = vmatpush1.msra.mxu0 0.0
    %115 = vmatprep.subr.mxu0 0.0
    %116 = vmatpush1.msra.mxu0 0.0
    %117 = vmatprep.subr.mxu0 0.0
    %118 = vmatpush1.msra.mxu0 0.0
    %119 = vmatprep.subr.mxu0 0.0
    %120 = vmatpush1.msra.mxu0 0.0
    %121 = vmatprep.subr.mxu0 0.0
    %122 = vmatpush1.msra.mxu0 0.0
    %123 = vmatprep.subr.mxu0 0.0
    %124 = vmatpush1.msra.mxu0 0.0
    %125 = vmatprep.subr.mxu0 0.0
    %126 = vmatpush1.msra.mxu0 0.0
    %127 = vmatprep.subr.mxu0 0.0
    %128 = vmatpush1.msra.mxu0 0.0
    %129 = vmatprep.subr.mxu0 0.0
    %130 = vmatpush1.msra.mxu0 0.0
    %131 = vmatprep.subr.mxu0 0.0
    %132 = vmatpush1.msra.mxu0 0.0
    %133 = vmatprep.subr.mxu0 0.0
    %134 = vmatpush1.msra.mxu0 0.0
    %135 = vmatprep.subr.mxu0 0.0
    %136 = vmatpush1.msra.mxu0 0.0
    %137 = vmatprep.subr.mxu0 0.0
    %138 = vmatpush1.msra.mxu0 0.0
    %139 = vmatprep.subr.mxu0 0.0
    %140 = vmatpush1.msra.mxu0 0.0
    %141 = vmatprep.subr.mxu0 0.0
    %142 = vmatpush1.msra.mxu0 0.0
    %143 = vmatprep.subr.mxu0 0.0
    %144 = vmatpush1.msra.mxu0 0.0
    %145 = vmatprep.subr.mxu0 0.0
    %146 = vmatpush1.msra.mxu0 0.0
    %147 = vmatprep.mubr.f32.mxu0 0.0
    %148 = vmatmul.mubr.f32.gmra.mrb[0].mxu0 %v74
    %v149 = vpop.f32.mrb[0].mxu0
    %v150 = vadd.f32 0.0, %v149
    %v151 = vpop.f32.mrb[0].mxu0
    %152 = vmatprep.mubr.f32.mxu0 0.0
    %153 = vmatmul.mubr.f32.gmra.mrb[0].mxu0 %v77
    %v154 = vpop.f32.mrb[0].mxu0
    %v155 = vadd.f32 0.0, %v154
    %v156 = vpop.f32.mrb[0].mxu0
    %157 = vdwg.mxu0
    %vm158 = vcmask 130048
    %v160 = vsel %vm158, %v61, 0
    %v163 = vsel %vm158, %v62, 0
    %165 = vmatprep.subr.mxu0 0.0
    %166 = vmatpush1.msra.mxu0 %v65
    %167 = vmatprep.subr.mxu0 0.0
    %168 = vmatpush1.msra.mxu0 %v66
    %169 = vmatprep.subr.mxu0 0.0
    %170 = vmatpush1.msra.mxu0 0.0
    %171 = vmatprep.subr.mxu0 0.0
    %172 = vmatpush1.msra.mxu0 0.0
    %173 = vmatprep.subr.mxu0 0.0
    %174 = vmatpush1.msra.mxu0 0.0
    %175 = vmatprep.subr.mxu0 0.0
    %176 = vmatpush1.msra.mxu0 0.0
    %177 = vmatprep.subr.mxu0 0.0
    %178 = vmatpush1.msra.mxu0 0.0
    %179 = vmatprep.subr.mxu0 0.0
    %180 = vmatpush1.msra.mxu0 0.0
    %181 = vmatprep.subr.mxu0 0.0
    %182 = vmatpush1.msra.mxu0 0.0
    %183 = vmatprep.subr.mxu0 0.0
    %184 = vmatpush1.msra.mxu0 0.0
    %185 = vmatprep.subr.mxu0 0.0
    %186 = vmatpush1.msra.mxu0 0.0
    %187 = vmatprep.subr.mxu0 0.0
    %188 = vmatpush1.msra.mxu0 0.0
    %189 = vmatprep.subr.mxu0 0.0
    %190 = vmatpush1.msra.mxu0 0.0
    %191 = vmatprep.subr.mxu0 0.0
    %192 = vmatpush1.msra.mxu0 0.0
    %193 = vmatprep.subr.mxu0 0.0
    %194 = vmatpush1.msra.mxu0 0.0
    %195 = vmatprep.subr.mxu0 0.0
    %196 = vmatpush1.msra.mxu0 0.0
    %197 = vmatprep.subr.mxu0 0.0
    %198 = vmatpush1.msra.mxu0 0.0
    %199 = vmatprep.subr.mxu0 0.0
    %200 = vmatpush1.msra.mxu0 0.0
    %201 = vmatprep.subr.mxu0 0.0
    %202 = vmatpush1.msra.mxu0 0.0
    %203 = vmatprep.subr.mxu0 0.0
    %204 = vmatpush1.msra.mxu0 0.0
    %205 = vmatprep.subr.mxu0 0.0
    %206 = vmatpush1.msra.mxu0 0.0
    %207 = vmatprep.subr.mxu0 0.0
    %208 = vmatpush1.msra.mxu0 0.0
    %209 = vmatprep.subr.mxu0 0.0
    %210 = vmatpush1.msra.mxu0 0.0
    %211 = vmatprep.subr.mxu0 0.0
    %212 = vmatpush1.msra.mxu0 0.0
    %213 = vmatprep.subr.mxu0 0.0
    %214 = vmatpush1.msra.mxu0 0.0
    %215 = vmatprep.subr.mxu0 0.0
    %216 = vmatpush1.msra.mxu0 0.0
    %217 = vmatprep.subr.mxu0 0.0
    %218 = vmatpush1.msra.mxu0 0.0
    %219 = vmatprep.subr.mxu0 0.0
    %220 = vmatpush1.msra.mxu0 0.0
    %221 = vmatprep.subr.mxu0 0.0
    %222 = vmatpush1.msra.mxu0 0.0
    %223 = vmatprep.subr.mxu0 0.0
    %224 = vmatpush1.msra.mxu0 0.0
    %225 = vmatprep.subr.mxu0 0.0
    %226 = vmatpush1.msra.mxu0 0.0
    %227 = vmatprep.subr.mxu0 0.0
    %228 = vmatpush1.msra.mxu0 0.0
    %229 = vmatprep.mubr.f32.mxu0 0.0
    %230 = vmatmul.mubr.f32.gmra.mrb[0].mxu0 %v160
    %v231 = vpop.f32.mrb[0].mxu0
    %v232 = vadd.f32 %v150, %v231
    %v233 = vpop.f32.mrb[0].mxu0
    %234 = vmatprep.mubr.f32.mxu0 0.0
    %235 = vmatmul.mubr.f32.gmra.mrb[0].mxu0 %v163
    %v236 = vpop.f32.mrb[0].mxu0
    %v237 = vadd.f32 %v155, %v236
    %v238 = vpop.f32.mrb[0].mxu0
    %239 = vdwg.mxu0
    %v241 = vlaneseq
    %v242 = vshrl.u32 %v241, 7
    %v243 = vsub.s32 0, %v242
    %v244 = vrot.slane %v68, %v243
    %v246 = vadd.f32 %v232, %v244
    %v247 = vadd.f32 %v237, %v244
    %v248 = vmul.f32 %v246, 0.5
    %v249 = vmul.f32 %v247, 0.5
    %v250 = vtanh.pop %v248
    %v251 = vtanh.pop %v249
    %v252 = vadd.f32 %v250, 1.0
    %v253 = vadd.f32 %v251, 1.0
    %v254 = vmul.f32 %v252, 0.5
    %v255 = vmul.f32 %v253, 0.5
    %v257 = vlaneseq
    %v258 = vshrl.u32 %v257, 7
    %v259 = vsub.s32 0, %v258
    %v260 = vrot.slane %v71, %v259
    %v263 = vsel %vm158, %v254, 0
    %v266 = vsel %vm158, %v255, 0
    %268 = vmatprep.subr.mxu0 0.0
    %269 = vmatpush1.msra.mxu0 %v69
    %270 = vmatprep.subr.mxu0 0.0
    %271 = vmatpush1.msra.mxu0 %v70
    %272 = vmatprep.subr.mxu0 0.0
    %273 = vmatpush1.msra.mxu0 0.0
    %274 = vmatprep.subr.mxu0 0.0
    %275 = vmatpush1.msra.mxu0 0.0
    %276 = vmatprep.subr.mxu0 0.0
    %277 = vmatpush1.msra.mxu0 0.0
    %278 = vmatprep.subr.mxu0 0.0
    %279 = vmatpush1.msra.mxu0 0.0
    %280 = vmatprep.subr.mxu0 0.0
    %281 = vmatpush1.msra.mxu0 0.0
    %282 = vmatprep.subr.mxu0 0.0
    %283 = vmatpush1.msra.mxu0 0.0
    %284 = vmatprep.subr.mxu0 0.0
    %285 = vmatpush1.msra.mxu0 0.0
    %286 = vmatprep.subr.mxu0 0.0
    %287 = vmatpush1.msra.mxu0 0.0
    %288 = vmatprep.subr.mxu0 0.0
    %289 = vmatpush1.msra.mxu0 0.0
    %290 = vmatprep.subr.mxu0 0.0
    %291 = vmatpush1.msra.mxu0 0.0
    %292 = vmatprep.subr.mxu0 0.0
    %293 = vmatpush1.msra.mxu0 0.0
    %294 = vmatprep.subr.mxu0 0.0
    %295 = vmatpush1.msra.mxu0 0.0
    %296 = vmatprep.subr.mxu0 0.0
    %297 = vmatpush1.msra.mxu0 0.0
    %298 = vmatprep.subr.mxu0 0.0
    %299 = vmatpush1.msra.mxu0 0.0
    %300 = vmatprep.subr.mxu0 0.0
    %301 = vmatpush1.msra.mxu0 0.0
    %302 = vmatprep.subr.mxu0 0.0
    %303 = vmatpush1.msra.mxu0 0.0
    %304 = vmatprep.subr.mxu0 0.0
    %305 = vmatpush1.msra.mxu0 0.0
    %306 = vmatprep.subr.mxu0 0.0
    %307 = vmatpush1.msra.mxu0 0.0
    %308 = vmatprep.subr.mxu0 0.0
    %309 = vmatpush1.msra.mxu0 0.0
    %310 = vmatprep.subr.mxu0 0.0
    %311 = vmatpush1.msra.mxu0 0.0
    %312 = vmatprep.subr.mxu0 0.0
    %313 = vmatpush1.msra.mxu0 0.0
    %314 = vmatprep.subr.mxu0 0.0
    %315 = vmatpush1.msra.mxu0 0.0
    %316 = vmatprep.subr.mxu0 0.0
    %317 = vmatpush1.msra.mxu0 0.0
    %318 = vmatprep.subr.mxu0 0.0
    %319 = vmatpush1.msra.mxu0 0.0
    %320 = vmatprep.subr.mxu0 0.0
    %321 = vmatpush1.msra.mxu0 0.0
    %322 = vmatprep.subr.mxu0 0.0
    %323 = vmatpush1.msra.mxu0 0.0
    %324 = vmatprep.subr.mxu0 0.0
    %325 = vmatpush1.msra.mxu0 0.0
    %326 = vmatprep.subr.mxu0 0.0
    %327 = vmatpush1.msra.mxu0 0.0
    %328 = vmatprep.subr.mxu0 0.0
    %329 = vmatpush1.msra.mxu0 0.0
    %330 = vmatprep.subr.mxu0 0.0
    %331 = vmatpush1.msra.mxu0 0.0
    %332 = vmatprep.mubr.f32.mxu0 0.0
    %333 = vmatmul.mubr.f32.gmra.mrb[0].mxu0 %v263
    %v334 = vpop.f32.mrb[0].mxu0
    %v335 = vadd.f32 %v260, %v334
    %v336 = vpop.f32.mrb[0].mxu0
    %337 = vmatprep.mubr.f32.mxu0 0.0
    %338 = vmatmul.mubr.f32.gmra.mrb[0].mxu0 %v266
    %v339 = vpop.f32.mrb[0].mxu0
    %v340 = vadd.f32 %v260, %v339
    %v341 = vpop.f32.mrb[0].mxu0
    %342 = vdwg.mxu0
    %v343 = vld [vmem:[%s7] sm:$0xff]
    %v344 = vld [vmem:[%s7 + $0x8] sm:$0xff]
    %v345 = vld [vmem:[%s8] sm:$0xff]
    %v346 = vld [vmem:[%s8 + $0x8] sm:$0xff]
    %v347 = vsel %vm158, %v343, 0.0
    %348 = vadd.xlane.f32.xlu0 %v347
    %v349 = vpop.xlane.xlu0 %348
    %v350 = vsel %vm158, %v344, 0.0
    %351 = vadd.xlane.f32.xlu0 %v350
    %v352 = vpop.xlane.xlu0 %351
    %v353 = vadd.f32 %v347, %v350
    %v354 = vrot.slane %v353, 4
    %v355 = vadd.f32 %v353, %v354
    %v356 = vrot.slane %v355, 2
    %v357 = vadd.f32 %v355, %v356
    %v358 = vrot.slane %v357, 1
    %v359 = vadd.f32 %v357, %v358
    %v360 = vrsqrt.pop %v349
    %v361 = vmul.f32 %v349, %v360
    %vm362 = vcmp.eq.f32.partialorder %v349, inf
    %v363 = vsel %vm362, %v349, %v361
    %vm364 = vcmp.eq.f32.partialorder %v349, 0.0
    %v365 = vand.u32 %v349, 2147483648
    %v366 = vsel %vm364, %v365, %v363
    %v367 = vrsqrt.pop %v352
    %v368 = vmul.f32 %v352, %v367
    %vm369 = vcmp.eq.f32.partialorder %v352, inf
    %v370 = vsel %vm369, %v352, %v368
    %vm371 = vcmp.eq.f32.partialorder %v352, 0.0
    %v372 = vand.u32 %v352, 2147483648
    %v373 = vsel %vm371, %v372, %v370
    %v374 = vadd.f32 %v366, 1e-10
    %v375 = vadd.f32 %v373, 1e-10
    %v376 = vrcp.pop %v374
    %v377 = vrcp.pop %v375
    %v378 = vrsqrt.pop %v359
    %v379 = vmul.f32 %v359, %v378
    %vm380 = vcmp.eq.f32.partialorder %v359, inf
    %v381 = vsel %vm380, %v359, %v379
    %vm382 = vcmp.eq.f32.partialorder %v359, 0.0
    %v383 = vand.u32 %v359, 2147483648
    %v384 = vsel %vm382, %v383, %v381
    %v385 = vadd.f32 %v384, 1e-10
    %v386 = vrcp.pop %v385
    %v387 = vmul.f32 %v376, %v343
    %v388 = vmul.f32 %v377, %v344
    %v389 = vmul.f32 %v387, %v386
    %v390 = vmul.f32 %v388, %v386
    %v391 = vpack.c.bf16 %v390, %v389
    %v392 = vld [vmem:[%s9] sm:$0xff]
    %v393 = vld [vmem:[%s9 + $0x8] sm:$0xff]
    %v394 = vld [vmem:[%s9 + $0x10] sm:$0xff]
    %v395 = vld [vmem:[%s9 + $0x18] sm:$0xff]
    %v396 = vld [vmem:[%s10] sm:$0x3]
    %v397 = vld [vmem:[%s11] sm:$0xff]
    %v398 = vld [vmem:[%s11 + $0x8] sm:$0xff]
    %v399 = vld [vmem:[%s11 + $0x10] sm:$0xff]
    %v400 = vld [vmem:[%s11 + $0x18] sm:$0xff]
    %v401 = vld [vmem:[%s11 + $0x20] sm:$0xff]
    %v402 = vld [vmem:[%s11 + $0x28] sm:$0xff]
    %v403 = vld [vmem:[%s11 + $0x30] sm:$0xff]
    %v404 = vld [vmem:[%s11 + $0x38] sm:$0xff]
    %v405 = vld [vmem:[%s11 + $0x40] sm:$0xff]
    %v406 = vld [vmem:[%s11 + $0x48] sm:$0xff]
    %v407 = vld [vmem:[%s11 + $0x50] sm:$0xff]
    %v408 = vld [vmem:[%s11 + $0x58] sm:$0xff]
    %v409 = vld [vmem:[%s11 + $0x60] sm:$0xff]
    %v410 = vld [vmem:[%s11 + $0x68] sm:$0xff]
    %v411 = vld [vmem:[%s11 + $0x70] sm:$0xff]
    %v412 = vld [vmem:[%s11 + $0x78] sm:$0xff]
    %v413 = vld [vmem:[%s11 + $0x80] sm:$0xff]
    %v414 = vld [vmem:[%s11 + $0x88] sm:$0xff]
    %v415 = vld [vmem:[%s11 + $0x90] sm:$0xff]
    %v416 = vld [vmem:[%s11 + $0x98] sm:$0xff]
    %v417 = vld [vmem:[%s11 + $0xa0] sm:$0xff]
    %v418 = vld [vmem:[%s11 + $0xa8] sm:$0xff]
    %v419 = vld [vmem:[%s11 + $0xb0] sm:$0xff]
    %v420 = vld [vmem:[%s11 + $0xb8] sm:$0xff]
    %v421 = vld [vmem:[%s11 + $0xc0] sm:$0xff]
    %v422 = vld [vmem:[%s11 + $0xc8] sm:$0xff]
    %v423 = vld [vmem:[%s11 + $0xd0] sm:$0xff]
    %v424 = vld [vmem:[%s11 + $0xd8] sm:$0xff]
    %v425 = vld [vmem:[%s11 + $0xe0] sm:$0xff]
    %v426 = vld [vmem:[%s11 + $0xe8] sm:$0xff]
    %v427 = vld [vmem:[%s11 + $0xf0] sm:$0xff]
    %v428 = vld [vmem:[%s11 + $0xf8] sm:$0xff]
    %v429 = vld [vmem:[%s12] sm:$0x1]
    %v431 = vlaneseq
    %v432 = vshrl.u32 %v431, 7
    %v433 = vsub.s32 0, %v432
    %v434 = vrot.slane %v396, %v433
    %v435 = vlaneseq
    %v436 = vshrl.u32 %v435, 7
    %v437 = vsub.s32 1, %v436
    %v438 = vrot.slane %v396, %v437
    %v442 = vsel %vm158, %v335, 0
    %v445 = vsel %vm158, %v340, 0
    %447 = vmatprep.subr.mxu0 %v393
    %448 = vmatpush1.msra.mxu0 %v392
    %449 = vmatprep.subr.mxu0 %v395
    %450 = vmatpush1.msra.mxu0 %v394
    %451 = vmatprep.subr.mxu0 0.0
    %452 = vmatpush1.msra.mxu0 0.0
    %453 = vmatprep.subr.mxu0 0.0
    %454 = vmatpush1.msra.mxu0 0.0
    %455 = vmatprep.subr.mxu0 0.0
    %456 = vmatpush1.msra.mxu0 0.0
    %457 = vmatprep.subr.mxu0 0.0
    %458 = vmatpush1.msra.mxu0 0.0
    %459 = vmatprep.subr.mxu0 0.0
    %460 = vmatpush1.msra.mxu0 0.0
    %461 = vmatprep.subr.mxu0 0.0
    %462 = vmatpush1.msra.mxu0 0.0
    %463 = vmatprep.subr.mxu0 0.0
    %464 = vmatpush1.msra.mxu0 0.0
    %465 = vmatprep.subr.mxu0 0.0
    %466 = vmatpush1.msra.mxu0 0.0
    %467 = vmatprep.subr.mxu0 0.0
    %468 = vmatpush1.msra.mxu0 0.0
    %469 = vmatprep.subr.mxu0 0.0
    %470 = vmatpush1.msra.mxu0 0.0
    %471 = vmatprep.subr.mxu0 0.0
    %472 = vmatpush1.msra.mxu0 0.0
    %473 = vmatprep.subr.mxu0 0.0
    %474 = vmatpush1.msra.mxu0 0.0
    %475 = vmatprep.subr.mxu0 0.0
    %476 = vmatpush1.msra.mxu0 0.0
    %477 = vmatprep.subr.mxu0 0.0
    %478 = vmatpush1.msra.mxu0 0.0
    %479 = vmatprep.subr.mxu0 0.0
    %480 = vmatpush1.msra.mxu0 0.0
    %481 = vmatprep.subr.mxu0 0.0
    %482 = vmatpush1.msra.mxu0 0.0
    %483 = vmatprep.subr.mxu0 0.0
    %484 = vmatpush1.msra.mxu0 0.0
    %485 = vmatprep.subr.mxu0 0.0
    %486 = vmatpush1.msra.mxu0 0.0
    %487 = vmatprep.subr.mxu0 0.0
    %488 = vmatpush1.msra.mxu0 0.0
    %489 = vmatprep.subr.mxu0 0.0
    %490 = vmatpush1.msra.mxu0 0.0
    %491 = vmatprep.subr.mxu0 0.0
    %492 = vmatpush1.msra.mxu0 0.0
    %493 = vmatprep.subr.mxu0 0.0
    %494 = vmatpush1.msra.mxu0 0.0
    %495 = vmatprep.subr.mxu0 0.0
    %496 = vmatpush1.msra.mxu0 0.0
    %497 = vmatprep.subr.mxu0 0.0
    %498 = vmatpush1.msra.mxu0 0.0
    %499 = vmatprep.subr.mxu0 0.0
    %500 = vmatpush1.msra.mxu0 0.0
    %501 = vmatprep.subr.mxu0 0.0
    %502 = vmatpush1.msra.mxu0 0.0
    %503 = vmatprep.subr.mxu0 0.0
    %504 = vmatpush1.msra.mxu0 0.0
    %505 = vmatprep.subr.mxu0 0.0
    %506 = vmatpush1.msra.mxu0 0.0
    %507 = vmatprep.subr.mxu0 0.0
    %508 = vmatpush1.msra.mxu0 0.0
    %509 = vmatprep.subr.mxu0 0.0
    %510 = vmatpush1.msra.mxu0 0.0
    %511 = vmatprep.mubr.f32.mxu0 0.0
    %512 = vmatmul.mubr.f32.gmra.mrb[0].mxu0 %v442
    %v513 = vpop.f32.mrb[0].mxu0
    %v514 = vadd.f32 %v434, %v513
    %v515 = vpop.f32.mrb[0].mxu0
    %v516 = vadd.f32 %v438, %v515
    %517 = vmatprep.mubr.f32.mxu0 0.0
    %518 = vmatmul.mubr.f32.gmra.mrb[0].mxu0 %v445
    %v519 = vpop.f32.mrb[0].mxu0
    %v520 = vadd.f32 %v434, %v519
    %v521 = vpop.f32.mrb[0].mxu0
    %v522 = vadd.f32 %v438, %v521
    %523 = vdwg.mxu0
    %v524 = vpack.c.bf16 %v520, %v514
    %v525 = vpack.c.bf16 %v522, %v516
    %526 = vxpose.xlu0.c.b16.start [1/8] %v391, 128
    %527 = vxpose.xlu0.c.b16.cont [2/8] 0, 128
    %528 = vxpose.xlu0.c.b16.cont [3/8] 0, 128
    %529 = vxpose.xlu0.c.b16.cont [4/8] 0, 128
    %530 = vxpose.xlu0.c.b16.cont [5/8] 0, 128
    %531 = vxpose.xlu0.c.b16.cont [6/8] 0, 128
    %532 = vxpose.xlu0.c.b16.cont [7/8] 0, 128
    %533 = vxpose.xlu0.c.b16.end [8/8] 0, 128
    %v534 = vpop.trf.xlu0
    %v535 = vpop.trf.xlu0
    %v536 = vpop.trf.xlu0
    %v537 = vpop.trf.xlu0
    %v538 = vpop.trf.xlu0
    %v539 = vpop.trf.xlu0
    %v540 = vpop.trf.xlu0
    %v541 = vpop.trf.xlu0
    %v543 = vsel %vm158, %v534, 0
    %545 = vmatprep.subr.bf16.mxu0 %v525
    %546 = vmatpush1.bf16.msra.mxu0 %v524
    %547 = vmatprep.subr.bf16.mxu0 0
    %548 = vmatpush1.bf16.msra.mxu0 0
    %549 = vmatprep.subr.bf16.mxu0 0
    %550 = vmatpush1.bf16.msra.mxu0 0
    %551 = vmatprep.subr.bf16.mxu0 0
    %552 = vmatpush1.bf16.msra.mxu0 0
    %553 = vmatprep.subr.bf16.mxu0 0
    %554 = vmatpush1.bf16.msra.mxu0 0
    %555 = vmatprep.subr.bf16.mxu0 0
    %556 = vmatpush1.bf16.msra.mxu0 0
    %557 = vmatprep.subr.bf16.mxu0 0
    %558 = vmatpush1.bf16.msra.mxu0 0
    %559 = vmatprep.subr.bf16.mxu0 0
    %560 = vmatpush1.bf16.msra.mxu0 0
    %561 = vmatprep.subr.bf16.mxu0 0
    %562 = vmatpush1.bf16.msra.mxu0 0
    %563 = vmatprep.subr.bf16.mxu0 0
    %564 = vmatpush1.bf16.msra.mxu0 0
    %565 = vmatprep.subr.bf16.mxu0 0
    %566 = vmatpush1.bf16.msra.mxu0 0
    %567 = vmatprep.subr.bf16.mxu0 0
    %568 = vmatpush1.bf16.msra.mxu0 0
    %569 = vmatprep.subr.bf16.mxu0 0
    %570 = vmatpush1.bf16.msra.mxu0 0
    %571 = vmatprep.subr.bf16.mxu0 0
    %572 = vmatpush1.bf16.msra.mxu0 0
    %573 = vmatprep.subr.bf16.mxu0 0
    %574 = vmatpush1.bf16.msra.mxu0 0
    %575 = vmatprep.subr.bf16.mxu0 0
    %576 = vmatpush1.bf16.msra.mxu0 0
    %577 = vmatprep.mubr.bf16.mxu0 0
    %578 = vmatmul.mubr.bf16.gmra.mrb[0].mxu0 %v543
    %v579 = vpop.f32.mrb[0].mxu0
    %v580 = vadd.f32 0.0, %v579
    %v581 = vpop.f32.mrb[0].mxu0
    %v582 = vadd.f32 0.0, %v581
    %v583 = vpop.f32.mrb[0].mxu0
    %v584 = vadd.f32 0.0, %v583
    %v585 = vpop.f32.mrb[0].mxu0
    %v586 = vadd.f32 0.0, %v585
    %587 = vdwg.mxu0
    %v588 = vpack.c.bf16 %v584, %v580
    %v589 = vpack.c.bf16 %v586, %v582
    %v591 = vsel %vm158, %v391, 0
    %593 = vmatprep.subr.bf16.mxu0 %v589
    %594 = vmatpush1.bf16.msra.mxu0 %v588
    %595 = vmatprep.subr.bf16.mxu0 0
    %596 = vmatpush1.bf16.msra.mxu0 0
    %597 = vmatprep.subr.bf16.mxu0 0
    %598 = vmatpush1.bf16.msra.mxu0 0
    %599 = vmatprep.subr.bf16.mxu0 0
    %600 = vmatpush1.bf16.msra.mxu0 0
    %601 = vmatprep.subr.bf16.mxu0 0
    %602 = vmatpush1.bf16.msra.mxu0 0
    %603 = vmatprep.subr.bf16.mxu0 0
    %604 = vmatpush1.bf16.msra.mxu0 0
    %605 = vmatprep.subr.bf16.mxu0 0
    %606 = vmatpush1.bf16.msra.mxu0 0
    %607 = vmatprep.subr.bf16.mxu0 0
    %608 = vmatpush1.bf16.msra.mxu0 0
    %609 = vmatprep.subr.bf16.mxu0 0
    %610 = vmatpush1.bf16.msra.mxu0 0
    %611 = vmatprep.subr.bf16.mxu0 0
    %612 = vmatpush1.bf16.msra.mxu0 0
    %613 = vmatprep.subr.bf16.mxu0 0
    %614 = vmatpush1.bf16.msra.mxu0 0
    %615 = vmatprep.subr.bf16.mxu0 0
    %616 = vmatpush1.bf16.msra.mxu0 0
    %617 = vmatprep.subr.bf16.mxu0 0
    %618 = vmatpush1.bf16.msra.mxu0 0
    %619 = vmatprep.subr.bf16.mxu0 0
    %620 = vmatpush1.bf16.msra.mxu0 0
    %621 = vmatprep.subr.bf16.mxu0 0
    %622 = vmatpush1.bf16.msra.mxu0 0
    %623 = vmatprep.subr.bf16.mxu0 0
    %624 = vmatpush1.bf16.msra.mxu0 0
    %625 = vmatprep.mubr.bf16.mxu0 0
    %626 = vmatmul.mubr.bf16.gmra.mrb[0].mxu0 %v591
    %v627 = vpop.f32.mrb[0].mxu0
    %v628 = vadd.f32 0.0, %v627
    %v629 = vpop.f32.mrb[0].mxu0
    %v630 = vadd.f32 0.0, %v629
    %v631 = vpop.f32.mrb[0].mxu0
    %v632 = vadd.f32 0.0, %v631
    %v633 = vpop.f32.mrb[0].mxu0
    %v634 = vadd.f32 0.0, %v633
    %635 = vdwg.mxu0
    %v636 = vmax.f32 %v628, 0.0
    %v637 = vmax.f32 %v630, 0.0
    %v638 = vmax.f32 %v632, 0.0
    %v639 = vmax.f32 %v634, 0.0
    %v641 = vlaneseq
    %v642 = vshrl.u32 %v641, 7
    %v643 = vsub.s32 0, %v642
    %v644 = vrot.slane %v429, %v643
    %646 = vmatprep.subr.mxu0 0.0
    %647 = vmatpush1.msra.mxu0 %v397
    %648 = vmatprep.subr.mxu0 0.0
    %649 = vmatpush1.msra.mxu0 %v398
    %650 = vmatprep.subr.mxu0 0.0
    %651 = vmatpush1.msra.mxu0 %v399
    %652 = vmatprep.subr.mxu0 0.0
    %653 = vmatpush1.msra.mxu0 %v400
    %654 = vmatprep.subr.mxu0 0.0
    %655 = vmatpush1.msra.mxu0 %v401
    %656 = vmatprep.subr.mxu0 0.0
    %657 = vmatpush1.msra.mxu0 %v402
    %658 = vmatprep.subr.mxu0 0.0
    %659 = vmatpush1.msra.mxu0 %v403
    %660 = vmatprep.subr.mxu0 0.0
    %661 = vmatpush1.msra.mxu0 %v404
    %662 = vmatprep.subr.mxu0 0.0
    %663 = vmatpush1.msra.mxu0 %v405
    %664 = vmatprep.subr.mxu0 0.0
    %665 = vmatpush1.msra.mxu0 %v406
    %666 = vmatprep.subr.mxu0 0.0
    %667 = vmatpush1.msra.mxu0 %v407
    %668 = vmatprep.subr.mxu0 0.0
    %669 = vmatpush1.msra.mxu0 %v408
    %670 = vmatprep.subr.mxu0 0.0
    %671 = vmatpush1.msra.mxu0 %v409
    %672 = vmatprep.subr.mxu0 0.0
    %673 = vmatpush1.msra.mxu0 %v410
    %674 = vmatprep.subr.mxu0 0.0
    %675 = vmatpush1.msra.mxu0 %v411
    %676 = vmatprep.subr.mxu0 0.0
    %677 = vmatpush1.msra.mxu0 %v412
    %678 = vmatprep.subr.mxu0 0.0
    %679 = vmatpush1.msra.mxu0 %v413
    %680 = vmatprep.subr.mxu0 0.0
    %681 = vmatpush1.msra.mxu0 %v414
    %682 = vmatprep.subr.mxu0 0.0
    %683 = vmatpush1.msra.mxu0 %v415
    %684 = vmatprep.subr.mxu0 0.0
    %685 = vmatpush1.msra.mxu0 %v416
    %686 = vmatprep.subr.mxu0 0.0
    %687 = vmatpush1.msra.mxu0 %v417
    %688 = vmatprep.subr.mxu0 0.0
    %689 = vmatpush1.msra.mxu0 %v418
    %690 = vmatprep.subr.mxu0 0.0
    %691 = vmatpush1.msra.mxu0 %v419
    %692 = vmatprep.subr.mxu0 0.0
    %693 = vmatpush1.msra.mxu0 %v420
    %694 = vmatprep.subr.mxu0 0.0
    %695 = vmatpush1.msra.mxu0 %v421
    %696 = vmatprep.subr.mxu0 0.0
    %697 = vmatpush1.msra.mxu0 %v422
    %698 = vmatprep.subr.mxu0 0.0
    %699 = vmatpush1.msra.mxu0 %v423
    %700 = vmatprep.subr.mxu0 0.0
    %701 = vmatpush1.msra.mxu0 %v424
    %702 = vmatprep.subr.mxu0 0.0
    %703 = vmatpush1.msra.mxu0 %v425
    %704 = vmatprep.subr.mxu0 0.0
    %705 = vmatpush1.msra.mxu0 %v426
    %706 = vmatprep.subr.mxu0 0.0
    %707 = vmatpush1.msra.mxu0 %v427
    %708 = vmatprep.subr.mxu0 0.0
    %709 = vmatpush1.msra.mxu0 %v428
    %710 = vmatprep.mubr.f32.mxu0 %v637
    %711 = vmatmul.mubr.f32.gmra.mrb[0].mxu0 %v636
    %v712 = vpop.f32.mrb[0].mxu0
    %v713 = vadd.f32 %v644, %v712
    %v714 = vpop.f32.mrb[0].mxu0
    %715 = vmatprep.mubr.f32.mxu0 %v639
    %716 = vmatmul.mubr.f32.gmra.mrb[0].mxu0 %v638
    %v717 = vpop.f32.mrb[0].mxu0
    %v718 = vadd.f32 %v644, %v717
    %v719 = vpop.f32.mrb[0].mxu0
    %720 = vdwg.mxu0
    %v721 = vmax.f32 %v713, 0.0
    %v722 = vmax.f32 %v718, 0.0
    %v723 = vld [vmem:[%s13] sm:$0xff]
    %v724 = vld [vmem:[%s13 + $0x8] sm:$0xff]
    %v725 = vld [vmem:[%s13 + $0x10] sm:$0xff]
    %v726 = vld [vmem:[%s13 + $0x18] sm:$0xff]
    %v727 = vld [vmem:[%s14] sm:$0x3]
    %v728 = vld [vmem:[%s15] sm:$0xff]
    %v729 = vld [vmem:[%s15 + $0x8] sm:$0xff]
    %v730 = vld [vmem:[%s15 + $0x10] sm:$0xff]
    %v731 = vld [vmem:[%s15 + $0x18] sm:$0xff]
    %v732 = vld [vmem:[%s15 + $0x20] sm:$0xff]
    %v733 = vld [vmem:[%s15 + $0x28] sm:$0xff]
    %v734 = vld [vmem:[%s15 + $0x30] sm:$0xff]
    %v735 = vld [vmem:[%s15 + $0x38] sm:$0xff]
    %v736 = vld [vmem:[%s15 + $0x40] sm:$0xff]
    %v737 = vld [vmem:[%s15 + $0x48] sm:$0xff]
    %v738 = vld [vmem:[%s15 + $0x50] sm:$0xff]
    %v739 = vld [vmem:[%s15 + $0x58] sm:$0xff]
    %v740 = vld [vmem:[%s15 + $0x60] sm:$0xff]
    %v741 = vld [vmem:[%s15 + $0x68] sm:$0xff]
    %v742 = vld [vmem:[%s15 + $0x70] sm:$0xff]
    %v743 = vld [vmem:[%s15 + $0x78] sm:$0xff]
    %v744 = vld [vmem:[%s15 + $0x80] sm:$0xff]
    %v745 = vld [vmem:[%s15 + $0x88] sm:$0xff]
    %v746 = vld [vmem:[%s15 + $0x90] sm:$0xff]
    %v747 = vld [vmem:[%s15 + $0x98] sm:$0xff]
    %v748 = vld [vmem:[%s15 + $0xa0] sm:$0xff]
    %v749 = vld [vmem:[%s15 + $0xa8] sm:$0xff]
    %v750 = vld [vmem:[%s15 + $0xb0] sm:$0xff]
    %v751 = vld [vmem:[%s15 + $0xb8] sm:$0xff]
    %v752 = vld [vmem:[%s15 + $0xc0] sm:$0xff]
    %v753 = vld [vmem:[%s15 + $0xc8] sm:$0xff]
    %v754 = vld [vmem:[%s15 + $0xd0] sm:$0xff]
    %v755 = vld [vmem:[%s15 + $0xd8] sm:$0xff]
    %v756 = vld [vmem:[%s15 + $0xe0] sm:$0xff]
    %v757 = vld [vmem:[%s15 + $0xe8] sm:$0xff]
    %v758 = vld [vmem:[%s15 + $0xf0] sm:$0xff]
    %v759 = vld [vmem:[%s15 + $0xf8] sm:$0xff]
    %v760 = vld [vmem:[%s16] sm:$0x1]
    %v762 = vlaneseq
    %v763 = vshrl.u32 %v762, 7
    %v764 = vsub.s32 0, %v763
    %v765 = vrot.slane %v727, %v764
    %v766 = vlaneseq
    %v767 = vshrl.u32 %v766, 7
    %v768 = vsub.s32 1, %v767
    %v769 = vrot.slane %v727, %v768
    %v773 = vsel %vm158, %v721, 0
    %v776 = vsel %vm158, %v722, 0
    %778 = vmatprep.subr.mxu0 %v724
    %779 = vmatpush1.msra.mxu0 %v723
    %780 = vmatprep.subr.mxu0 %v726
    %781 = vmatpush1.msra.mxu0 %v725
    %782 = vmatprep.subr.mxu0 0.0
    %783 = vmatpush1.msra.mxu0 0.0
    %784 = vmatprep.subr.mxu0 0.0
    %785 = vmatpush1.msra.mxu0 0.0
    %786 = vmatprep.subr.mxu0 0.0
    %787 = vmatpush1.msra.mxu0 0.0
    %788 = vmatprep.subr.mxu0 0.0
    %789 = vmatpush1.msra.mxu0 0.0
    %790 = vmatprep.subr.mxu0 0.0
    %791 = vmatpush1.msra.mxu0 0.0
    %792 = vmatprep.subr.mxu0 0.0
    %793 = vmatpush1.msra.mxu0 0.0
    %794 = vmatprep.subr.mxu0 0.0
    %795 = vmatpush1.msra.mxu0 0.0
    %796 = vmatprep.subr.mxu0 0.0
    %797 = vmatpush1.msra.mxu0 0.0
    %798 = vmatprep.subr.mxu0 0.0
    %799 = vmatpush1.msra.mxu0 0.0
    %800 = vmatprep.subr.mxu0 0.0
    %801 = vmatpush1.msra.mxu0 0.0
    %802 = vmatprep.subr.mxu0 0.0
    %803 = vmatpush1.msra.mxu0 0.0
    %804 = vmatprep.subr.mxu0 0.0
    %805 = vmatpush1.msra.mxu0 0.0
    %806 = vmatprep.subr.mxu0 0.0
    %807 = vmatpush1.msra.mxu0 0.0
    %808 = vmatprep.subr.mxu0 0.0
    %809 = vmatpush1.msra.mxu0 0.0
    %810 = vmatprep.subr.mxu0 0.0
    %811 = vmatpush1.msra.mxu0 0.0
    %812 = vmatprep.subr.mxu0 0.0
    %813 = vmatpush1.msra.mxu0 0.0
    %814 = vmatprep.subr.mxu0 0.0
    %815 = vmatpush1.msra.mxu0 0.0
    %816 = vmatprep.subr.mxu0 0.0
    %817 = vmatpush1.msra.mxu0 0.0
    %818 = vmatprep.subr.mxu0 0.0
    %819 = vmatpush1.msra.mxu0 0.0
    %820 = vmatprep.subr.mxu0 0.0
    %821 = vmatpush1.msra.mxu0 0.0
    %822 = vmatprep.subr.mxu0 0.0
    %823 = vmatpush1.msra.mxu0 0.0
    %824 = vmatprep.subr.mxu0 0.0
    %825 = vmatpush1.msra.mxu0 0.0
    %826 = vmatprep.subr.mxu0 0.0
    %827 = vmatpush1.msra.mxu0 0.0
    %828 = vmatprep.subr.mxu0 0.0
    %829 = vmatpush1.msra.mxu0 0.0
    %830 = vmatprep.subr.mxu0 0.0
    %831 = vmatpush1.msra.mxu0 0.0
    %832 = vmatprep.subr.mxu0 0.0
    %833 = vmatpush1.msra.mxu0 0.0
    %834 = vmatprep.subr.mxu0 0.0
    %835 = vmatpush1.msra.mxu0 0.0
    %836 = vmatprep.subr.mxu0 0.0
    %837 = vmatpush1.msra.mxu0 0.0
    %838 = vmatprep.subr.mxu0 0.0
    %839 = vmatpush1.msra.mxu0 0.0
    %840 = vmatprep.subr.mxu0 0.0
    %841 = vmatpush1.msra.mxu0 0.0
    %842 = vmatprep.mubr.f32.mxu0 0.0
    %843 = vmatmul.mubr.f32.gmra.mrb[0].mxu0 %v773
    %v844 = vpop.f32.mrb[0].mxu0
    %v845 = vadd.f32 %v765, %v844
    %v846 = vpop.f32.mrb[0].mxu0
    %v847 = vadd.f32 %v769, %v846
    %848 = vmatprep.mubr.f32.mxu0 0.0
    %849 = vmatmul.mubr.f32.gmra.mrb[0].mxu0 %v776
    %v850 = vpop.f32.mrb[0].mxu0
    %v851 = vadd.f32 %v765, %v850
    %v852 = vpop.f32.mrb[0].mxu0
    %v853 = vadd.f32 %v769, %v852
    %854 = vdwg.mxu0
    %v855 = vpack.c.bf16 %v851, %v845
    %v856 = vpack.c.bf16 %v853, %v847
    %857 = vmatprep.subr.bf16.mxu0 %v856
    %858 = vmatpush1.bf16.msra.mxu0 %v855
    %859 = vmatprep.subr.bf16.mxu0 0
    %860 = vmatpush1.bf16.msra.mxu0 0
    %861 = vmatprep.subr.bf16.mxu0 0
    %862 = vmatpush1.bf16.msra.mxu0 0
    %863 = vmatprep.subr.bf16.mxu0 0
    %864 = vmatpush1.bf16.msra.mxu0 0
    %865 = vmatprep.subr.bf16.mxu0 0
    %866 = vmatpush1.bf16.msra.mxu0 0
    %867 = vmatprep.subr.bf16.mxu0 0
    %868 = vmatpush1.bf16.msra.mxu0 0
    %869 = vmatprep.subr.bf16.mxu0 0
    %870 = vmatpush1.bf16.msra.mxu0 0
    %871 = vmatprep.subr.bf16.mxu0 0
    %872 = vmatpush1.bf16.msra.mxu0 0
    %873 = vmatprep.subr.bf16.mxu0 0
    %874 = vmatpush1.bf16.msra.mxu0 0
    %875 = vmatprep.subr.bf16.mxu0 0
    %876 = vmatpush1.bf16.msra.mxu0 0
    %877 = vmatprep.subr.bf16.mxu0 0
    %878 = vmatpush1.bf16.msra.mxu0 0
    %879 = vmatprep.subr.bf16.mxu0 0
    %880 = vmatpush1.bf16.msra.mxu0 0
    %881 = vmatprep.subr.bf16.mxu0 0
    %882 = vmatpush1.bf16.msra.mxu0 0
    %883 = vmatprep.subr.bf16.mxu0 0
    %884 = vmatpush1.bf16.msra.mxu0 0
    %885 = vmatprep.subr.bf16.mxu0 0
    %886 = vmatpush1.bf16.msra.mxu0 0
    %887 = vmatprep.subr.bf16.mxu0 0
    %888 = vmatpush1.bf16.msra.mxu0 0
    %889 = vmatprep.mubr.bf16.mxu0 0
    %890 = vmatmul.mubr.bf16.gmra.mrb[0].mxu0 %v543
    %v891 = vpop.f32.mrb[0].mxu0
    %v892 = vadd.f32 0.0, %v891
    %v893 = vpop.f32.mrb[0].mxu0
    %v894 = vadd.f32 0.0, %v893
    %v895 = vpop.f32.mrb[0].mxu0
    %v896 = vadd.f32 0.0, %v895
    %v897 = vpop.f32.mrb[0].mxu0
    %v898 = vadd.f32 0.0, %v897
    %899 = vdwg.mxu0
    %v900 = vpack.c.bf16 %v896, %v892
    %v901 = vpack.c.bf16 %v898, %v894
    %902 = vmatprep.subr.bf16.mxu0 %v901
    %903 = vmatpush1.bf16.msra.mxu0 %v900
    %904 = vmatprep.subr.bf16.mxu0 0
    %905 = vmatpush1.bf16.msra.mxu0 0
    %906 = vmatprep.subr.bf16.mxu0 0
    %907 = vmatpush1.bf16.msra.mxu0 0
    %908 = vmatprep.subr.bf16.mxu0 0
    %909 = vmatpush1.bf16.msra.mxu0 0
    %910 = vmatprep.subr.bf16.mxu0 0
    %911 = vmatpush1.bf16.msra.mxu0 0
    %912 = vmatprep.subr.bf16.mxu0 0
    %913 = vmatpush1.bf16.msra.mxu0 0
    %914 = vmatprep.subr.bf16.mxu0 0
    %915 = vmatpush1.bf16.msra.mxu0 0
    %916 = vmatprep.subr.bf16.mxu0 0
    %917 = vmatpush1.bf16.msra.mxu0 0
    %918 = vmatprep.subr.bf16.mxu0 0
    %919 = vmatpush1.bf16.msra.mxu0 0
    %920 = vmatprep.subr.bf16.mxu0 0
    %921 = vmatpush1.bf16.msra.mxu0 0
    %922 = vmatprep.subr.bf16.mxu0 0
    %923 = vmatpush1.bf16.msra.mxu0 0
    %924 = vmatprep.subr.bf16.mxu0 0
    %925 = vmatpush1.bf16.msra.mxu0 0
    %926 = vmatprep.subr.bf16.mxu0 0
    %927 = vmatpush1.bf16.msra.mxu0 0
    %928 = vmatprep.subr.bf16.mxu0 0
    %929 = vmatpush1.bf16.msra.mxu0 0
    %930 = vmatprep.subr.bf16.mxu0 0
    %931 = vmatpush1.bf16.msra.mxu0 0
    %932 = vmatprep.subr.bf16.mxu0 0
    %933 = vmatpush1.bf16.msra.mxu0 0
    %934 = vmatprep.mubr.bf16.mxu0 0
    %935 = vmatmul.mubr.bf16.gmra.mrb[0].mxu0 %v591
    %v936 = vpop.f32.mrb[0].mxu0
    %v937 = vadd.f32 0.0, %v936
    %v938 = vpop.f32.mrb[0].mxu0
    %v939 = vadd.f32 0.0, %v938
    %v940 = vpop.f32.mrb[0].mxu0
    %v941 = vadd.f32 0.0, %v940
    %v942 = vpop.f32.mrb[0].mxu0
    %v943 = vadd.f32 0.0, %v942
    %944 = vdwg.mxu0
    %v945 = vmax.f32 %v937, 0.0
    %v946 = vmax.f32 %v939, 0.0
    %v947 = vmax.f32 %v941, 0.0
    %v948 = vmax.f32 %v943, 0.0
    %v950 = vlaneseq
    %v951 = vshrl.u32 %v950, 7
    %v952 = vsub.s32 0, %v951
    %v953 = vrot.slane %v760, %v952
    %955 = vmatprep.subr.mxu0 0.0
    %956 = vmatpush1.msra.mxu0 %v728
    %957 = vmatprep.subr.mxu0 0.0
    %958 = vmatpush1.msra.mxu0 %v729
    %959 = vmatprep.subr.mxu0 0.0
    %960 = vmatpush1.msra.mxu0 %v730
    %961 = vmatprep.subr.mxu0 0.0
    %962 = vmatpush1.msra.mxu0 %v731
    %963 = vmatprep.subr.mxu0 0.0
    %964 = vmatpush1.msra.mxu0 %v732
    %965 = vmatprep.subr.mxu0 0.0
    %966 = vmatpush1.msra.mxu0 %v733
    %967 = vmatprep.subr.mxu0 0.0
    %968 = vmatpush1.msra.mxu0 %v734
    %969 = vmatprep.subr.mxu0 0.0
    %970 = vmatpush1.msra.mxu0 %v735
    %971 = vmatprep.subr.mxu0 0.0
    %972 = vmatpush1.msra.mxu0 %v736
    %973 = vmatprep.subr.mxu0 0.0
    %974 = vmatpush1.msra.mxu0 %v737
    %975 = vmatprep.subr.mxu0 0.0
    %976 = vmatpush1.msra.mxu0 %v738
    %977 = vmatprep.subr.mxu0 0.0
    %978 = vmatpush1.msra.mxu0 %v739
    %979 = vmatprep.subr.mxu0 0.0
    %980 = vmatpush1.msra.mxu0 %v740
    %981 = vmatprep.subr.mxu0 0.0
    %982 = vmatpush1.msra.mxu0 %v741
    %983 = vmatprep.subr.mxu0 0.0
    %984 = vmatpush1.msra.mxu0 %v742
    %985 = vmatprep.subr.mxu0 0.0
    %986 = vmatpush1.msra.mxu0 %v743
    %987 = vmatprep.subr.mxu0 0.0
    %988 = vmatpush1.msra.mxu0 %v744
    %989 = vmatprep.subr.mxu0 0.0
    %990 = vmatpush1.msra.mxu0 %v745
    %991 = vmatprep.subr.mxu0 0.0
    %992 = vmatpush1.msra.mxu0 %v746
    %993 = vmatprep.subr.mxu0 0.0
    %994 = vmatpush1.msra.mxu0 %v747
    %995 = vmatprep.subr.mxu0 0.0
    %996 = vmatpush1.msra.mxu0 %v748
    %997 = vmatprep.subr.mxu0 0.0
    %998 = vmatpush1.msra.mxu0 %v749
    %999 = vmatprep.subr.mxu0 0.0
    %1000 = vmatpush1.msra.mxu0 %v750
    %1001 = vmatprep.subr.mxu0 0.0
    %1002 = vmatpush1.msra.mxu0 %v751
    %1003 = vmatprep.subr.mxu0 0.0
    %1004 = vmatpush1.msra.mxu0 %v752
    %1005 = vmatprep.subr.mxu0 0.0
    %1006 = vmatpush1.msra.mxu0 %v753
    %1007 = vmatprep.subr.mxu0 0.0
    %1008 = vmatpush1.msra.mxu0 %v754
    %1009 = vmatprep.subr.mxu0 0.0
    %1010 = vmatpush1.msra.mxu0 %v755
    %1011 = vmatprep.subr.mxu0 0.0
    %1012 = vmatpush1.msra.mxu0 %v756
    %1013 = vmatprep.subr.mxu0 0.0
    %1014 = vmatpush1.msra.mxu0 %v757
    %1015 = vmatprep.subr.mxu0 0.0
    %1016 = vmatpush1.msra.mxu0 %v758
    %1017 = vmatprep.subr.mxu0 0.0
    %1018 = vmatpush1.msra.mxu0 %v759
    %1019 = vmatprep.mubr.f32.mxu0 %v946
    %1020 = vmatmul.mubr.f32.gmra.mrb[0].mxu0 %v945
    %v1021 = vpop.f32.mrb[0].mxu0
    %v1022 = vadd.f32 %v953, %v1021
    %v1023 = vpop.f32.mrb[0].mxu0
    %1024 = vmatprep.mubr.f32.mxu0 %v948
    %1025 = vmatmul.mubr.f32.gmra.mrb[0].mxu0 %v947
    %v1026 = vpop.f32.mrb[0].mxu0
    %v1027 = vadd.f32 %v953, %v1026
    %v1028 = vpop.f32.mrb[0].mxu0
    %1029 = vdwg.mxu0
    %v1030 = vadd.f32 %v1022, %v345
    %v1031 = vadd.f32 %v1027, %v346
    %v1032 = vmul.f32 %v1030, %v1030
    %v1033 = vmul.f32 %v1031, %v1031
    %v1034 = vsel %vm158, %v1032, 0.0
    %1035 = vadd.xlane.f32.xlu0 %v1034
    %v1036 = vpop.xlane.xlu0 %1035
    %v1037 = vsel %vm158, %v1033, 0.0
    %1038 = vadd.xlane.f32.xlu0 %v1037
    %v1039 = vpop.xlane.xlu0 %1038
    %v1040 = vmax.f32 %v1036, 1e-24
    %v1041 = vmax.f32 %v1039, 1e-24
    %v1042 = vrsqrt.pop %v1040
    %v1043 = vrsqrt.pop %v1041
    %v1044 = vmul.f32 %v1030, %v1042
    %v1045 = vmul.f32 %v1031, %v1043
    %v1046 = vpack.c.bf16 %v1045, %v1044
    %v1048 = vsel %vm158, %v1046, 0
    %1050 = vmatprep.subr.bf16.mxu0 0
    %1051 = vmatpush1.bf16.xpose.msra.mxu0 %v1048
    %1052 = vmatprep.subr.bf16.mxu0 0
    %1053 = vmatpush1.bf16.xpose.msra.mxu0 0
    %1054 = vmatprep.subr.bf16.mxu0 0
    %1055 = vmatpush1.bf16.xpose.msra.mxu0 0
    %1056 = vmatprep.subr.bf16.mxu0 0
    %1057 = vmatpush1.bf16.xpose.msra.mxu0 0
    %1058 = vmatprep.subr.bf16.mxu0 0
    %1059 = vmatpush1.bf16.xpose.msra.mxu0 0
    %1060 = vmatprep.subr.bf16.mxu0 0
    %1061 = vmatpush1.bf16.xpose.msra.mxu0 0
    %1062 = vmatprep.subr.bf16.mxu0 0
    %1063 = vmatpush1.bf16.xpose.msra.mxu0 0
    %1064 = vmatprep.subr.bf16.mxu0 0
    %1065 = vmatpush1.bf16.xpose.msra.mxu0 0
    %1066 = vmatprep.subr.bf16.mxu0 0
    %1067 = vmatpush1.bf16.xpose.msra.mxu0 0
    %1068 = vmatprep.subr.bf16.mxu0 0
    %1069 = vmatpush1.bf16.xpose.msra.mxu0 0
    %1070 = vmatprep.subr.bf16.mxu0 0
    %1071 = vmatpush1.bf16.xpose.msra.mxu0 0
    %1072 = vmatprep.subr.bf16.mxu0 0
    %1073 = vmatpush1.bf16.xpose.msra.mxu0 0
    %1074 = vmatprep.subr.bf16.mxu0 0
    %1075 = vmatpush1.bf16.xpose.msra.mxu0 0
    %1076 = vmatprep.subr.bf16.mxu0 0
    %1077 = vmatpush1.bf16.xpose.msra.mxu0 0
    %1078 = vmatprep.subr.bf16.mxu0 0
    %1079 = vmatpush1.bf16.xpose.msra.mxu0 0
    %1080 = vmatprep.subr.bf16.mxu0 0
    %1081 = vmatpush1.bf16.xpose.msra.mxu0 0
    %1082 = vmatprep.mubr.bf16.mxu0 0
    %1083 = vmatmul.mubr.bf16.gmra.mrb[0].mxu0 %v1048
    %v1084 = vpop.f32.mrb[0].mxu0
    %v1085 = vadd.f32 0.0, %v1084
    %v1086 = vpop.f32.mrb[0].mxu0
    %v1087 = vpop.f32.mrb[0].mxu0
    %v1088 = vadd.f32 0.0, %v1087
    %v1089 = vpop.f32.mrb[0].mxu0
    %1090 = vdwg.mxu0
    %v1091 = vsel %vm158, %v1085, -inf
    %1092 = vmax.xlane.f32.xlu0 %v1091
    %v1093 = vpop.xlane.xlu0 %1092
    %v1094 = vsel %vm158, %v1088, -inf
    %1095 = vmax.xlane.f32.xlu0 %v1094
    %v1096 = vpop.xlane.xlu0 %1095
    %vm1097 = vcmp.ge.f32.partialorder %v1085, %v1093
    %vm1098 = vcmp.ge.f32.partialorder %v1088, %v1096
    %v1099 = vsel %vm1097, -inf, %v1085
    %v1100 = vsel %vm1098, -inf, %v1088
    %v1101 = vsel %vm158, %v1099, -inf
    %1102 = vmax.xlane.f32.xlu0 %v1101
    %v1103 = vpop.xlane.xlu0 %1102
    %v1104 = vsel %vm158, %v1100, -inf
    %1105 = vmax.xlane.f32.xlu0 %v1104
    %v1106 = vpop.xlane.xlu0 %1105
    %vm1107 = vcmp.ge.f32.partialorder %v1099, %v1103
    %vm1108 = vcmp.ge.f32.partialorder %v1100, %v1106
    %v1109 = vsel %vm1107, -inf, %v1099
    %v1110 = vsel %vm1108, -inf, %v1100
    %v1111 = vsel %vm158, %v1109, -inf
    %1112 = vmax.xlane.f32.xlu0 %v1111
    %v1113 = vpop.xlane.xlu0 %1112
    %v1114 = vsel %vm158, %v1110, -inf
    %1115 = vmax.xlane.f32.xlu0 %v1114
    %v1116 = vpop.xlane.xlu0 %1115
    %vm1117 = vcmp.ge.f32.partialorder %v1109, %v1113
    %vm1118 = vcmp.ge.f32.partialorder %v1110, %v1116
    %v1119 = vsel %vm1117, -inf, %v1109
    %v1120 = vsel %vm1118, -inf, %v1110
    %v1121 = vsel %vm158, %v1119, -inf
    %1122 = vmax.xlane.f32.xlu0 %v1121
    %v1123 = vpop.xlane.xlu0 %1122
    %v1124 = vsel %vm158, %v1120, -inf
    %1125 = vmax.xlane.f32.xlu0 %v1124
    %v1126 = vpop.xlane.xlu0 %1125
    %vm1127 = vcmp.ge.f32.partialorder %v1119, %v1123
    %vm1128 = vcmp.ge.f32.partialorder %v1120, %v1126
    %v1129 = vsel %vm1127, -inf, %v1119
    %v1130 = vsel %vm1128, -inf, %v1120
    %v1131 = vsel %vm158, %v1129, -inf
    %1132 = vmax.xlane.f32.xlu0 %v1131
    %v1133 = vpop.xlane.xlu0 %1132
    %v1134 = vsel %vm158, %v1130, -inf
    %1135 = vmax.xlane.f32.xlu0 %v1134
    %v1136 = vpop.xlane.xlu0 %1135
    %v1137 = vlaneseq
    %v1138 = vshrl.u32 %v1137, 7
    %v1139 = vadd.s32 %v1138, 8
    %v1140 = vlaneseq
    %v1141 = vand.u32 %v1140, 127
    %vm1142 = vcmp.eq.s32.totalorder %v1138, %v1141
    %vm1143 = vcmp.eq.s32.totalorder %v1139, %v1141
    %v1144 = vsel %vm1142, %v1133, 0.0
    %v1145 = vsel %vm1143, %v1136, 0.0
    %v1146 = vsel %vm158, %v1144, 0.0
    %v1147 = vsel %vm158, %v1145, 0.0
    %v1148 = vadd.f32 %v1146, %v1147
    %v1149 = vrot.slane %v1148, 4
    %v1150 = vadd.f32 %v1148, %v1149
    %v1151 = vrot.slane %v1150, 2
    %v1152 = vadd.f32 %v1150, %v1151
    %v1153 = vrot.slane %v1152, 1
    %v1154 = vadd.f32 %v1152, %v1153
    %vm1155 = vcmp.gt.f32.partialorder %v1085, 0.05
    %vm1156 = vcmp.gt.f32.partialorder %v1088, 0.05
    %v1157 = vsel %vm1155, 1, 0
    %v1158 = vsel %vm1156, 1, 0
    %v1159 = vcvt.s32.f32 %v1157
    %v1160 = vcvt.s32.f32 %v1158
    %vm1161 = vcmp.ge.f32.partialorder %v1085, %v1133
    %vm1162 = vcmp.ge.f32.partialorder %v1088, %v1136
    %v1163 = vsel %vm1161, 1, 0
    %v1164 = vsel %vm1162, 1, 0
    %v1165 = vcvt.s32.f32 %v1163
    %v1166 = vcvt.s32.f32 %v1164
    %vm1167 = vcmp.ge.f32.partialorder %v1085, %v1154
    %vm1168 = vcmp.ge.f32.partialorder %v1088, %v1154
    %v1169 = vsel %vm1167, 1, 0
    %v1170 = vsel %vm1168, 1, 0
    %v1171 = vcvt.s32.f32 %v1169
    %v1172 = vcvt.s32.f32 %v1170
    %v1173 = vadd.f32 %v1165, %v1171
    %v1174 = vadd.f32 %v1166, %v1172
    %v1175 = vmul.f32 %v1159, %v1173
    %v1176 = vmul.f32 %v1160, %v1174
    %v1177 = vmul.f32 %v1085, 0.5
    %v1178 = vmul.f32 %v1088, 0.5
    %v1179 = vmul.f32 %v1177, %v1175
    %v1180 = vmul.f32 %v1178, %v1176
    %v1181 = vsel %vm158, %v1179, 0.0
    %1182 = vadd.xlane.f32.xlu0 %v1181
    %v1183 = vpop.xlane.xlu0 %1182
    %v1184 = vsel %vm158, %v1180, 0.0
    %1185 = vadd.xlane.f32.xlu0 %v1184
    %v1186 = vpop.xlane.xlu0 %1185
    %v1187 = vadd.f32 %v1181, %v1184
    %v1188 = vrot.slane %v1187, 4
    %v1189 = vadd.f32 %v1187, %v1188
    %v1190 = vrot.slane %v1189, 2
    %v1191 = vadd.f32 %v1189, %v1190
    %v1192 = vrot.slane %v1191, 1
    %v1193 = vadd.f32 %v1191, %v1192
    %v1194 = vrsqrt.pop %v1183
    %v1195 = vmul.f32 %v1183, %v1194
    %vm1196 = vcmp.eq.f32.partialorder %v1183, inf
    %v1197 = vsel %vm1196, %v1183, %v1195
    %vm1198 = vcmp.eq.f32.partialorder %v1183, 0.0
    %v1199 = vand.u32 %v1183, 2147483648
    %v1200 = vsel %vm1198, %v1199, %v1197
    %v1201 = vrsqrt.pop %v1186
    %v1202 = vmul.f32 %v1186, %v1201
    %vm1203 = vcmp.eq.f32.partialorder %v1186, inf
    %v1204 = vsel %vm1203, %v1186, %v1202
    %vm1205 = vcmp.eq.f32.partialorder %v1186, 0.0
    %v1206 = vand.u32 %v1186, 2147483648
    %v1207 = vsel %vm1205, %v1206, %v1204
    %v1208 = vadd.f32 %v1200, 1e-10
    %v1209 = vadd.f32 %v1207, 1e-10
    %v1210 = vrcp.pop %v1208
    %v1211 = vrcp.pop %v1209
    %v1212 = vrsqrt.pop %v1193
    %v1213 = vmul.f32 %v1193, %v1212
    %vm1214 = vcmp.eq.f32.partialorder %v1193, inf
    %v1215 = vsel %vm1214, %v1193, %v1213
    %vm1216 = vcmp.eq.f32.partialorder %v1193, 0.0
    %v1217 = vand.u32 %v1193, 2147483648
    %v1218 = vsel %vm1216, %v1217, %v1215
    %v1219 = vadd.f32 %v1218, 1e-10
    %v1220 = vrcp.pop %v1219
    %v1221 = vmul.f32 %v1210, %v1179
    %v1222 = vmul.f32 %v1211, %v1180
    %v1223 = vmul.f32 %v1221, %v1220
    %v1224 = vmul.f32 %v1222, %v1220
    %1225 = vst.msk [vmem:[#allocation2] sm:$0xff] %vm158, %v1223
    %1226 = vst.msk [vmem:[#allocation2 + $0x8] sm:$0xff] %vm158, %v1224
    %v1227 = vmul.f32 %v1223, 0.7
    %v1228 = vmul.f32 %v1224, 0.7
    %v1229 = vmul.f32 %v343, 0.3
    %v1230 = vmul.f32 %v344, 0.3
    %v1231 = vadd.f32 %v1227, %v1229
    %v1232 = vadd.f32 %v1228, %v1230
    %vm1233 = vcmp.lt.f32.partialorder %v1231, 0.002
    %vm1234 = vcmp.lt.f32.partialorder %v1232, 0.002
    %v1235 = vsel %vm1233, 0.0, %v1231
    %v1236 = vsel %vm1234, 0.0, %v1232
    %1237 = vst.msk [vmem:[#allocation4] sm:$0xff] %vm158, %v1235
    %1238 = vst.msk [vmem:[#allocation4 + $0x8] sm:$0xff] %vm158, %v1236
    // Predicated region
    $region70: #{_lambda_.5} parent=1 // pred_check
      _
    $region71: #{_lambda_.5} parent=1 // pred_check_branch
      %1240 = sbr.rel (0) target = $region73
    $region72: #{_lambda_.5} parent=1 // pred_region
      %s1242 = ssub.s32 256, 256
      %1243 = vsyncadd [#allocation3], %s1242
      %s1244 = sshll.u32 [#allocation2], 4
      %s1245 = int_to_ptr.vmem [resolvable:$true] %s1244
      %1250 = dma.vmem_to_hbm [thread:$0]  %s1245, 256, %s17, [#allocation3], 128, 128, 8
    $region73: #{_lambda_.5} parent=1 // pred_fallthru
      _
    // Predicated region
    $region74: #{_lambda_.5} parent=1 // pred_check
      _
    $region75: #{_lambda_.5} parent=1 // pred_check_branch
      %1252 = sbr.rel (0) target = $region77
    $region76: #{_lambda_.5} parent=1 // pred_region
      %s1254 = ssub.s32 256, 256
      %1255 = vsyncadd [#allocation5], %s1254
      %s1256 = sshll.u32 [#allocation4], 4
      %s1257 = int_to_ptr.vmem [resolvable:$true] %s1256
      %1262 = dma.vmem_to_hbm [thread:$0]  %s1257, 256, %s18, [#allocation5], 128, 128, 8
    $region77: #{_lambda_.5} parent=1 // pred_fallthru
      _
    // Predicated region
    $region78: #{_lambda_.5} parent=1 // pred_check
      _
    $region79: #{_lambda_.5} parent=1 // pred_check_branch
      %1264 = sbr.rel (0) target = $region81
    $region80: #{_lambda_.5} parent=1 // pred_region
      %1265 = dma.done [#allocation3], 256
    $region81: #{_lambda_.5} parent=1 // pred_fallthru
      _
    // Predicated region
    $region82: #{_lambda_.5} parent=1 // pred_check
      _
    $region83: #{_lambda_.5} parent=1 // pred_check_branch
      %1267 = sbr.rel (0) target = $region85
    $region84: #{_lambda_.5} parent=1 // pred_region
      %1268 = dma.done [#allocation5], 256
    $region85: #{_lambda_.5} parent=1 // pred_fallthru
      _
    %1269 = vsyncpa [#allocation3], 1
    %1270 = vsyncpa [#allocation5], 1

</llo_original>
